<compile_context>
chip_gen: v6e
topology: v6e:2x2x1
jax: 0.10.0
libtpu: 0.0.40
codegen_flags: <defaults>
</compile_context>

<pallas_src>
from functools import partial

import numpy as np
import jax
import jax.numpy as jnp
from jax.experimental import pallas as pl
from jax.experimental.pallas import tpu as pltpu


# ----------------------------------------------------------------------------
# Deterministic parameter construction (mirrors pkufiber get_beta1/get_beta2 /
# dispersion_kernel; PBC weights are synthetic deterministic values).
# ----------------------------------------------------------------------------
C_KMS = 299792458.0 / 1e3  # speed of light [km/s]


def get_beta2(D, Fc):
    # D [ps/nm/km], Fc [Hz] -> beta2 [s^2/km]
    lamb = C_KMS / Fc
    return -(D * 1e-12) * lamb ** 2 / (2 * np.pi * C_KMS)


def get_beta1(D, Fc, Fi):
    # -> beta1 [s/km]
    return 2 * np.pi * (Fi - Fc) * get_beta2(D, Fc)


def dispersion_kernel_time(dz, dtaps, Fs, beta2, beta1):
    """Time-domain chromatic-dispersion FIR kernel (complex64, length dtaps)."""
    omega = 2.0 * np.pi * Fs * np.fft.fftfreq(dtaps)
    H = np.exp(-1j * dz * (beta1 * omega + 0.5 * beta2 * omega ** 2))
    h = np.fft.fftshift(np.fft.ifft(H))
    return h.astype(np.complex64)


def pbc_index_pairs(ntaps, rho):
    """Reduced (m <= n) first-order PBC index set."""
    # TODO(synk): exact enumeration/ordering of pkufiber's TripletFeatures is
    # not available; this is the standard reduced hyperbolic index set.
    lh = (ntaps - 1) // 2
    pairs = []
    for m in range(-lh, lh + 1):
        for n in range(m, lh + 1):
            if abs(m * n) <= rho * lh * lh and abs(m + n) <= lh:
                pairs.append((m, n))
    return pairs


def _cdiv(a, b):
    return -(-a // b)


# ----------------------------------------------------------------------------
# Fused Pallas kernel: one output time tile, all DBP steps in VMEM/registers.
# ----------------------------------------------------------------------------
def _fused_dbp_kernel(*refs, Nmodes, step, dtaps, ntaps,
                      hr, h_sum, h_dif, pairs, wr, w_sum, w_dif):
    """refs = (xr_0, xi_0, ..., xr_{Nm-1}, xi_{Nm-1}, p) + (or_0, oi_0, ...).

    x*_q : [1, B, TIN]  halo input tile (real / imag plane of mode q)
    p    : [B, 1]       per-batch launch-power scale
    o*_q : [B, TO]      lane-dense output tile (TO multiple of 128)
    """
    n_in = 2 * Nmodes + 1
    in_refs, out_refs = refs[:n_in], refs[n_in:]
    p = in_refs[-1][...]                                   # [B, 1], hoisted load
    planes = [(in_refs[2 * q][0], in_refs[2 * q + 1][0])   # [B, TIN] per mode
              for q in range(Nmodes)]

    lh = (ntaps - 1) // 2
    for _ in range(step):
        # ---------- dispersion: valid complex FIR along lanes (3-mul MAC) ----
        Lc = planes[0][0].shape[-1]
        Lo = Lc - (dtaps - 1)
        new_planes = []
        for (xr, xi) in planes:
            acc_r = acc_i = None
            for k in range(dtaps):                # static unroll over taps
                ar = xr[:, k:k + Lo]
                ai = xi[:, k:k + Lo]
                k1 = hr[k] * (ar + ai)
                re = k1 - h_sum[k] * ai           # hr*ar - hi*ai
                im = k1 + h_dif[k] * ar           # hr*ai + hi*ar
                acc_r = re if acc_r is None else acc_r + re
                acc_i = im if acc_i is None else acc_i + im
            new_planes.append((acc_r, acc_i))
        planes = new_planes

        # ---------- PBC nonlinear step ---------------------------------------
        Lc = planes[0][0].shape[-1]
        Lo = Lc - (ntaps - 1)

        # Hoisted shifted windows, reused by every index pair.
        win = {}
        for o in range(-lh, lh + 1):
            st = lh + o
            win[o] = [(xr[:, st:st + Lo], xi[:, st:st + Lo])
                      for (xr, xi) in planes]

        # Memoized Manakov cross-pol sums S(a,c) = sum_q E_q[a] * conj(E_q[c]),
        # computed as an explicit per-mode VPU add (no sublane reduction).
        smemo = {}

        def cross(a, c):
            key = (a, c)
            if key not in smemo:
                sr = si = None
                for q in range(Nmodes):
                    ar_, ai_ = win[a][q]
                    cr_, ci_ = win[c][q]
                    tr = ar_ * cr_ + ai_ * ci_
                    ti = ai_ * cr_ - ar_ * ci_
                    sr = tr if sr is None else sr + tr
                    si = ti if si is None else si + ti
                smemo[key] = (sr, si)
            return smemo[key]

        acc_r = [None] * Nmodes
        acc_i = [None] * Nmodes
        for j, (m, n) in enumerate(pairs):        # static unroll over pairs
            s1r, s1i = cross(m, m + n)
            if m != n:                            # symmetric partner (n, m)
                s2r, s2i = cross(n, m + n)
            for q in range(Nmodes):
                nr, ni = win[n][q]
                fr = nr * s1r - ni * s1i
                fi = nr * s1i + ni * s1r
                if m != n:
                    mr, mi = win[m][q]
                    fr = fr + mr * s2r - mi * s2i
                    fi = fi + mr * s2i + mi * s2r
                k1 = wr[j] * (fr + fi)
                re = k1 - w_sum[j] * fi           # wr*fr - wi*fi
                im = k1 + w_dif[j] * fr           # wr*fi + wi*fr
                acc_r[q] = re if acc_r[q] is None else acc_r[q] + re
                acc_i[q] = im if acc_i[q] is None else acc_i[q] + im

        planes = [(win[0][q][0] + p * (acc_r[q] if acc_r[q] is not None else 0.0),
                   win[0][q][1] + p * (acc_i[q] if acc_i[q] is not None else 0.0))
                  for q in range(Nmodes)]

    # Final plane length equals TO exactly -> unmasked lane-dense stores.
    for q in range(Nmodes):
        out_refs[2 * q][...] = planes[q][0]
        out_refs[2 * q + 1][...] = planes[q][1]


# ----------------------------------------------------------------------------
# Module forward (glue in plain JAX, hot path = one fused Pallas call)
# ----------------------------------------------------------------------------
def pbcdbp_forward(x, task_info, *, step, dtaps, ntaps, h, pairs, w,
                   tile_out=128):
    """x: [B, L, Nmodes] complex64, task_info: [B, 4] -> [B, L - C, Nmodes]."""
    B, L, Nmodes = x.shape
    C = step * ((dtaps - 1) + (ntaps - 1))
    L_out = L - C
    assert L_out > 0
    assert tile_out % 128 == 0
    TO = tile_out                      # output lanes per tile (128-multiple)
    num_tiles = _cdiv(L_out, TO)
    L_out_pad = num_tiles * TO
    TIN = TO + C                       # input lanes per tile (with halo)
    L_need = L_out_pad + C
    pad = L_need - L

    # Per-mode launch power (same unit convention as the validated reference).
    P = (10.0 ** (task_info[:, 0] / 10.0) / Nmodes).astype(jnp.float32)
    P = P.reshape(B, 1)

    # Host-precomputed constants for the 3-mul complex MAC form.
    hr = tuple(float(v.real) for v in h)
    hi = tuple(float(v.imag) for v in h)
    h_sum = tuple(a + b for a, b in zip(hr, hi))
    h_dif = tuple(b - a for a, b in zip(hr, hi))
    wr = tuple(float(v.real) for v in w)
    wi = tuple(float(v.imag) for v in w)
    w_sum = tuple(a + b for a, b in zip(wr, wi))
    w_dif = tuple(b - a for a, b in zip(wr, wi))

    # Overlapped (halo) time tiles, gathered once: [num_tiles, B, TIN] / plane.
    idx = jnp.arange(num_tiles)[:, None] * TO + jnp.arange(TIN)[None, :]
    tiled = []
    for q in range(Nmodes):
        xr = jnp.real(x[:, :, q]).astype(jnp.float32)
        xi = jnp.imag(x[:, :, q]).astype(jnp.float32)
        if pad:
            xr = jnp.pad(xr, ((0, 0), (0, pad)))
            xi = jnp.pad(xi, ((0, 0), (0, pad)))
        tiled.append(jnp.transpose(xr[:, idx], (1, 0, 2)))
        tiled.append(jnp.transpose(xi[:, idx], (1, 0, 2)))

    kern = partial(_fused_dbp_kernel, Nmodes=Nmodes, step=step, dtaps=dtaps,
                   ntaps=ntaps, hr=hr, h_sum=h_sum, h_dif=h_dif,
                   pairs=tuple(pairs), wr=wr, w_sum=w_sum, w_dif=w_dif)

    in_specs = ([pl.BlockSpec((1, B, TIN), lambda i: (i, 0, 0))] * (2 * Nmodes)
                + [pl.BlockSpec((B, 1), lambda i: (0, 0))])
    out_specs = tuple(pl.BlockSpec((B, TO), lambda i: (0, i))
                      for _ in range(2 * Nmodes))
    out_shape = tuple(jax.ShapeDtypeStruct((B, L_out_pad), jnp.float32)
                      for _ in range(2 * Nmodes))

    outs = pl.pallas_call(
        kern,
        grid=(num_tiles,),
        in_specs=in_specs,
        out_specs=out_specs,
        out_shape=out_shape,
        compiler_params=pltpu.CompilerParams(
            dimension_semantics=("parallel",)),   # tiles split across TCs (v7x)
    )(*tiled, P)

    y = jnp.stack([outs[2 * q] + 1j * outs[2 * q + 1] for q in range(Nmodes)],
                  axis=-1)
    return y[:, :L_out, :].astype(jnp.complex64)


# ----------------------------------------------------------------------------
# Pure-JAX reference (same math, complex arithmetic) for a correctness check
# ----------------------------------------------------------------------------
def reference_forward(x, task_info, h, pairs, w, step, dtaps, ntaps):
    B, L, Nmodes = x.shape
    P = (10.0 ** (task_info[:, 0] / 10.0) / Nmodes).astype(jnp.float32)
    lh = (ntaps - 1) // 2
    for _ in range(step):
        Lin = x.shape[1]
        lo = Lin - (dtaps - 1)
        y = jnp.zeros((B, lo, Nmodes), jnp.complex64)
        for k in range(dtaps):
            y = y + h[k] * x[:, k:k + lo, :]
        x = y

        Lin = x.shape[1]
        lo = Lin - (ntaps - 1)

        def sl(o, _x=x, _lo=lo):
            return _x[:, lh + o: lh + o + _lo, :]

        acc = jnp.zeros((B, lo, Nmodes), jnp.complex64)
        for j, (m, n) in enumerate(pairs):
            c = jnp.conj(sl(m + n))
            s1 = jnp.sum(sl(m) * c, axis=-1, keepdims=True)
            f = sl(n) * s1
            if m != n:
                s2 = jnp.sum(sl(n) * c, axis=-1, keepdims=True)
                f = f + sl(m) * s2
            acc = acc + w[j] * f
        x = sl(0) + P[:, None, None] * acc
    return x


# ----------------------------------------------------------------------------
if __name__ == "__main__":
    # Small, shape-consistent configuration (multi-tile: L_out = 368 -> 3 tiles)
    B, L, Nmodes = 2, 384, 2
    step, dtaps, ntaps, rho = 2, 5, 5, 0.5
    L_fiber = 2_000_000.0          # m
    D = 16.5                       # ps/nm/km
    Fs = 160e9                     # Hz
    Fc = 299792458.0 / 1.55e-6     # Hz
    Fi = Fc
    # gamma (0.0016567) is absorbed into the learned PBC coefficients.

    dz = L_fiber / step
    beta2 = get_beta2(D, Fc) / 1e3      # s^2/m
    beta1 = get_beta1(D, Fc, Fi) / 1e3  # s/m
    h = dispersion_kernel_time(-dz, dtaps, Fs, beta2, beta1)  # complex64 [dtaps]

    pairs = pbc_index_pairs(ntaps, rho)

    key = jax.random.PRNGKey(0)
    k1, k2, k3, k4 = jax.random.split(key, 4)
    # Deterministic synthetic PBC coefficients (ComplexLinear(hdim, 1, bias=False))
    wr_np = np.asarray(jax.random.normal(k3, (len(pairs),), jnp.float32)) * 1e-3
    wi_np = np.asarray(jax.random.normal(k4, (len(pairs),), jnp.float32)) * 1e-3
    w = (wr_np + 1j * wi_np).astype(np.complex64)

    # Input signal [B, L, Nmodes] complex64, task_info [B,4] = [P_dBm, Fi, Fs, Nch]
    xr0 = jax.random.normal(k1, (B, L, Nmodes), jnp.float32)
    xi0 = jax.random.normal(k2, (B, L, Nmodes), jnp.float32)
    x = ((xr0 + 1j * xi0) / jnp.sqrt(2.0)).astype(jnp.complex64)
    task_info = jnp.array([[0.0, Fi, Fs, 1.0],
                           [2.0, Fi, Fs, 1.0]], dtype=jnp.float32)

    y = pbcdbp_forward(x, task_info, step=step, dtaps=dtaps, ntaps=ntaps,
                       h=h, pairs=pairs, w=w)
    y = jax.block_until_ready(y)

    expected_len = L - step * (dtaps - 1 + ntaps - 1)
    assert y.shape == (B, expected_len, Nmodes), y.shape
    assert y.dtype == jnp.complex64

    y_ref = jax.block_until_ready(
        reference_forward(x, task_info, h, pairs, w, step, dtaps, ntaps))
    np.testing.assert_allclose(np.asarray(y), np.asarray(y_ref),
                               rtol=1e-3, atol=1e-3)
    print("KERNEL_OK")
</pallas_src>

<mosaic_0001>
module attributes {stable_mosaic.version = 11 : i64} {
  func.func @_fused_dbp_kernel(%arg0: i32, %arg1: memref<1x2x144xf32, #tpu.memory_space<vmem>>, %arg2: memref<1x2x144xf32, #tpu.memory_space<vmem>>, %arg3: memref<1x2x144xf32, #tpu.memory_space<vmem>>, %arg4: memref<1x2x144xf32, #tpu.memory_space<vmem>>, %arg5: memref<2x1xf32, #tpu.memory_space<vmem>>, %arg6: memref<2x128xf32, #tpu.memory_space<vmem>>, %arg7: memref<2x128xf32, #tpu.memory_space<vmem>>, %arg8: memref<2x128xf32, #tpu.memory_space<vmem>>, %arg9: memref<2x128xf32, #tpu.memory_space<vmem>>) attributes {dimension_semantics = [#tpu.dimension_semantics<parallel>], iteration_bounds = array<i64: 3>, scalar_prefetch = 0 : i64, scratch_operands = 0 : i64, tpu.core_type = #tpu.core_type<tc>, window_params = [{transform_indices = @transform_0, window_bounds = array<i64: 1, 2, 144>}, {transform_indices = @transform_1, window_bounds = array<i64: 1, 2, 144>}, {transform_indices = @transform_2, window_bounds = array<i64: 1, 2, 144>}, {transform_indices = @transform_3, window_bounds = array<i64: 1, 2, 144>}, {pipeline_mode = #tpu.pipeline_mode<synchronous>, transform_indices = @transform_4, window_bounds = array<i64: 2, 1>}, {transform_indices = @transform_5, window_bounds = array<i64: 2, 128>}, {transform_indices = @transform_6, window_bounds = array<i64: 2, 128>}, {transform_indices = @transform_7, window_bounds = array<i64: 2, 128>}, {transform_indices = @transform_8, window_bounds = array<i64: 2, 128>}]} {
    %c0 = arith.constant 0 : index
    %c0_0 = arith.constant 0 : index
    %0 = vector.load %arg5[%c0, %c0_0] : memref<2x1xf32, #tpu.memory_space<vmem>>, vector<2x1xf32>
    %c0_1 = arith.constant 0 : index
    %c0_2 = arith.constant 0 : index
    %c0_3 = arith.constant 0 : index
    %1 = vector.load %arg1[%c0_1, %c0_2, %c0_3] : memref<1x2x144xf32, #tpu.memory_space<vmem>>, vector<1x2x144xf32>
    %2 = vector.shape_cast %1 : vector<1x2x144xf32> to vector<2x144xf32>
    %c0_4 = arith.constant 0 : index
    %c0_5 = arith.constant 0 : index
    %c0_6 = arith.constant 0 : index
    %3 = vector.load %arg2[%c0_4, %c0_5, %c0_6] : memref<1x2x144xf32, #tpu.memory_space<vmem>>, vector<1x2x144xf32>
    %4 = vector.shape_cast %3 : vector<1x2x144xf32> to vector<2x144xf32>
    %c0_7 = arith.constant 0 : index
    %c0_8 = arith.constant 0 : index
    %c0_9 = arith.constant 0 : index
    %5 = vector.load %arg3[%c0_7, %c0_8, %c0_9] : memref<1x2x144xf32, #tpu.memory_space<vmem>>, vector<1x2x144xf32>
    %6 = vector.shape_cast %5 : vector<1x2x144xf32> to vector<2x144xf32>
    %c0_10 = arith.constant 0 : index
    %c0_11 = arith.constant 0 : index
    %c0_12 = arith.constant 0 : index
    %7 = vector.load %arg4[%c0_10, %c0_11, %c0_12] : memref<1x2x144xf32, #tpu.memory_space<vmem>>, vector<1x2x144xf32>
    %8 = vector.shape_cast %7 : vector<1x2x144xf32> to vector<2x144xf32>
    %9 = vector.extract_strided_slice %2 {offsets = [0, 0], sizes = [2, 140], strides = [1, 1]} : vector<2x144xf32> to vector<2x140xf32>
    %10 = vector.extract_strided_slice %4 {offsets = [0, 0], sizes = [2, 140], strides = [1, 1]} : vector<2x144xf32> to vector<2x140xf32>
    %11 = arith.addf %9, %10 : vector<2x140xf32>
    %cst = arith.constant 0.000000e+00 : f32
    %12 = vector.broadcast %cst : f32 to vector<2x140xf32>
    %13 = arith.mulf %12, %11 : vector<2x140xf32>
    %cst_13 = arith.constant -7.26634794E-11 : f32
    %14 = vector.broadcast %cst_13 : f32 to vector<2x140xf32>
    %15 = arith.mulf %14, %10 : vector<2x140xf32>
    %16 = arith.subf %13, %15 : vector<2x140xf32>
    %cst_14 = arith.constant -7.26634794E-11 : f32
    %17 = vector.broadcast %cst_14 : f32 to vector<2x140xf32>
    %18 = arith.mulf %17, %9 : vector<2x140xf32>
    %19 = arith.addf %13, %18 : vector<2x140xf32>
    %20 = vector.extract_strided_slice %2 {offsets = [0, 1], sizes = [2, 140], strides = [1, 1]} : vector<2x144xf32> to vector<2x140xf32>
    %21 = vector.extract_strided_slice %4 {offsets = [0, 1], sizes = [2, 140], strides = [1, 1]} : vector<2x144xf32> to vector<2x140xf32>
    %22 = arith.addf %20, %21 : vector<2x140xf32>
    %cst_15 = arith.constant 0.000000e+00 : f32
    %23 = vector.broadcast %cst_15 : f32 to vector<2x140xf32>
    %24 = arith.mulf %23, %22 : vector<2x140xf32>
    %cst_16 = arith.constant 4.98042885E-10 : f32
    %25 = vector.broadcast %cst_16 : f32 to vector<2x140xf32>
    %26 = arith.mulf %25, %21 : vector<2x140xf32>
    %27 = arith.subf %24, %26 : vector<2x140xf32>
    %cst_17 = arith.constant 4.98042885E-10 : f32
    %28 = vector.broadcast %cst_17 : f32 to vector<2x140xf32>
    %29 = arith.mulf %28, %20 : vector<2x140xf32>
    %30 = arith.addf %24, %29 : vector<2x140xf32>
    %31 = arith.addf %16, %27 : vector<2x140xf32>
    %32 = arith.addf %19, %30 : vector<2x140xf32>
    %33 = vector.extract_strided_slice %2 {offsets = [0, 2], sizes = [2, 140], strides = [1, 1]} : vector<2x144xf32> to vector<2x140xf32>
    %34 = vector.extract_strided_slice %4 {offsets = [0, 2], sizes = [2, 140], strides = [1, 1]} : vector<2x144xf32> to vector<2x140xf32>
    %35 = arith.addf %33, %34 : vector<2x140xf32>
    %cst_18 = arith.constant 1.000000e+00 : f32
    %36 = vector.broadcast %cst_18 : f32 to vector<2x140xf32>
    %37 = arith.mulf %36, %35 : vector<2x140xf32>
    %cst_19 = arith.constant 1.000000e+00 : f32
    %38 = vector.broadcast %cst_19 : f32 to vector<2x140xf32>
    %39 = arith.mulf %38, %34 : vector<2x140xf32>
    %40 = arith.subf %37, %39 : vector<2x140xf32>
    %cst_20 = arith.constant -1.000000e+00 : f32
    %41 = vector.broadcast %cst_20 : f32 to vector<2x140xf32>
    %42 = arith.mulf %41, %33 : vector<2x140xf32>
    %43 = arith.addf %37, %42 : vector<2x140xf32>
    %44 = arith.addf %31, %40 : vector<2x140xf32>
    %45 = arith.addf %32, %43 : vector<2x140xf32>
    %46 = vector.extract_strided_slice %2 {offsets = [0, 3], sizes = [2, 140], strides = [1, 1]} : vector<2x144xf32> to vector<2x140xf32>
    %47 = vector.extract_strided_slice %4 {offsets = [0, 3], sizes = [2, 140], strides = [1, 1]} : vector<2x144xf32> to vector<2x140xf32>
    %48 = arith.addf %46, %47 : vector<2x140xf32>
    %cst_21 = arith.constant 0.000000e+00 : f32
    %49 = vector.broadcast %cst_21 : f32 to vector<2x140xf32>
    %50 = arith.mulf %49, %48 : vector<2x140xf32>
    %cst_22 = arith.constant 4.98042885E-10 : f32
    %51 = vector.broadcast %cst_22 : f32 to vector<2x140xf32>
    %52 = arith.mulf %51, %47 : vector<2x140xf32>
    %53 = arith.subf %50, %52 : vector<2x140xf32>
    %cst_23 = arith.constant 4.98042885E-10 : f32
    %54 = vector.broadcast %cst_23 : f32 to vector<2x140xf32>
    %55 = arith.mulf %54, %46 : vector<2x140xf32>
    %56 = arith.addf %50, %55 : vector<2x140xf32>
    %57 = arith.addf %44, %53 : vector<2x140xf32>
    %58 = arith.addf %45, %56 : vector<2x140xf32>
    %59 = vector.extract_strided_slice %2 {offsets = [0, 4], sizes = [2, 140], strides = [1, 1]} : vector<2x144xf32> to vector<2x140xf32>
    %60 = vector.extract_strided_slice %4 {offsets = [0, 4], sizes = [2, 140], strides = [1, 1]} : vector<2x144xf32> to vector<2x140xf32>
    %61 = arith.addf %59, %60 : vector<2x140xf32>
    %cst_24 = arith.constant 0.000000e+00 : f32
    %62 = vector.broadcast %cst_24 : f32 to vector<2x140xf32>
    %63 = arith.mulf %62, %61 : vector<2x140xf32>
    %cst_25 = arith.constant -7.26634794E-11 : f32
    %64 = vector.broadcast %cst_25 : f32 to vector<2x140xf32>
    %65 = arith.mulf %64, %60 : vector<2x140xf32>
    %66 = arith.subf %63, %65 : vector<2x140xf32>
    %cst_26 = arith.constant -7.26634794E-11 : f32
    %67 = vector.broadcast %cst_26 : f32 to vector<2x140xf32>
    %68 = arith.mulf %67, %59 : vector<2x140xf32>
    %69 = arith.addf %63, %68 : vector<2x140xf32>
    %70 = arith.addf %57, %66 : vector<2x140xf32>
    %71 = arith.addf %58, %69 : vector<2x140xf32>
    %72 = vector.extract_strided_slice %6 {offsets = [0, 0], sizes = [2, 140], strides = [1, 1]} : vector<2x144xf32> to vector<2x140xf32>
    %73 = vector.extract_strided_slice %8 {offsets = [0, 0], sizes = [2, 140], strides = [1, 1]} : vector<2x144xf32> to vector<2x140xf32>
    %74 = arith.addf %72, %73 : vector<2x140xf32>
    %cst_27 = arith.constant 0.000000e+00 : f32
    %75 = vector.broadcast %cst_27 : f32 to vector<2x140xf32>
    %76 = arith.mulf %75, %74 : vector<2x140xf32>
    %cst_28 = arith.constant -7.26634794E-11 : f32
    %77 = vector.broadcast %cst_28 : f32 to vector<2x140xf32>
    %78 = arith.mulf %77, %73 : vector<2x140xf32>
    %79 = arith.subf %76, %78 : vector<2x140xf32>
    %cst_29 = arith.constant -7.26634794E-11 : f32
    %80 = vector.broadcast %cst_29 : f32 to vector<2x140xf32>
    %81 = arith.mulf %80, %72 : vector<2x140xf32>
    %82 = arith.addf %76, %81 : vector<2x140xf32>
    %83 = vector.extract_strided_slice %6 {offsets = [0, 1], sizes = [2, 140], strides = [1, 1]} : vector<2x144xf32> to vector<2x140xf32>
    %84 = vector.extract_strided_slice %8 {offsets = [0, 1], sizes = [2, 140], strides = [1, 1]} : vector<2x144xf32> to vector<2x140xf32>
    %85 = arith.addf %83, %84 : vector<2x140xf32>
    %cst_30 = arith.constant 0.000000e+00 : f32
    %86 = vector.broadcast %cst_30 : f32 to vector<2x140xf32>
    %87 = arith.mulf %86, %85 : vector<2x140xf32>
    %cst_31 = arith.constant 4.98042885E-10 : f32
    %88 = vector.broadcast %cst_31 : f32 to vector<2x140xf32>
    %89 = arith.mulf %88, %84 : vector<2x140xf32>
    %90 = arith.subf %87, %89 : vector<2x140xf32>
    %cst_32 = arith.constant 4.98042885E-10 : f32
    %91 = vector.broadcast %cst_32 : f32 to vector<2x140xf32>
    %92 = arith.mulf %91, %83 : vector<2x140xf32>
    %93 = arith.addf %87, %92 : vector<2x140xf32>
    %94 = arith.addf %79, %90 : vector<2x140xf32>
    %95 = arith.addf %82, %93 : vector<2x140xf32>
    %96 = vector.extract_strided_slice %6 {offsets = [0, 2], sizes = [2, 140], strides = [1, 1]} : vector<2x144xf32> to vector<2x140xf32>
    %97 = vector.extract_strided_slice %8 {offsets = [0, 2], sizes = [2, 140], strides = [1, 1]} : vector<2x144xf32> to vector<2x140xf32>
    %98 = arith.addf %96, %97 : vector<2x140xf32>
    %cst_33 = arith.constant 1.000000e+00 : f32
    %99 = vector.broadcast %cst_33 : f32 to vector<2x140xf32>
    %100 = arith.mulf %99, %98 : vector<2x140xf32>
    %cst_34 = arith.constant 1.000000e+00 : f32
    %101 = vector.broadcast %cst_34 : f32 to vector<2x140xf32>
    %102 = arith.mulf %101, %97 : vector<2x140xf32>
    %103 = arith.subf %100, %102 : vector<2x140xf32>
    %cst_35 = arith.constant -1.000000e+00 : f32
    %104 = vector.broadcast %cst_35 : f32 to vector<2x140xf32>
    %105 = arith.mulf %104, %96 : vector<2x140xf32>
    %106 = arith.addf %100, %105 : vector<2x140xf32>
    %107 = arith.addf %94, %103 : vector<2x140xf32>
    %108 = arith.addf %95, %106 : vector<2x140xf32>
    %109 = vector.extract_strided_slice %6 {offsets = [0, 3], sizes = [2, 140], strides = [1, 1]} : vector<2x144xf32> to vector<2x140xf32>
    %110 = vector.extract_strided_slice %8 {offsets = [0, 3], sizes = [2, 140], strides = [1, 1]} : vector<2x144xf32> to vector<2x140xf32>
    %111 = arith.addf %109, %110 : vector<2x140xf32>
    %cst_36 = arith.constant 0.000000e+00 : f32
    %112 = vector.broadcast %cst_36 : f32 to vector<2x140xf32>
    %113 = arith.mulf %112, %111 : vector<2x140xf32>
    %cst_37 = arith.constant 4.98042885E-10 : f32
    %114 = vector.broadcast %cst_37 : f32 to vector<2x140xf32>
    %115 = arith.mulf %114, %110 : vector<2x140xf32>
    %116 = arith.subf %113, %115 : vector<2x140xf32>
    %cst_38 = arith.constant 4.98042885E-10 : f32
    %117 = vector.broadcast %cst_38 : f32 to vector<2x140xf32>
    %118 = arith.mulf %117, %109 : vector<2x140xf32>
    %119 = arith.addf %113, %118 : vector<2x140xf32>
    %120 = arith.addf %107, %116 : vector<2x140xf32>
    %121 = arith.addf %108, %119 : vector<2x140xf32>
    %122 = vector.extract_strided_slice %6 {offsets = [0, 4], sizes = [2, 140], strides = [1, 1]} : vector<2x144xf32> to vector<2x140xf32>
    %123 = vector.extract_strided_slice %8 {offsets = [0, 4], sizes = [2, 140], strides = [1, 1]} : vector<2x144xf32> to vector<2x140xf32>
    %124 = arith.addf %122, %123 : vector<2x140xf32>
    %cst_39 = arith.constant 0.000000e+00 : f32
    %125 = vector.broadcast %cst_39 : f32 to vector<2x140xf32>
    %126 = arith.mulf %125, %124 : vector<2x140xf32>
    %cst_40 = arith.constant -7.26634794E-11 : f32
    %127 = vector.broadcast %cst_40 : f32 to vector<2x140xf32>
    %128 = arith.mulf %127, %123 : vector<2x140xf32>
    %129 = arith.subf %126, %128 : vector<2x140xf32>
    %cst_41 = arith.constant -7.26634794E-11 : f32
    %130 = vector.broadcast %cst_41 : f32 to vector<2x140xf32>
    %131 = arith.mulf %130, %122 : vector<2x140xf32>
    %132 = arith.addf %126, %131 : vector<2x140xf32>
    %133 = arith.addf %120, %129 : vector<2x140xf32>
    %134 = arith.addf %121, %132 : vector<2x140xf32>
    %135 = vector.extract_strided_slice %70 {offsets = [0, 0], sizes = [2, 136], strides = [1, 1]} : vector<2x140xf32> to vector<2x136xf32>
    %136 = vector.extract_strided_slice %71 {offsets = [0, 0], sizes = [2, 136], strides = [1, 1]} : vector<2x140xf32> to vector<2x136xf32>
    %137 = vector.extract_strided_slice %133 {offsets = [0, 0], sizes = [2, 136], strides = [1, 1]} : vector<2x140xf32> to vector<2x136xf32>
    %138 = vector.extract_strided_slice %134 {offsets = [0, 0], sizes = [2, 136], strides = [1, 1]} : vector<2x140xf32> to vector<2x136xf32>
    %139 = vector.extract_strided_slice %70 {offsets = [0, 1], sizes = [2, 136], strides = [1, 1]} : vector<2x140xf32> to vector<2x136xf32>
    %140 = vector.extract_strided_slice %71 {offsets = [0, 1], sizes = [2, 136], strides = [1, 1]} : vector<2x140xf32> to vector<2x136xf32>
    %141 = vector.extract_strided_slice %133 {offsets = [0, 1], sizes = [2, 136], strides = [1, 1]} : vector<2x140xf32> to vector<2x136xf32>
    %142 = vector.extract_strided_slice %134 {offsets = [0, 1], sizes = [2, 136], strides = [1, 1]} : vector<2x140xf32> to vector<2x136xf32>
    %143 = vector.extract_strided_slice %70 {offsets = [0, 2], sizes = [2, 136], strides = [1, 1]} : vector<2x140xf32> to vector<2x136xf32>
    %144 = vector.extract_strided_slice %71 {offsets = [0, 2], sizes = [2, 136], strides = [1, 1]} : vector<2x140xf32> to vector<2x136xf32>
    %145 = vector.extract_strided_slice %133 {offsets = [0, 2], sizes = [2, 136], strides = [1, 1]} : vector<2x140xf32> to vector<2x136xf32>
    %146 = vector.extract_strided_slice %134 {offsets = [0, 2], sizes = [2, 136], strides = [1, 1]} : vector<2x140xf32> to vector<2x136xf32>
    %147 = vector.extract_strided_slice %70 {offsets = [0, 3], sizes = [2, 136], strides = [1, 1]} : vector<2x140xf32> to vector<2x136xf32>
    %148 = vector.extract_strided_slice %71 {offsets = [0, 3], sizes = [2, 136], strides = [1, 1]} : vector<2x140xf32> to vector<2x136xf32>
    %149 = vector.extract_strided_slice %133 {offsets = [0, 3], sizes = [2, 136], strides = [1, 1]} : vector<2x140xf32> to vector<2x136xf32>
    %150 = vector.extract_strided_slice %134 {offsets = [0, 3], sizes = [2, 136], strides = [1, 1]} : vector<2x140xf32> to vector<2x136xf32>
    %151 = vector.extract_strided_slice %70 {offsets = [0, 4], sizes = [2, 136], strides = [1, 1]} : vector<2x140xf32> to vector<2x136xf32>
    %152 = vector.extract_strided_slice %71 {offsets = [0, 4], sizes = [2, 136], strides = [1, 1]} : vector<2x140xf32> to vector<2x136xf32>
    %153 = vector.extract_strided_slice %133 {offsets = [0, 4], sizes = [2, 136], strides = [1, 1]} : vector<2x140xf32> to vector<2x136xf32>
    %154 = vector.extract_strided_slice %134 {offsets = [0, 4], sizes = [2, 136], strides = [1, 1]} : vector<2x140xf32> to vector<2x136xf32>
    %155 = arith.mulf %135, %135 : vector<2x136xf32>
    %156 = arith.mulf %136, %136 : vector<2x136xf32>
    %157 = arith.addf %155, %156 : vector<2x136xf32>
    %158 = arith.mulf %136, %135 : vector<2x136xf32>
    %159 = arith.mulf %135, %136 : vector<2x136xf32>
    %160 = arith.subf %158, %159 : vector<2x136xf32>
    %161 = arith.mulf %137, %137 : vector<2x136xf32>
    %162 = arith.mulf %138, %138 : vector<2x136xf32>
    %163 = arith.addf %161, %162 : vector<2x136xf32>
    %164 = arith.mulf %138, %137 : vector<2x136xf32>
    %165 = arith.mulf %137, %138 : vector<2x136xf32>
    %166 = arith.subf %164, %165 : vector<2x136xf32>
    %167 = arith.addf %157, %163 : vector<2x136xf32>
    %168 = arith.addf %160, %166 : vector<2x136xf32>
    %169 = arith.mulf %143, %135 : vector<2x136xf32>
    %170 = arith.mulf %144, %136 : vector<2x136xf32>
    %171 = arith.addf %169, %170 : vector<2x136xf32>
    %172 = arith.mulf %144, %135 : vector<2x136xf32>
    %173 = arith.mulf %143, %136 : vector<2x136xf32>
    %174 = arith.subf %172, %173 : vector<2x136xf32>
    %175 = arith.mulf %145, %137 : vector<2x136xf32>
    %176 = arith.mulf %146, %138 : vector<2x136xf32>
    %177 = arith.addf %175, %176 : vector<2x136xf32>
    %178 = arith.mulf %146, %137 : vector<2x136xf32>
    %179 = arith.mulf %145, %138 : vector<2x136xf32>
    %180 = arith.subf %178, %179 : vector<2x136xf32>
    %181 = arith.addf %171, %177 : vector<2x136xf32>
    %182 = arith.addf %174, %180 : vector<2x136xf32>
    %183 = arith.mulf %143, %167 : vector<2x136xf32>
    %184 = arith.mulf %144, %168 : vector<2x136xf32>
    %185 = arith.subf %183, %184 : vector<2x136xf32>
    %186 = arith.mulf %143, %168 : vector<2x136xf32>
    %187 = arith.mulf %144, %167 : vector<2x136xf32>
    %188 = arith.addf %186, %187 : vector<2x136xf32>
    %189 = arith.mulf %135, %181 : vector<2x136xf32>
    %190 = arith.addf %185, %189 : vector<2x136xf32>
    %191 = arith.mulf %136, %182 : vector<2x136xf32>
    %192 = arith.subf %190, %191 : vector<2x136xf32>
    %193 = arith.mulf %135, %182 : vector<2x136xf32>
    %194 = arith.addf %188, %193 : vector<2x136xf32>
    %195 = arith.mulf %136, %181 : vector<2x136xf32>
    %196 = arith.addf %194, %195 : vector<2x136xf32>
    %197 = arith.addf %192, %196 : vector<2x136xf32>
    %cst_42 = arith.constant 0.00129563594 : f32
    %198 = vector.broadcast %cst_42 : f32 to vector<2x136xf32>
    %199 = arith.mulf %198, %197 : vector<2x136xf32>
    %cst_43 = arith.constant 6.73692324E-4 : f32
    %200 = vector.broadcast %cst_43 : f32 to vector<2x136xf32>
    %201 = arith.mulf %200, %196 : vector<2x136xf32>
    %202 = arith.subf %199, %201 : vector<2x136xf32>
    %cst_44 = arith.constant -0.00191757956 : f32
    %203 = vector.broadcast %cst_44 : f32 to vector<2x136xf32>
    %204 = arith.mulf %203, %192 : vector<2x136xf32>
    %205 = arith.addf %199, %204 : vector<2x136xf32>
    %206 = arith.mulf %145, %167 : vector<2x136xf32>
    %207 = arith.mulf %146, %168 : vector<2x136xf32>
    %208 = arith.subf %206, %207 : vector<2x136xf32>
    %209 = arith.mulf %145, %168 : vector<2x136xf32>
    %210 = arith.mulf %146, %167 : vector<2x136xf32>
    %211 = arith.addf %209, %210 : vector<2x136xf32>
    %212 = arith.mulf %137, %181 : vector<2x136xf32>
    %213 = arith.addf %208, %212 : vector<2x136xf32>
    %214 = arith.mulf %138, %182 : vector<2x136xf32>
    %215 = arith.subf %213, %214 : vector<2x136xf32>
    %216 = arith.mulf %137, %182 : vector<2x136xf32>
    %217 = arith.addf %211, %216 : vector<2x136xf32>
    %218 = arith.mulf %138, %181 : vector<2x136xf32>
    %219 = arith.addf %217, %218 : vector<2x136xf32>
    %220 = arith.addf %215, %219 : vector<2x136xf32>
    %cst_45 = arith.constant 0.00129563594 : f32
    %221 = vector.broadcast %cst_45 : f32 to vector<2x136xf32>
    %222 = arith.mulf %221, %220 : vector<2x136xf32>
    %cst_46 = arith.constant 6.73692324E-4 : f32
    %223 = vector.broadcast %cst_46 : f32 to vector<2x136xf32>
    %224 = arith.mulf %223, %219 : vector<2x136xf32>
    %225 = arith.subf %222, %224 : vector<2x136xf32>
    %cst_47 = arith.constant -0.00191757956 : f32
    %226 = vector.broadcast %cst_47 : f32 to vector<2x136xf32>
    %227 = arith.mulf %226, %215 : vector<2x136xf32>
    %228 = arith.addf %222, %227 : vector<2x136xf32>
    %229 = arith.mulf %135, %139 : vector<2x136xf32>
    %230 = arith.mulf %136, %140 : vector<2x136xf32>
    %231 = arith.addf %229, %230 : vector<2x136xf32>
    %232 = arith.mulf %136, %139 : vector<2x136xf32>
    %233 = arith.mulf %135, %140 : vector<2x136xf32>
    %234 = arith.subf %232, %233 : vector<2x136xf32>
    %235 = arith.mulf %137, %141 : vector<2x136xf32>
    %236 = arith.mulf %138, %142 : vector<2x136xf32>
    %237 = arith.addf %235, %236 : vector<2x136xf32>
    %238 = arith.mulf %138, %141 : vector<2x136xf32>
    %239 = arith.mulf %137, %142 : vector<2x136xf32>
    %240 = arith.subf %238, %239 : vector<2x136xf32>
    %241 = arith.addf %231, %237 : vector<2x136xf32>
    %242 = arith.addf %234, %240 : vector<2x136xf32>
    %243 = arith.mulf %147, %139 : vector<2x136xf32>
    %244 = arith.mulf %148, %140 : vector<2x136xf32>
    %245 = arith.addf %243, %244 : vector<2x136xf32>
    %246 = arith.mulf %148, %139 : vector<2x136xf32>
    %247 = arith.mulf %147, %140 : vector<2x136xf32>
    %248 = arith.subf %246, %247 : vector<2x136xf32>
    %249 = arith.mulf %149, %141 : vector<2x136xf32>
    %250 = arith.mulf %150, %142 : vector<2x136xf32>
    %251 = arith.addf %249, %250 : vector<2x136xf32>
    %252 = arith.mulf %150, %141 : vector<2x136xf32>
    %253 = arith.mulf %149, %142 : vector<2x136xf32>
    %254 = arith.subf %252, %253 : vector<2x136xf32>
    %255 = arith.addf %245, %251 : vector<2x136xf32>
    %256 = arith.addf %248, %254 : vector<2x136xf32>
    %257 = arith.mulf %147, %241 : vector<2x136xf32>
    %258 = arith.mulf %148, %242 : vector<2x136xf32>
    %259 = arith.subf %257, %258 : vector<2x136xf32>
    %260 = arith.mulf %147, %242 : vector<2x136xf32>
    %261 = arith.mulf %148, %241 : vector<2x136xf32>
    %262 = arith.addf %260, %261 : vector<2x136xf32>
    %263 = arith.mulf %135, %255 : vector<2x136xf32>
    %264 = arith.addf %259, %263 : vector<2x136xf32>
    %265 = arith.mulf %136, %256 : vector<2x136xf32>
    %266 = arith.subf %264, %265 : vector<2x136xf32>
    %267 = arith.mulf %135, %256 : vector<2x136xf32>
    %268 = arith.addf %262, %267 : vector<2x136xf32>
    %269 = arith.mulf %136, %255 : vector<2x136xf32>
    %270 = arith.addf %268, %269 : vector<2x136xf32>
    %271 = arith.addf %266, %270 : vector<2x136xf32>
    %cst_48 = arith.constant 0.00135501055 : f32
    %272 = vector.broadcast %cst_48 : f32 to vector<2x136xf32>
    %273 = arith.mulf %272, %271 : vector<2x136xf32>
    %cst_49 = arith.constant 0.00197981461 : f32
    %274 = vector.broadcast %cst_49 : f32 to vector<2x136xf32>
    %275 = arith.mulf %274, %270 : vector<2x136xf32>
    %276 = arith.subf %273, %275 : vector<2x136xf32>
    %cst_50 = arith.constant -7.30206433E-4 : f32
    %277 = vector.broadcast %cst_50 : f32 to vector<2x136xf32>
    %278 = arith.mulf %277, %266 : vector<2x136xf32>
    %279 = arith.addf %273, %278 : vector<2x136xf32>
    %280 = arith.addf %202, %276 : vector<2x136xf32>
    %281 = arith.addf %205, %279 : vector<2x136xf32>
    %282 = arith.mulf %149, %241 : vector<2x136xf32>
    %283 = arith.mulf %150, %242 : vector<2x136xf32>
    %284 = arith.subf %282, %283 : vector<2x136xf32>
    %285 = arith.mulf %149, %242 : vector<2x136xf32>
    %286 = arith.mulf %150, %241 : vector<2x136xf32>
    %287 = arith.addf %285, %286 : vector<2x136xf32>
    %288 = arith.mulf %137, %255 : vector<2x136xf32>
    %289 = arith.addf %284, %288 : vector<2x136xf32>
    %290 = arith.mulf %138, %256 : vector<2x136xf32>
    %291 = arith.subf %289, %290 : vector<2x136xf32>
    %292 = arith.mulf %137, %256 : vector<2x136xf32>
    %293 = arith.addf %287, %292 : vector<2x136xf32>
    %294 = arith.mulf %138, %255 : vector<2x136xf32>
    %295 = arith.addf %293, %294 : vector<2x136xf32>
    %296 = arith.addf %291, %295 : vector<2x136xf32>
    %cst_51 = arith.constant 0.00135501055 : f32
    %297 = vector.broadcast %cst_51 : f32 to vector<2x136xf32>
    %298 = arith.mulf %297, %296 : vector<2x136xf32>
    %cst_52 = arith.constant 0.00197981461 : f32
    %299 = vector.broadcast %cst_52 : f32 to vector<2x136xf32>
    %300 = arith.mulf %299, %295 : vector<2x136xf32>
    %301 = arith.subf %298, %300 : vector<2x136xf32>
    %cst_53 = arith.constant -7.30206433E-4 : f32
    %302 = vector.broadcast %cst_53 : f32 to vector<2x136xf32>
    %303 = arith.mulf %302, %291 : vector<2x136xf32>
    %304 = arith.addf %298, %303 : vector<2x136xf32>
    %305 = arith.addf %225, %301 : vector<2x136xf32>
    %306 = arith.addf %228, %304 : vector<2x136xf32>
    %307 = arith.mulf %139, %135 : vector<2x136xf32>
    %308 = arith.mulf %140, %136 : vector<2x136xf32>
    %309 = arith.addf %307, %308 : vector<2x136xf32>
    %310 = arith.mulf %140, %135 : vector<2x136xf32>
    %311 = arith.mulf %139, %136 : vector<2x136xf32>
    %312 = arith.subf %310, %311 : vector<2x136xf32>
    %313 = arith.mulf %141, %137 : vector<2x136xf32>
    %314 = arith.mulf %142, %138 : vector<2x136xf32>
    %315 = arith.addf %313, %314 : vector<2x136xf32>
    %316 = arith.mulf %142, %137 : vector<2x136xf32>
    %317 = arith.mulf %141, %138 : vector<2x136xf32>
    %318 = arith.subf %316, %317 : vector<2x136xf32>
    %319 = arith.addf %309, %315 : vector<2x136xf32>
    %320 = arith.addf %312, %318 : vector<2x136xf32>
    %321 = arith.mulf %139, %319 : vector<2x136xf32>
    %322 = arith.mulf %140, %320 : vector<2x136xf32>
    %323 = arith.subf %321, %322 : vector<2x136xf32>
    %324 = arith.mulf %139, %320 : vector<2x136xf32>
    %325 = arith.mulf %140, %319 : vector<2x136xf32>
    %326 = arith.addf %324, %325 : vector<2x136xf32>
    %327 = arith.addf %323, %326 : vector<2x136xf32>
    %cst_54 = arith.constant -4.09605593E-4 : f32
    %328 = vector.broadcast %cst_54 : f32 to vector<2x136xf32>
    %329 = arith.mulf %328, %327 : vector<2x136xf32>
    %cst_55 = arith.constant 0.00127247209 : f32
    %330 = vector.broadcast %cst_55 : f32 to vector<2x136xf32>
    %331 = arith.mulf %330, %326 : vector<2x136xf32>
    %332 = arith.subf %329, %331 : vector<2x136xf32>
    %cst_56 = arith.constant 0.00209168321 : f32
    %333 = vector.broadcast %cst_56 : f32 to vector<2x136xf32>
    %334 = arith.mulf %333, %323 : vector<2x136xf32>
    %335 = arith.addf %329, %334 : vector<2x136xf32>
    %336 = arith.addf %280, %332 : vector<2x136xf32>
    %337 = arith.addf %281, %335 : vector<2x136xf32>
    %338 = arith.mulf %141, %319 : vector<2x136xf32>
    %339 = arith.mulf %142, %320 : vector<2x136xf32>
    %340 = arith.subf %338, %339 : vector<2x136xf32>
    %341 = arith.mulf %141, %320 : vector<2x136xf32>
    %342 = arith.mulf %142, %319 : vector<2x136xf32>
    %343 = arith.addf %341, %342 : vector<2x136xf32>
    %344 = arith.addf %340, %343 : vector<2x136xf32>
    %cst_57 = arith.constant -4.09605593E-4 : f32
    %345 = vector.broadcast %cst_57 : f32 to vector<2x136xf32>
    %346 = arith.mulf %345, %344 : vector<2x136xf32>
    %cst_58 = arith.constant 0.00127247209 : f32
    %347 = vector.broadcast %cst_58 : f32 to vector<2x136xf32>
    %348 = arith.mulf %347, %343 : vector<2x136xf32>
    %349 = arith.subf %346, %348 : vector<2x136xf32>
    %cst_59 = arith.constant 0.00209168321 : f32
    %350 = vector.broadcast %cst_59 : f32 to vector<2x136xf32>
    %351 = arith.mulf %350, %340 : vector<2x136xf32>
    %352 = arith.addf %346, %351 : vector<2x136xf32>
    %353 = arith.addf %305, %349 : vector<2x136xf32>
    %354 = arith.addf %306, %352 : vector<2x136xf32>
    %355 = arith.mulf %139, %139 : vector<2x136xf32>
    %356 = arith.mulf %140, %140 : vector<2x136xf32>
    %357 = arith.addf %355, %356 : vector<2x136xf32>
    %358 = arith.mulf %140, %139 : vector<2x136xf32>
    %359 = arith.mulf %139, %140 : vector<2x136xf32>
    %360 = arith.subf %358, %359 : vector<2x136xf32>
    %361 = arith.mulf %141, %141 : vector<2x136xf32>
    %362 = arith.mulf %142, %142 : vector<2x136xf32>
    %363 = arith.addf %361, %362 : vector<2x136xf32>
    %364 = arith.mulf %142, %141 : vector<2x136xf32>
    %365 = arith.mulf %141, %142 : vector<2x136xf32>
    %366 = arith.subf %364, %365 : vector<2x136xf32>
    %367 = arith.addf %357, %363 : vector<2x136xf32>
    %368 = arith.addf %360, %366 : vector<2x136xf32>
    %369 = arith.mulf %143, %139 : vector<2x136xf32>
    %370 = arith.mulf %144, %140 : vector<2x136xf32>
    %371 = arith.addf %369, %370 : vector<2x136xf32>
    %372 = arith.mulf %144, %139 : vector<2x136xf32>
    %373 = arith.mulf %143, %140 : vector<2x136xf32>
    %374 = arith.subf %372, %373 : vector<2x136xf32>
    %375 = arith.mulf %145, %141 : vector<2x136xf32>
    %376 = arith.mulf %146, %142 : vector<2x136xf32>
    %377 = arith.addf %375, %376 : vector<2x136xf32>
    %378 = arith.mulf %146, %141 : vector<2x136xf32>
    %379 = arith.mulf %145, %142 : vector<2x136xf32>
    %380 = arith.subf %378, %379 : vector<2x136xf32>
    %381 = arith.addf %371, %377 : vector<2x136xf32>
    %382 = arith.addf %374, %380 : vector<2x136xf32>
    %383 = arith.mulf %143, %367 : vector<2x136xf32>
    %384 = arith.mulf %144, %368 : vector<2x136xf32>
    %385 = arith.subf %383, %384 : vector<2x136xf32>
    %386 = arith.mulf %143, %368 : vector<2x136xf32>
    %387 = arith.mulf %144, %367 : vector<2x136xf32>
    %388 = arith.addf %386, %387 : vector<2x136xf32>
    %389 = arith.mulf %139, %381 : vector<2x136xf32>
    %390 = arith.addf %385, %389 : vector<2x136xf32>
    %391 = arith.mulf %140, %382 : vector<2x136xf32>
    %392 = arith.subf %390, %391 : vector<2x136xf32>
    %393 = arith.mulf %139, %382 : vector<2x136xf32>
    %394 = arith.addf %388, %393 : vector<2x136xf32>
    %395 = arith.mulf %140, %381 : vector<2x136xf32>
    %396 = arith.addf %394, %395 : vector<2x136xf32>
    %397 = arith.addf %392, %396 : vector<2x136xf32>
    %cst_60 = arith.constant -7.71885505E-4 : f32
    %398 = vector.broadcast %cst_60 : f32 to vector<2x136xf32>
    %399 = arith.mulf %398, %397 : vector<2x136xf32>
    %cst_61 = arith.constant -0.00157989841 : f32
    %400 = vector.broadcast %cst_61 : f32 to vector<2x136xf32>
    %401 = arith.mulf %400, %396 : vector<2x136xf32>
    %402 = arith.subf %399, %401 : vector<2x136xf32>
    %cst_62 = arith.constant -3.61273414E-5 : f32
    %403 = vector.broadcast %cst_62 : f32 to vector<2x136xf32>
    %404 = arith.mulf %403, %392 : vector<2x136xf32>
    %405 = arith.addf %399, %404 : vector<2x136xf32>
    %406 = arith.addf %336, %402 : vector<2x136xf32>
    %407 = arith.addf %337, %405 : vector<2x136xf32>
    %408 = arith.mulf %145, %367 : vector<2x136xf32>
    %409 = arith.mulf %146, %368 : vector<2x136xf32>
    %410 = arith.subf %408, %409 : vector<2x136xf32>
    %411 = arith.mulf %145, %368 : vector<2x136xf32>
    %412 = arith.mulf %146, %367 : vector<2x136xf32>
    %413 = arith.addf %411, %412 : vector<2x136xf32>
    %414 = arith.mulf %141, %381 : vector<2x136xf32>
    %415 = arith.addf %410, %414 : vector<2x136xf32>
    %416 = arith.mulf %142, %382 : vector<2x136xf32>
    %417 = arith.subf %415, %416 : vector<2x136xf32>
    %418 = arith.mulf %141, %382 : vector<2x136xf32>
    %419 = arith.addf %413, %418 : vector<2x136xf32>
    %420 = arith.mulf %142, %381 : vector<2x136xf32>
    %421 = arith.addf %419, %420 : vector<2x136xf32>
    %422 = arith.addf %417, %421 : vector<2x136xf32>
    %cst_63 = arith.constant -7.71885505E-4 : f32
    %423 = vector.broadcast %cst_63 : f32 to vector<2x136xf32>
    %424 = arith.mulf %423, %422 : vector<2x136xf32>
    %cst_64 = arith.constant -0.00157989841 : f32
    %425 = vector.broadcast %cst_64 : f32 to vector<2x136xf32>
    %426 = arith.mulf %425, %421 : vector<2x136xf32>
    %427 = arith.subf %424, %426 : vector<2x136xf32>
    %cst_65 = arith.constant -3.61273414E-5 : f32
    %428 = vector.broadcast %cst_65 : f32 to vector<2x136xf32>
    %429 = arith.mulf %428, %417 : vector<2x136xf32>
    %430 = arith.addf %424, %429 : vector<2x136xf32>
    %431 = arith.addf %353, %427 : vector<2x136xf32>
    %432 = arith.addf %354, %430 : vector<2x136xf32>
    %433 = arith.mulf %139, %143 : vector<2x136xf32>
    %434 = arith.mulf %140, %144 : vector<2x136xf32>
    %435 = arith.addf %433, %434 : vector<2x136xf32>
    %436 = arith.mulf %140, %143 : vector<2x136xf32>
    %437 = arith.mulf %139, %144 : vector<2x136xf32>
    %438 = arith.subf %436, %437 : vector<2x136xf32>
    %439 = arith.mulf %141, %145 : vector<2x136xf32>
    %440 = arith.mulf %142, %146 : vector<2x136xf32>
    %441 = arith.addf %439, %440 : vector<2x136xf32>
    %442 = arith.mulf %142, %145 : vector<2x136xf32>
    %443 = arith.mulf %141, %146 : vector<2x136xf32>
    %444 = arith.subf %442, %443 : vector<2x136xf32>
    %445 = arith.addf %435, %441 : vector<2x136xf32>
    %446 = arith.addf %438, %444 : vector<2x136xf32>
    %447 = arith.mulf %147, %143 : vector<2x136xf32>
    %448 = arith.mulf %148, %144 : vector<2x136xf32>
    %449 = arith.addf %447, %448 : vector<2x136xf32>
    %450 = arith.mulf %148, %143 : vector<2x136xf32>
    %451 = arith.mulf %147, %144 : vector<2x136xf32>
    %452 = arith.subf %450, %451 : vector<2x136xf32>
    %453 = arith.mulf %149, %145 : vector<2x136xf32>
    %454 = arith.mulf %150, %146 : vector<2x136xf32>
    %455 = arith.addf %453, %454 : vector<2x136xf32>
    %456 = arith.mulf %150, %145 : vector<2x136xf32>
    %457 = arith.mulf %149, %146 : vector<2x136xf32>
    %458 = arith.subf %456, %457 : vector<2x136xf32>
    %459 = arith.addf %449, %455 : vector<2x136xf32>
    %460 = arith.addf %452, %458 : vector<2x136xf32>
    %461 = arith.mulf %147, %445 : vector<2x136xf32>
    %462 = arith.mulf %148, %446 : vector<2x136xf32>
    %463 = arith.subf %461, %462 : vector<2x136xf32>
    %464 = arith.mulf %147, %446 : vector<2x136xf32>
    %465 = arith.mulf %148, %445 : vector<2x136xf32>
    %466 = arith.addf %464, %465 : vector<2x136xf32>
    %467 = arith.mulf %139, %459 : vector<2x136xf32>
    %468 = arith.addf %463, %467 : vector<2x136xf32>
    %469 = arith.mulf %140, %460 : vector<2x136xf32>
    %470 = arith.subf %468, %469 : vector<2x136xf32>
    %471 = arith.mulf %139, %460 : vector<2x136xf32>
    %472 = arith.addf %466, %471 : vector<2x136xf32>
    %473 = arith.mulf %140, %459 : vector<2x136xf32>
    %474 = arith.addf %472, %473 : vector<2x136xf32>
    %475 = arith.addf %470, %474 : vector<2x136xf32>
    %cst_66 = arith.constant 3.80941725E-4 : f32
    %476 = vector.broadcast %cst_66 : f32 to vector<2x136xf32>
    %477 = arith.mulf %476, %475 : vector<2x136xf32>
    %cst_67 = arith.constant -0.00198527635 : f32
    %478 = vector.broadcast %cst_67 : f32 to vector<2x136xf32>
    %479 = arith.mulf %478, %474 : vector<2x136xf32>
    %480 = arith.subf %477, %479 : vector<2x136xf32>
    %cst_68 = arith.constant -0.00274715968 : f32
    %481 = vector.broadcast %cst_68 : f32 to vector<2x136xf32>
    %482 = arith.mulf %481, %470 : vector<2x136xf32>
    %483 = arith.addf %477, %482 : vector<2x136xf32>
    %484 = arith.addf %406, %480 : vector<2x136xf32>
    %485 = arith.addf %407, %483 : vector<2x136xf32>
    %486 = arith.mulf %149, %445 : vector<2x136xf32>
    %487 = arith.mulf %150, %446 : vector<2x136xf32>
    %488 = arith.subf %486, %487 : vector<2x136xf32>
    %489 = arith.mulf %149, %446 : vector<2x136xf32>
    %490 = arith.mulf %150, %445 : vector<2x136xf32>
    %491 = arith.addf %489, %490 : vector<2x136xf32>
    %492 = arith.mulf %141, %459 : vector<2x136xf32>
    %493 = arith.addf %488, %492 : vector<2x136xf32>
    %494 = arith.mulf %142, %460 : vector<2x136xf32>
    %495 = arith.subf %493, %494 : vector<2x136xf32>
    %496 = arith.mulf %141, %460 : vector<2x136xf32>
    %497 = arith.addf %491, %496 : vector<2x136xf32>
    %498 = arith.mulf %142, %459 : vector<2x136xf32>
    %499 = arith.addf %497, %498 : vector<2x136xf32>
    %500 = arith.addf %495, %499 : vector<2x136xf32>
    %cst_69 = arith.constant 3.80941725E-4 : f32
    %501 = vector.broadcast %cst_69 : f32 to vector<2x136xf32>
    %502 = arith.mulf %501, %500 : vector<2x136xf32>
    %cst_70 = arith.constant -0.00198527635 : f32
    %503 = vector.broadcast %cst_70 : f32 to vector<2x136xf32>
    %504 = arith.mulf %503, %499 : vector<2x136xf32>
    %505 = arith.subf %502, %504 : vector<2x136xf32>
    %cst_71 = arith.constant -0.00274715968 : f32
    %506 = vector.broadcast %cst_71 : f32 to vector<2x136xf32>
    %507 = arith.mulf %506, %495 : vector<2x136xf32>
    %508 = arith.addf %502, %507 : vector<2x136xf32>
    %509 = arith.addf %431, %505 : vector<2x136xf32>
    %510 = arith.addf %432, %508 : vector<2x136xf32>
    %511 = arith.mulf %139, %147 : vector<2x136xf32>
    %512 = arith.mulf %140, %148 : vector<2x136xf32>
    %513 = arith.addf %511, %512 : vector<2x136xf32>
    %514 = arith.mulf %140, %147 : vector<2x136xf32>
    %515 = arith.mulf %139, %148 : vector<2x136xf32>
    %516 = arith.subf %514, %515 : vector<2x136xf32>
    %517 = arith.mulf %141, %149 : vector<2x136xf32>
    %518 = arith.mulf %142, %150 : vector<2x136xf32>
    %519 = arith.addf %517, %518 : vector<2x136xf32>
    %520 = arith.mulf %142, %149 : vector<2x136xf32>
    %521 = arith.mulf %141, %150 : vector<2x136xf32>
    %522 = arith.subf %520, %521 : vector<2x136xf32>
    %523 = arith.addf %513, %519 : vector<2x136xf32>
    %524 = arith.addf %516, %522 : vector<2x136xf32>
    %525 = arith.mulf %151, %147 : vector<2x136xf32>
    %526 = arith.mulf %152, %148 : vector<2x136xf32>
    %527 = arith.addf %525, %526 : vector<2x136xf32>
    %528 = arith.mulf %152, %147 : vector<2x136xf32>
    %529 = arith.mulf %151, %148 : vector<2x136xf32>
    %530 = arith.subf %528, %529 : vector<2x136xf32>
    %531 = arith.mulf %153, %149 : vector<2x136xf32>
    %532 = arith.mulf %154, %150 : vector<2x136xf32>
    %533 = arith.addf %531, %532 : vector<2x136xf32>
    %534 = arith.mulf %154, %149 : vector<2x136xf32>
    %535 = arith.mulf %153, %150 : vector<2x136xf32>
    %536 = arith.subf %534, %535 : vector<2x136xf32>
    %537 = arith.addf %527, %533 : vector<2x136xf32>
    %538 = arith.addf %530, %536 : vector<2x136xf32>
    %539 = arith.mulf %151, %523 : vector<2x136xf32>
    %540 = arith.mulf %152, %524 : vector<2x136xf32>
    %541 = arith.subf %539, %540 : vector<2x136xf32>
    %542 = arith.mulf %151, %524 : vector<2x136xf32>
    %543 = arith.mulf %152, %523 : vector<2x136xf32>
    %544 = arith.addf %542, %543 : vector<2x136xf32>
    %545 = arith.mulf %139, %537 : vector<2x136xf32>
    %546 = arith.addf %541, %545 : vector<2x136xf32>
    %547 = arith.mulf %140, %538 : vector<2x136xf32>
    %548 = arith.subf %546, %547 : vector<2x136xf32>
    %549 = arith.mulf %139, %538 : vector<2x136xf32>
    %550 = arith.addf %544, %549 : vector<2x136xf32>
    %551 = arith.mulf %140, %537 : vector<2x136xf32>
    %552 = arith.addf %550, %551 : vector<2x136xf32>
    %553 = arith.addf %548, %552 : vector<2x136xf32>
    %cst_72 = arith.constant 1.88891918E-5 : f32
    %554 = vector.broadcast %cst_72 : f32 to vector<2x136xf32>
    %555 = arith.mulf %554, %553 : vector<2x136xf32>
    %cst_73 = arith.constant 9.14835546E-4 : f32
    %556 = vector.broadcast %cst_73 : f32 to vector<2x136xf32>
    %557 = arith.mulf %556, %552 : vector<2x136xf32>
    %558 = arith.subf %555, %557 : vector<2x136xf32>
    %cst_74 = arith.constant 8.77057144E-4 : f32
    %559 = vector.broadcast %cst_74 : f32 to vector<2x136xf32>
    %560 = arith.mulf %559, %548 : vector<2x136xf32>
    %561 = arith.addf %555, %560 : vector<2x136xf32>
    %562 = arith.addf %484, %558 : vector<2x136xf32>
    %563 = arith.addf %485, %561 : vector<2x136xf32>
    %564 = arith.mulf %153, %523 : vector<2x136xf32>
    %565 = arith.mulf %154, %524 : vector<2x136xf32>
    %566 = arith.subf %564, %565 : vector<2x136xf32>
    %567 = arith.mulf %153, %524 : vector<2x136xf32>
    %568 = arith.mulf %154, %523 : vector<2x136xf32>
    %569 = arith.addf %567, %568 : vector<2x136xf32>
    %570 = arith.mulf %141, %537 : vector<2x136xf32>
    %571 = arith.addf %566, %570 : vector<2x136xf32>
    %572 = arith.mulf %142, %538 : vector<2x136xf32>
    %573 = arith.subf %571, %572 : vector<2x136xf32>
    %574 = arith.mulf %141, %538 : vector<2x136xf32>
    %575 = arith.addf %569, %574 : vector<2x136xf32>
    %576 = arith.mulf %142, %537 : vector<2x136xf32>
    %577 = arith.addf %575, %576 : vector<2x136xf32>
    %578 = arith.addf %573, %577 : vector<2x136xf32>
    %cst_75 = arith.constant 1.88891918E-5 : f32
    %579 = vector.broadcast %cst_75 : f32 to vector<2x136xf32>
    %580 = arith.mulf %579, %578 : vector<2x136xf32>
    %cst_76 = arith.constant 9.14835546E-4 : f32
    %581 = vector.broadcast %cst_76 : f32 to vector<2x136xf32>
    %582 = arith.mulf %581, %577 : vector<2x136xf32>
    %583 = arith.subf %580, %582 : vector<2x136xf32>
    %cst_77 = arith.constant 8.77057144E-4 : f32
    %584 = vector.broadcast %cst_77 : f32 to vector<2x136xf32>
    %585 = arith.mulf %584, %573 : vector<2x136xf32>
    %586 = arith.addf %580, %585 : vector<2x136xf32>
    %587 = arith.addf %509, %583 : vector<2x136xf32>
    %588 = arith.addf %510, %586 : vector<2x136xf32>
    %589 = arith.mulf %143, %143 : vector<2x136xf32>
    %590 = arith.mulf %144, %144 : vector<2x136xf32>
    %591 = arith.addf %589, %590 : vector<2x136xf32>
    %592 = arith.mulf %144, %143 : vector<2x136xf32>
    %593 = arith.mulf %143, %144 : vector<2x136xf32>
    %594 = arith.subf %592, %593 : vector<2x136xf32>
    %595 = arith.mulf %145, %145 : vector<2x136xf32>
    %596 = arith.mulf %146, %146 : vector<2x136xf32>
    %597 = arith.addf %595, %596 : vector<2x136xf32>
    %598 = arith.mulf %146, %145 : vector<2x136xf32>
    %599 = arith.mulf %145, %146 : vector<2x136xf32>
    %600 = arith.subf %598, %599 : vector<2x136xf32>
    %601 = arith.addf %591, %597 : vector<2x136xf32>
    %602 = arith.addf %594, %600 : vector<2x136xf32>
    %603 = arith.mulf %143, %601 : vector<2x136xf32>
    %604 = arith.mulf %144, %602 : vector<2x136xf32>
    %605 = arith.subf %603, %604 : vector<2x136xf32>
    %606 = arith.mulf %143, %602 : vector<2x136xf32>
    %607 = arith.mulf %144, %601 : vector<2x136xf32>
    %608 = arith.addf %606, %607 : vector<2x136xf32>
    %609 = arith.addf %605, %608 : vector<2x136xf32>
    %cst_78 = arith.constant 5.74556529E-4 : f32
    %610 = vector.broadcast %cst_78 : f32 to vector<2x136xf32>
    %611 = arith.mulf %610, %609 : vector<2x136xf32>
    %cst_79 = arith.constant 0.00203736406 : f32
    %612 = vector.broadcast %cst_79 : f32 to vector<2x136xf32>
    %613 = arith.mulf %612, %608 : vector<2x136xf32>
    %614 = arith.subf %611, %613 : vector<2x136xf32>
    %cst_80 = arith.constant 8.88251117E-4 : f32
    %615 = vector.broadcast %cst_80 : f32 to vector<2x136xf32>
    %616 = arith.mulf %615, %605 : vector<2x136xf32>
    %617 = arith.addf %611, %616 : vector<2x136xf32>
    %618 = arith.addf %562, %614 : vector<2x136xf32>
    %619 = arith.addf %563, %617 : vector<2x136xf32>
    %620 = arith.mulf %145, %601 : vector<2x136xf32>
    %621 = arith.mulf %146, %602 : vector<2x136xf32>
    %622 = arith.subf %620, %621 : vector<2x136xf32>
    %623 = arith.mulf %145, %602 : vector<2x136xf32>
    %624 = arith.mulf %146, %601 : vector<2x136xf32>
    %625 = arith.addf %623, %624 : vector<2x136xf32>
    %626 = arith.addf %622, %625 : vector<2x136xf32>
    %cst_81 = arith.constant 5.74556529E-4 : f32
    %627 = vector.broadcast %cst_81 : f32 to vector<2x136xf32>
    %628 = arith.mulf %627, %626 : vector<2x136xf32>
    %cst_82 = arith.constant 0.00203736406 : f32
    %629 = vector.broadcast %cst_82 : f32 to vector<2x136xf32>
    %630 = arith.mulf %629, %625 : vector<2x136xf32>
    %631 = arith.subf %628, %630 : vector<2x136xf32>
    %cst_83 = arith.constant 8.88251117E-4 : f32
    %632 = vector.broadcast %cst_83 : f32 to vector<2x136xf32>
    %633 = arith.mulf %632, %622 : vector<2x136xf32>
    %634 = arith.addf %628, %633 : vector<2x136xf32>
    %635 = arith.addf %587, %631 : vector<2x136xf32>
    %636 = arith.addf %588, %634 : vector<2x136xf32>
    %637 = arith.mulf %143, %147 : vector<2x136xf32>
    %638 = arith.mulf %144, %148 : vector<2x136xf32>
    %639 = arith.addf %637, %638 : vector<2x136xf32>
    %640 = arith.mulf %144, %147 : vector<2x136xf32>
    %641 = arith.mulf %143, %148 : vector<2x136xf32>
    %642 = arith.subf %640, %641 : vector<2x136xf32>
    %643 = arith.mulf %145, %149 : vector<2x136xf32>
    %644 = arith.mulf %146, %150 : vector<2x136xf32>
    %645 = arith.addf %643, %644 : vector<2x136xf32>
    %646 = arith.mulf %146, %149 : vector<2x136xf32>
    %647 = arith.mulf %145, %150 : vector<2x136xf32>
    %648 = arith.subf %646, %647 : vector<2x136xf32>
    %649 = arith.addf %639, %645 : vector<2x136xf32>
    %650 = arith.addf %642, %648 : vector<2x136xf32>
    %651 = arith.mulf %147, %147 : vector<2x136xf32>
    %652 = arith.mulf %148, %148 : vector<2x136xf32>
    %653 = arith.addf %651, %652 : vector<2x136xf32>
    %654 = arith.mulf %148, %147 : vector<2x136xf32>
    %655 = arith.mulf %147, %148 : vector<2x136xf32>
    %656 = arith.subf %654, %655 : vector<2x136xf32>
    %657 = arith.mulf %149, %149 : vector<2x136xf32>
    %658 = arith.mulf %150, %150 : vector<2x136xf32>
    %659 = arith.addf %657, %658 : vector<2x136xf32>
    %660 = arith.mulf %150, %149 : vector<2x136xf32>
    %661 = arith.mulf %149, %150 : vector<2x136xf32>
    %662 = arith.subf %660, %661 : vector<2x136xf32>
    %663 = arith.addf %653, %659 : vector<2x136xf32>
    %664 = arith.addf %656, %662 : vector<2x136xf32>
    %665 = arith.mulf %147, %649 : vector<2x136xf32>
    %666 = arith.mulf %148, %650 : vector<2x136xf32>
    %667 = arith.subf %665, %666 : vector<2x136xf32>
    %668 = arith.mulf %147, %650 : vector<2x136xf32>
    %669 = arith.mulf %148, %649 : vector<2x136xf32>
    %670 = arith.addf %668, %669 : vector<2x136xf32>
    %671 = arith.mulf %143, %663 : vector<2x136xf32>
    %672 = arith.addf %667, %671 : vector<2x136xf32>
    %673 = arith.mulf %144, %664 : vector<2x136xf32>
    %674 = arith.subf %672, %673 : vector<2x136xf32>
    %675 = arith.mulf %143, %664 : vector<2x136xf32>
    %676 = arith.addf %670, %675 : vector<2x136xf32>
    %677 = arith.mulf %144, %663 : vector<2x136xf32>
    %678 = arith.addf %676, %677 : vector<2x136xf32>
    %679 = arith.addf %674, %678 : vector<2x136xf32>
    %cst_84 = arith.constant -7.5327896E-4 : f32
    %680 = vector.broadcast %cst_84 : f32 to vector<2x136xf32>
    %681 = arith.mulf %680, %679 : vector<2x136xf32>
    %cst_85 = arith.constant -0.00134880771 : f32
    %682 = vector.broadcast %cst_85 : f32 to vector<2x136xf32>
    %683 = arith.mulf %682, %678 : vector<2x136xf32>
    %684 = arith.subf %681, %683 : vector<2x136xf32>
    %cst_86 = arith.constant 1.57750212E-4 : f32
    %685 = vector.broadcast %cst_86 : f32 to vector<2x136xf32>
    %686 = arith.mulf %685, %674 : vector<2x136xf32>
    %687 = arith.addf %681, %686 : vector<2x136xf32>
    %688 = arith.addf %618, %684 : vector<2x136xf32>
    %689 = arith.addf %619, %687 : vector<2x136xf32>
    %690 = arith.mulf %149, %649 : vector<2x136xf32>
    %691 = arith.mulf %150, %650 : vector<2x136xf32>
    %692 = arith.subf %690, %691 : vector<2x136xf32>
    %693 = arith.mulf %149, %650 : vector<2x136xf32>
    %694 = arith.mulf %150, %649 : vector<2x136xf32>
    %695 = arith.addf %693, %694 : vector<2x136xf32>
    %696 = arith.mulf %145, %663 : vector<2x136xf32>
    %697 = arith.addf %692, %696 : vector<2x136xf32>
    %698 = arith.mulf %146, %664 : vector<2x136xf32>
    %699 = arith.subf %697, %698 : vector<2x136xf32>
    %700 = arith.mulf %145, %664 : vector<2x136xf32>
    %701 = arith.addf %695, %700 : vector<2x136xf32>
    %702 = arith.mulf %146, %663 : vector<2x136xf32>
    %703 = arith.addf %701, %702 : vector<2x136xf32>
    %704 = arith.addf %699, %703 : vector<2x136xf32>
    %cst_87 = arith.constant -7.5327896E-4 : f32
    %705 = vector.broadcast %cst_87 : f32 to vector<2x136xf32>
    %706 = arith.mulf %705, %704 : vector<2x136xf32>
    %cst_88 = arith.constant -0.00134880771 : f32
    %707 = vector.broadcast %cst_88 : f32 to vector<2x136xf32>
    %708 = arith.mulf %707, %703 : vector<2x136xf32>
    %709 = arith.subf %706, %708 : vector<2x136xf32>
    %cst_89 = arith.constant 1.57750212E-4 : f32
    %710 = vector.broadcast %cst_89 : f32 to vector<2x136xf32>
    %711 = arith.mulf %710, %699 : vector<2x136xf32>
    %712 = arith.addf %706, %711 : vector<2x136xf32>
    %713 = arith.addf %635, %709 : vector<2x136xf32>
    %714 = arith.addf %636, %712 : vector<2x136xf32>
    %715 = arith.mulf %143, %151 : vector<2x136xf32>
    %716 = arith.mulf %144, %152 : vector<2x136xf32>
    %717 = arith.addf %715, %716 : vector<2x136xf32>
    %718 = arith.mulf %144, %151 : vector<2x136xf32>
    %719 = arith.mulf %143, %152 : vector<2x136xf32>
    %720 = arith.subf %718, %719 : vector<2x136xf32>
    %721 = arith.mulf %145, %153 : vector<2x136xf32>
    %722 = arith.mulf %146, %154 : vector<2x136xf32>
    %723 = arith.addf %721, %722 : vector<2x136xf32>
    %724 = arith.mulf %146, %153 : vector<2x136xf32>
    %725 = arith.mulf %145, %154 : vector<2x136xf32>
    %726 = arith.subf %724, %725 : vector<2x136xf32>
    %727 = arith.addf %717, %723 : vector<2x136xf32>
    %728 = arith.addf %720, %726 : vector<2x136xf32>
    %729 = arith.mulf %151, %151 : vector<2x136xf32>
    %730 = arith.mulf %152, %152 : vector<2x136xf32>
    %731 = arith.addf %729, %730 : vector<2x136xf32>
    %732 = arith.mulf %152, %151 : vector<2x136xf32>
    %733 = arith.mulf %151, %152 : vector<2x136xf32>
    %734 = arith.subf %732, %733 : vector<2x136xf32>
    %735 = arith.mulf %153, %153 : vector<2x136xf32>
    %736 = arith.mulf %154, %154 : vector<2x136xf32>
    %737 = arith.addf %735, %736 : vector<2x136xf32>
    %738 = arith.mulf %154, %153 : vector<2x136xf32>
    %739 = arith.mulf %153, %154 : vector<2x136xf32>
    %740 = arith.subf %738, %739 : vector<2x136xf32>
    %741 = arith.addf %731, %737 : vector<2x136xf32>
    %742 = arith.addf %734, %740 : vector<2x136xf32>
    %743 = arith.mulf %151, %727 : vector<2x136xf32>
    %744 = arith.mulf %152, %728 : vector<2x136xf32>
    %745 = arith.subf %743, %744 : vector<2x136xf32>
    %746 = arith.mulf %151, %728 : vector<2x136xf32>
    %747 = arith.mulf %152, %727 : vector<2x136xf32>
    %748 = arith.addf %746, %747 : vector<2x136xf32>
    %749 = arith.mulf %143, %741 : vector<2x136xf32>
    %750 = arith.addf %745, %749 : vector<2x136xf32>
    %751 = arith.mulf %144, %742 : vector<2x136xf32>
    %752 = arith.subf %750, %751 : vector<2x136xf32>
    %753 = arith.mulf %143, %742 : vector<2x136xf32>
    %754 = arith.addf %748, %753 : vector<2x136xf32>
    %755 = arith.mulf %144, %741 : vector<2x136xf32>
    %756 = arith.addf %754, %755 : vector<2x136xf32>
    %757 = arith.addf %752, %756 : vector<2x136xf32>
    %cst_90 = arith.constant 2.30166232E-4 : f32
    %758 = vector.broadcast %cst_90 : f32 to vector<2x136xf32>
    %759 = arith.mulf %758, %757 : vector<2x136xf32>
    %cst_91 = arith.constant 0.00143940106 : f32
    %760 = vector.broadcast %cst_91 : f32 to vector<2x136xf32>
    %761 = arith.mulf %760, %756 : vector<2x136xf32>
    %762 = arith.subf %759, %761 : vector<2x136xf32>
    %cst_92 = arith.constant 9.79068572E-4 : f32
    %763 = vector.broadcast %cst_92 : f32 to vector<2x136xf32>
    %764 = arith.mulf %763, %752 : vector<2x136xf32>
    %765 = arith.addf %759, %764 : vector<2x136xf32>
    %766 = arith.addf %688, %762 : vector<2x136xf32>
    %767 = arith.addf %689, %765 : vector<2x136xf32>
    %768 = arith.mulf %153, %727 : vector<2x136xf32>
    %769 = arith.mulf %154, %728 : vector<2x136xf32>
    %770 = arith.subf %768, %769 : vector<2x136xf32>
    %771 = arith.mulf %153, %728 : vector<2x136xf32>
    %772 = arith.mulf %154, %727 : vector<2x136xf32>
    %773 = arith.addf %771, %772 : vector<2x136xf32>
    %774 = arith.mulf %145, %741 : vector<2x136xf32>
    %775 = arith.addf %770, %774 : vector<2x136xf32>
    %776 = arith.mulf %146, %742 : vector<2x136xf32>
    %777 = arith.subf %775, %776 : vector<2x136xf32>
    %778 = arith.mulf %145, %742 : vector<2x136xf32>
    %779 = arith.addf %773, %778 : vector<2x136xf32>
    %780 = arith.mulf %146, %741 : vector<2x136xf32>
    %781 = arith.addf %779, %780 : vector<2x136xf32>
    %782 = arith.addf %777, %781 : vector<2x136xf32>
    %cst_93 = arith.constant 2.30166232E-4 : f32
    %783 = vector.broadcast %cst_93 : f32 to vector<2x136xf32>
    %784 = arith.mulf %783, %782 : vector<2x136xf32>
    %cst_94 = arith.constant 0.00143940106 : f32
    %785 = vector.broadcast %cst_94 : f32 to vector<2x136xf32>
    %786 = arith.mulf %785, %781 : vector<2x136xf32>
    %787 = arith.subf %784, %786 : vector<2x136xf32>
    %cst_95 = arith.constant 9.79068572E-4 : f32
    %788 = vector.broadcast %cst_95 : f32 to vector<2x136xf32>
    %789 = arith.mulf %788, %777 : vector<2x136xf32>
    %790 = arith.addf %784, %789 : vector<2x136xf32>
    %791 = arith.addf %713, %787 : vector<2x136xf32>
    %792 = arith.addf %714, %790 : vector<2x136xf32>
    %793 = arith.mulf %147, %151 : vector<2x136xf32>
    %794 = arith.mulf %148, %152 : vector<2x136xf32>
    %795 = arith.addf %793, %794 : vector<2x136xf32>
    %796 = arith.mulf %148, %151 : vector<2x136xf32>
    %797 = arith.mulf %147, %152 : vector<2x136xf32>
    %798 = arith.subf %796, %797 : vector<2x136xf32>
    %799 = arith.mulf %149, %153 : vector<2x136xf32>
    %800 = arith.mulf %150, %154 : vector<2x136xf32>
    %801 = arith.addf %799, %800 : vector<2x136xf32>
    %802 = arith.mulf %150, %153 : vector<2x136xf32>
    %803 = arith.mulf %149, %154 : vector<2x136xf32>
    %804 = arith.subf %802, %803 : vector<2x136xf32>
    %805 = arith.addf %795, %801 : vector<2x136xf32>
    %806 = arith.addf %798, %804 : vector<2x136xf32>
    %807 = arith.mulf %147, %805 : vector<2x136xf32>
    %808 = arith.mulf %148, %806 : vector<2x136xf32>
    %809 = arith.subf %807, %808 : vector<2x136xf32>
    %810 = arith.mulf %147, %806 : vector<2x136xf32>
    %811 = arith.mulf %148, %805 : vector<2x136xf32>
    %812 = arith.addf %810, %811 : vector<2x136xf32>
    %813 = arith.addf %809, %812 : vector<2x136xf32>
    %cst_96 = arith.constant -0.0014893437 : f32
    %814 = vector.broadcast %cst_96 : f32 to vector<2x136xf32>
    %815 = arith.mulf %814, %813 : vector<2x136xf32>
    %cst_97 = arith.constant -1.35899754E-5 : f32
    %816 = vector.broadcast %cst_97 : f32 to vector<2x136xf32>
    %817 = arith.mulf %816, %812 : vector<2x136xf32>
    %818 = arith.subf %815, %817 : vector<2x136xf32>
    %cst_98 = arith.constant 0.00296509732 : f32
    %819 = vector.broadcast %cst_98 : f32 to vector<2x136xf32>
    %820 = arith.mulf %819, %809 : vector<2x136xf32>
    %821 = arith.addf %815, %820 : vector<2x136xf32>
    %822 = arith.addf %766, %818 : vector<2x136xf32>
    %823 = arith.addf %767, %821 : vector<2x136xf32>
    %824 = arith.mulf %149, %805 : vector<2x136xf32>
    %825 = arith.mulf %150, %806 : vector<2x136xf32>
    %826 = arith.subf %824, %825 : vector<2x136xf32>
    %827 = arith.mulf %149, %806 : vector<2x136xf32>
    %828 = arith.mulf %150, %805 : vector<2x136xf32>
    %829 = arith.addf %827, %828 : vector<2x136xf32>
    %830 = arith.addf %826, %829 : vector<2x136xf32>
    %cst_99 = arith.constant -0.0014893437 : f32
    %831 = vector.broadcast %cst_99 : f32 to vector<2x136xf32>
    %832 = arith.mulf %831, %830 : vector<2x136xf32>
    %cst_100 = arith.constant -1.35899754E-5 : f32
    %833 = vector.broadcast %cst_100 : f32 to vector<2x136xf32>
    %834 = arith.mulf %833, %829 : vector<2x136xf32>
    %835 = arith.subf %832, %834 : vector<2x136xf32>
    %cst_101 = arith.constant 0.00296509732 : f32
    %836 = vector.broadcast %cst_101 : f32 to vector<2x136xf32>
    %837 = arith.mulf %836, %826 : vector<2x136xf32>
    %838 = arith.addf %832, %837 : vector<2x136xf32>
    %839 = arith.addf %791, %835 : vector<2x136xf32>
    %840 = arith.addf %792, %838 : vector<2x136xf32>
    %841 = vector.broadcast %0 : vector<2x1xf32> to vector<2x136xf32>
    %842 = arith.mulf %841, %822 : vector<2x136xf32>
    %843 = arith.addf %143, %842 : vector<2x136xf32>
    %844 = vector.broadcast %0 : vector<2x1xf32> to vector<2x136xf32>
    %845 = arith.mulf %844, %823 : vector<2x136xf32>
    %846 = arith.addf %144, %845 : vector<2x136xf32>
    %847 = vector.broadcast %0 : vector<2x1xf32> to vector<2x136xf32>
    %848 = arith.mulf %847, %839 : vector<2x136xf32>
    %849 = arith.addf %145, %848 : vector<2x136xf32>
    %850 = vector.broadcast %0 : vector<2x1xf32> to vector<2x136xf32>
    %851 = arith.mulf %850, %840 : vector<2x136xf32>
    %852 = arith.addf %146, %851 : vector<2x136xf32>
    %853 = vector.extract_strided_slice %843 {offsets = [0, 0], sizes = [2, 132], strides = [1, 1]} : vector<2x136xf32> to vector<2x132xf32>
    %854 = vector.extract_strided_slice %846 {offsets = [0, 0], sizes = [2, 132], strides = [1, 1]} : vector<2x136xf32> to vector<2x132xf32>
    %855 = arith.addf %853, %854 : vector<2x132xf32>
    %cst_102 = arith.constant 0.000000e+00 : f32
    %856 = vector.broadcast %cst_102 : f32 to vector<2x132xf32>
    %857 = arith.mulf %856, %855 : vector<2x132xf32>
    %cst_103 = arith.constant -7.26634794E-11 : f32
    %858 = vector.broadcast %cst_103 : f32 to vector<2x132xf32>
    %859 = arith.mulf %858, %854 : vector<2x132xf32>
    %860 = arith.subf %857, %859 : vector<2x132xf32>
    %cst_104 = arith.constant -7.26634794E-11 : f32
    %861 = vector.broadcast %cst_104 : f32 to vector<2x132xf32>
    %862 = arith.mulf %861, %853 : vector<2x132xf32>
    %863 = arith.addf %857, %862 : vector<2x132xf32>
    %864 = vector.extract_strided_slice %843 {offsets = [0, 1], sizes = [2, 132], strides = [1, 1]} : vector<2x136xf32> to vector<2x132xf32>
    %865 = vector.extract_strided_slice %846 {offsets = [0, 1], sizes = [2, 132], strides = [1, 1]} : vector<2x136xf32> to vector<2x132xf32>
    %866 = arith.addf %864, %865 : vector<2x132xf32>
    %cst_105 = arith.constant 0.000000e+00 : f32
    %867 = vector.broadcast %cst_105 : f32 to vector<2x132xf32>
    %868 = arith.mulf %867, %866 : vector<2x132xf32>
    %cst_106 = arith.constant 4.98042885E-10 : f32
    %869 = vector.broadcast %cst_106 : f32 to vector<2x132xf32>
    %870 = arith.mulf %869, %865 : vector<2x132xf32>
    %871 = arith.subf %868, %870 : vector<2x132xf32>
    %cst_107 = arith.constant 4.98042885E-10 : f32
    %872 = vector.broadcast %cst_107 : f32 to vector<2x132xf32>
    %873 = arith.mulf %872, %864 : vector<2x132xf32>
    %874 = arith.addf %868, %873 : vector<2x132xf32>
    %875 = arith.addf %860, %871 : vector<2x132xf32>
    %876 = arith.addf %863, %874 : vector<2x132xf32>
    %877 = vector.extract_strided_slice %843 {offsets = [0, 2], sizes = [2, 132], strides = [1, 1]} : vector<2x136xf32> to vector<2x132xf32>
    %878 = vector.extract_strided_slice %846 {offsets = [0, 2], sizes = [2, 132], strides = [1, 1]} : vector<2x136xf32> to vector<2x132xf32>
    %879 = arith.addf %877, %878 : vector<2x132xf32>
    %cst_108 = arith.constant 1.000000e+00 : f32
    %880 = vector.broadcast %cst_108 : f32 to vector<2x132xf32>
    %881 = arith.mulf %880, %879 : vector<2x132xf32>
    %cst_109 = arith.constant 1.000000e+00 : f32
    %882 = vector.broadcast %cst_109 : f32 to vector<2x132xf32>
    %883 = arith.mulf %882, %878 : vector<2x132xf32>
    %884 = arith.subf %881, %883 : vector<2x132xf32>
    %cst_110 = arith.constant -1.000000e+00 : f32
    %885 = vector.broadcast %cst_110 : f32 to vector<2x132xf32>
    %886 = arith.mulf %885, %877 : vector<2x132xf32>
    %887 = arith.addf %881, %886 : vector<2x132xf32>
    %888 = arith.addf %875, %884 : vector<2x132xf32>
    %889 = arith.addf %876, %887 : vector<2x132xf32>
    %890 = vector.extract_strided_slice %843 {offsets = [0, 3], sizes = [2, 132], strides = [1, 1]} : vector<2x136xf32> to vector<2x132xf32>
    %891 = vector.extract_strided_slice %846 {offsets = [0, 3], sizes = [2, 132], strides = [1, 1]} : vector<2x136xf32> to vector<2x132xf32>
    %892 = arith.addf %890, %891 : vector<2x132xf32>
    %cst_111 = arith.constant 0.000000e+00 : f32
    %893 = vector.broadcast %cst_111 : f32 to vector<2x132xf32>
    %894 = arith.mulf %893, %892 : vector<2x132xf32>
    %cst_112 = arith.constant 4.98042885E-10 : f32
    %895 = vector.broadcast %cst_112 : f32 to vector<2x132xf32>
    %896 = arith.mulf %895, %891 : vector<2x132xf32>
    %897 = arith.subf %894, %896 : vector<2x132xf32>
    %cst_113 = arith.constant 4.98042885E-10 : f32
    %898 = vector.broadcast %cst_113 : f32 to vector<2x132xf32>
    %899 = arith.mulf %898, %890 : vector<2x132xf32>
    %900 = arith.addf %894, %899 : vector<2x132xf32>
    %901 = arith.addf %888, %897 : vector<2x132xf32>
    %902 = arith.addf %889, %900 : vector<2x132xf32>
    %903 = vector.extract_strided_slice %843 {offsets = [0, 4], sizes = [2, 132], strides = [1, 1]} : vector<2x136xf32> to vector<2x132xf32>
    %904 = vector.extract_strided_slice %846 {offsets = [0, 4], sizes = [2, 132], strides = [1, 1]} : vector<2x136xf32> to vector<2x132xf32>
    %905 = arith.addf %903, %904 : vector<2x132xf32>
    %cst_114 = arith.constant 0.000000e+00 : f32
    %906 = vector.broadcast %cst_114 : f32 to vector<2x132xf32>
    %907 = arith.mulf %906, %905 : vector<2x132xf32>
    %cst_115 = arith.constant -7.26634794E-11 : f32
    %908 = vector.broadcast %cst_115 : f32 to vector<2x132xf32>
    %909 = arith.mulf %908, %904 : vector<2x132xf32>
    %910 = arith.subf %907, %909 : vector<2x132xf32>
    %cst_116 = arith.constant -7.26634794E-11 : f32
    %911 = vector.broadcast %cst_116 : f32 to vector<2x132xf32>
    %912 = arith.mulf %911, %903 : vector<2x132xf32>
    %913 = arith.addf %907, %912 : vector<2x132xf32>
    %914 = arith.addf %901, %910 : vector<2x132xf32>
    %915 = arith.addf %902, %913 : vector<2x132xf32>
    %916 = vector.extract_strided_slice %849 {offsets = [0, 0], sizes = [2, 132], strides = [1, 1]} : vector<2x136xf32> to vector<2x132xf32>
    %917 = vector.extract_strided_slice %852 {offsets = [0, 0], sizes = [2, 132], strides = [1, 1]} : vector<2x136xf32> to vector<2x132xf32>
    %918 = arith.addf %916, %917 : vector<2x132xf32>
    %cst_117 = arith.constant 0.000000e+00 : f32
    %919 = vector.broadcast %cst_117 : f32 to vector<2x132xf32>
    %920 = arith.mulf %919, %918 : vector<2x132xf32>
    %cst_118 = arith.constant -7.26634794E-11 : f32
    %921 = vector.broadcast %cst_118 : f32 to vector<2x132xf32>
    %922 = arith.mulf %921, %917 : vector<2x132xf32>
    %923 = arith.subf %920, %922 : vector<2x132xf32>
    %cst_119 = arith.constant -7.26634794E-11 : f32
    %924 = vector.broadcast %cst_119 : f32 to vector<2x132xf32>
    %925 = arith.mulf %924, %916 : vector<2x132xf32>
    %926 = arith.addf %920, %925 : vector<2x132xf32>
    %927 = vector.extract_strided_slice %849 {offsets = [0, 1], sizes = [2, 132], strides = [1, 1]} : vector<2x136xf32> to vector<2x132xf32>
    %928 = vector.extract_strided_slice %852 {offsets = [0, 1], sizes = [2, 132], strides = [1, 1]} : vector<2x136xf32> to vector<2x132xf32>
    %929 = arith.addf %927, %928 : vector<2x132xf32>
    %cst_120 = arith.constant 0.000000e+00 : f32
    %930 = vector.broadcast %cst_120 : f32 to vector<2x132xf32>
    %931 = arith.mulf %930, %929 : vector<2x132xf32>
    %cst_121 = arith.constant 4.98042885E-10 : f32
    %932 = vector.broadcast %cst_121 : f32 to vector<2x132xf32>
    %933 = arith.mulf %932, %928 : vector<2x132xf32>
    %934 = arith.subf %931, %933 : vector<2x132xf32>
    %cst_122 = arith.constant 4.98042885E-10 : f32
    %935 = vector.broadcast %cst_122 : f32 to vector<2x132xf32>
    %936 = arith.mulf %935, %927 : vector<2x132xf32>
    %937 = arith.addf %931, %936 : vector<2x132xf32>
    %938 = arith.addf %923, %934 : vector<2x132xf32>
    %939 = arith.addf %926, %937 : vector<2x132xf32>
    %940 = vector.extract_strided_slice %849 {offsets = [0, 2], sizes = [2, 132], strides = [1, 1]} : vector<2x136xf32> to vector<2x132xf32>
    %941 = vector.extract_strided_slice %852 {offsets = [0, 2], sizes = [2, 132], strides = [1, 1]} : vector<2x136xf32> to vector<2x132xf32>
    %942 = arith.addf %940, %941 : vector<2x132xf32>
    %cst_123 = arith.constant 1.000000e+00 : f32
    %943 = vector.broadcast %cst_123 : f32 to vector<2x132xf32>
    %944 = arith.mulf %943, %942 : vector<2x132xf32>
    %cst_124 = arith.constant 1.000000e+00 : f32
    %945 = vector.broadcast %cst_124 : f32 to vector<2x132xf32>
    %946 = arith.mulf %945, %941 : vector<2x132xf32>
    %947 = arith.subf %944, %946 : vector<2x132xf32>
    %cst_125 = arith.constant -1.000000e+00 : f32
    %948 = vector.broadcast %cst_125 : f32 to vector<2x132xf32>
    %949 = arith.mulf %948, %940 : vector<2x132xf32>
    %950 = arith.addf %944, %949 : vector<2x132xf32>
    %951 = arith.addf %938, %947 : vector<2x132xf32>
    %952 = arith.addf %939, %950 : vector<2x132xf32>
    %953 = vector.extract_strided_slice %849 {offsets = [0, 3], sizes = [2, 132], strides = [1, 1]} : vector<2x136xf32> to vector<2x132xf32>
    %954 = vector.extract_strided_slice %852 {offsets = [0, 3], sizes = [2, 132], strides = [1, 1]} : vector<2x136xf32> to vector<2x132xf32>
    %955 = arith.addf %953, %954 : vector<2x132xf32>
    %cst_126 = arith.constant 0.000000e+00 : f32
    %956 = vector.broadcast %cst_126 : f32 to vector<2x132xf32>
    %957 = arith.mulf %956, %955 : vector<2x132xf32>
    %cst_127 = arith.constant 4.98042885E-10 : f32
    %958 = vector.broadcast %cst_127 : f32 to vector<2x132xf32>
    %959 = arith.mulf %958, %954 : vector<2x132xf32>
    %960 = arith.subf %957, %959 : vector<2x132xf32>
    %cst_128 = arith.constant 4.98042885E-10 : f32
    %961 = vector.broadcast %cst_128 : f32 to vector<2x132xf32>
    %962 = arith.mulf %961, %953 : vector<2x132xf32>
    %963 = arith.addf %957, %962 : vector<2x132xf32>
    %964 = arith.addf %951, %960 : vector<2x132xf32>
    %965 = arith.addf %952, %963 : vector<2x132xf32>
    %966 = vector.extract_strided_slice %849 {offsets = [0, 4], sizes = [2, 132], strides = [1, 1]} : vector<2x136xf32> to vector<2x132xf32>
    %967 = vector.extract_strided_slice %852 {offsets = [0, 4], sizes = [2, 132], strides = [1, 1]} : vector<2x136xf32> to vector<2x132xf32>
    %968 = arith.addf %966, %967 : vector<2x132xf32>
    %cst_129 = arith.constant 0.000000e+00 : f32
    %969 = vector.broadcast %cst_129 : f32 to vector<2x132xf32>
    %970 = arith.mulf %969, %968 : vector<2x132xf32>
    %cst_130 = arith.constant -7.26634794E-11 : f32
    %971 = vector.broadcast %cst_130 : f32 to vector<2x132xf32>
    %972 = arith.mulf %971, %967 : vector<2x132xf32>
    %973 = arith.subf %970, %972 : vector<2x132xf32>
    %cst_131 = arith.constant -7.26634794E-11 : f32
    %974 = vector.broadcast %cst_131 : f32 to vector<2x132xf32>
    %975 = arith.mulf %974, %966 : vector<2x132xf32>
    %976 = arith.addf %970, %975 : vector<2x132xf32>
    %977 = arith.addf %964, %973 : vector<2x132xf32>
    %978 = arith.addf %965, %976 : vector<2x132xf32>
    %979 = vector.extract_strided_slice %914 {offsets = [0, 0], sizes = [2, 128], strides = [1, 1]} : vector<2x132xf32> to vector<2x128xf32>
    %980 = vector.extract_strided_slice %915 {offsets = [0, 0], sizes = [2, 128], strides = [1, 1]} : vector<2x132xf32> to vector<2x128xf32>
    %981 = vector.extract_strided_slice %977 {offsets = [0, 0], sizes = [2, 128], strides = [1, 1]} : vector<2x132xf32> to vector<2x128xf32>
    %982 = vector.extract_strided_slice %978 {offsets = [0, 0], sizes = [2, 128], strides = [1, 1]} : vector<2x132xf32> to vector<2x128xf32>
    %983 = vector.extract_strided_slice %914 {offsets = [0, 1], sizes = [2, 128], strides = [1, 1]} : vector<2x132xf32> to vector<2x128xf32>
    %984 = vector.extract_strided_slice %915 {offsets = [0, 1], sizes = [2, 128], strides = [1, 1]} : vector<2x132xf32> to vector<2x128xf32>
    %985 = vector.extract_strided_slice %977 {offsets = [0, 1], sizes = [2, 128], strides = [1, 1]} : vector<2x132xf32> to vector<2x128xf32>
    %986 = vector.extract_strided_slice %978 {offsets = [0, 1], sizes = [2, 128], strides = [1, 1]} : vector<2x132xf32> to vector<2x128xf32>
    %987 = vector.extract_strided_slice %914 {offsets = [0, 2], sizes = [2, 128], strides = [1, 1]} : vector<2x132xf32> to vector<2x128xf32>
    %988 = vector.extract_strided_slice %915 {offsets = [0, 2], sizes = [2, 128], strides = [1, 1]} : vector<2x132xf32> to vector<2x128xf32>
    %989 = vector.extract_strided_slice %977 {offsets = [0, 2], sizes = [2, 128], strides = [1, 1]} : vector<2x132xf32> to vector<2x128xf32>
    %990 = vector.extract_strided_slice %978 {offsets = [0, 2], sizes = [2, 128], strides = [1, 1]} : vector<2x132xf32> to vector<2x128xf32>
    %991 = vector.extract_strided_slice %914 {offsets = [0, 3], sizes = [2, 128], strides = [1, 1]} : vector<2x132xf32> to vector<2x128xf32>
    %992 = vector.extract_strided_slice %915 {offsets = [0, 3], sizes = [2, 128], strides = [1, 1]} : vector<2x132xf32> to vector<2x128xf32>
    %993 = vector.extract_strided_slice %977 {offsets = [0, 3], sizes = [2, 128], strides = [1, 1]} : vector<2x132xf32> to vector<2x128xf32>
    %994 = vector.extract_strided_slice %978 {offsets = [0, 3], sizes = [2, 128], strides = [1, 1]} : vector<2x132xf32> to vector<2x128xf32>
    %995 = vector.extract_strided_slice %914 {offsets = [0, 4], sizes = [2, 128], strides = [1, 1]} : vector<2x132xf32> to vector<2x128xf32>
    %996 = vector.extract_strided_slice %915 {offsets = [0, 4], sizes = [2, 128], strides = [1, 1]} : vector<2x132xf32> to vector<2x128xf32>
    %997 = vector.extract_strided_slice %977 {offsets = [0, 4], sizes = [2, 128], strides = [1, 1]} : vector<2x132xf32> to vector<2x128xf32>
    %998 = vector.extract_strided_slice %978 {offsets = [0, 4], sizes = [2, 128], strides = [1, 1]} : vector<2x132xf32> to vector<2x128xf32>
    %999 = arith.mulf %979, %979 : vector<2x128xf32>
    %1000 = arith.mulf %980, %980 : vector<2x128xf32>
    %1001 = arith.addf %999, %1000 : vector<2x128xf32>
    %1002 = arith.mulf %980, %979 : vector<2x128xf32>
    %1003 = arith.mulf %979, %980 : vector<2x128xf32>
    %1004 = arith.subf %1002, %1003 : vector<2x128xf32>
    %1005 = arith.mulf %981, %981 : vector<2x128xf32>
    %1006 = arith.mulf %982, %982 : vector<2x128xf32>
    %1007 = arith.addf %1005, %1006 : vector<2x128xf32>
    %1008 = arith.mulf %982, %981 : vector<2x128xf32>
    %1009 = arith.mulf %981, %982 : vector<2x128xf32>
    %1010 = arith.subf %1008, %1009 : vector<2x128xf32>
    %1011 = arith.addf %1001, %1007 : vector<2x128xf32>
    %1012 = arith.addf %1004, %1010 : vector<2x128xf32>
    %1013 = arith.mulf %987, %979 : vector<2x128xf32>
    %1014 = arith.mulf %988, %980 : vector<2x128xf32>
    %1015 = arith.addf %1013, %1014 : vector<2x128xf32>
    %1016 = arith.mulf %988, %979 : vector<2x128xf32>
    %1017 = arith.mulf %987, %980 : vector<2x128xf32>
    %1018 = arith.subf %1016, %1017 : vector<2x128xf32>
    %1019 = arith.mulf %989, %981 : vector<2x128xf32>
    %1020 = arith.mulf %990, %982 : vector<2x128xf32>
    %1021 = arith.addf %1019, %1020 : vector<2x128xf32>
    %1022 = arith.mulf %990, %981 : vector<2x128xf32>
    %1023 = arith.mulf %989, %982 : vector<2x128xf32>
    %1024 = arith.subf %1022, %1023 : vector<2x128xf32>
    %1025 = arith.addf %1015, %1021 : vector<2x128xf32>
    %1026 = arith.addf %1018, %1024 : vector<2x128xf32>
    %1027 = arith.mulf %987, %1011 : vector<2x128xf32>
    %1028 = arith.mulf %988, %1012 : vector<2x128xf32>
    %1029 = arith.subf %1027, %1028 : vector<2x128xf32>
    %1030 = arith.mulf %987, %1012 : vector<2x128xf32>
    %1031 = arith.mulf %988, %1011 : vector<2x128xf32>
    %1032 = arith.addf %1030, %1031 : vector<2x128xf32>
    %1033 = arith.mulf %979, %1025 : vector<2x128xf32>
    %1034 = arith.addf %1029, %1033 : vector<2x128xf32>
    %1035 = arith.mulf %980, %1026 : vector<2x128xf32>
    %1036 = arith.subf %1034, %1035 : vector<2x128xf32>
    %1037 = arith.mulf %979, %1026 : vector<2x128xf32>
    %1038 = arith.addf %1032, %1037 : vector<2x128xf32>
    %1039 = arith.mulf %980, %1025 : vector<2x128xf32>
    %1040 = arith.addf %1038, %1039 : vector<2x128xf32>
    %1041 = arith.addf %1036, %1040 : vector<2x128xf32>
    %cst_132 = arith.constant 0.00129563594 : f32
    %1042 = vector.broadcast %cst_132 : f32 to vector<2x128xf32>
    %1043 = arith.mulf %1042, %1041 : vector<2x128xf32>
    %cst_133 = arith.constant 6.73692324E-4 : f32
    %1044 = vector.broadcast %cst_133 : f32 to vector<2x128xf32>
    %1045 = arith.mulf %1044, %1040 : vector<2x128xf32>
    %1046 = arith.subf %1043, %1045 : vector<2x128xf32>
    %cst_134 = arith.constant -0.00191757956 : f32
    %1047 = vector.broadcast %cst_134 : f32 to vector<2x128xf32>
    %1048 = arith.mulf %1047, %1036 : vector<2x128xf32>
    %1049 = arith.addf %1043, %1048 : vector<2x128xf32>
    %1050 = arith.mulf %989, %1011 : vector<2x128xf32>
    %1051 = arith.mulf %990, %1012 : vector<2x128xf32>
    %1052 = arith.subf %1050, %1051 : vector<2x128xf32>
    %1053 = arith.mulf %989, %1012 : vector<2x128xf32>
    %1054 = arith.mulf %990, %1011 : vector<2x128xf32>
    %1055 = arith.addf %1053, %1054 : vector<2x128xf32>
    %1056 = arith.mulf %981, %1025 : vector<2x128xf32>
    %1057 = arith.addf %1052, %1056 : vector<2x128xf32>
    %1058 = arith.mulf %982, %1026 : vector<2x128xf32>
    %1059 = arith.subf %1057, %1058 : vector<2x128xf32>
    %1060 = arith.mulf %981, %1026 : vector<2x128xf32>
    %1061 = arith.addf %1055, %1060 : vector<2x128xf32>
    %1062 = arith.mulf %982, %1025 : vector<2x128xf32>
    %1063 = arith.addf %1061, %1062 : vector<2x128xf32>
    %1064 = arith.addf %1059, %1063 : vector<2x128xf32>
    %cst_135 = arith.constant 0.00129563594 : f32
    %1065 = vector.broadcast %cst_135 : f32 to vector<2x128xf32>
    %1066 = arith.mulf %1065, %1064 : vector<2x128xf32>
    %cst_136 = arith.constant 6.73692324E-4 : f32
    %1067 = vector.broadcast %cst_136 : f32 to vector<2x128xf32>
    %1068 = arith.mulf %1067, %1063 : vector<2x128xf32>
    %1069 = arith.subf %1066, %1068 : vector<2x128xf32>
    %cst_137 = arith.constant -0.00191757956 : f32
    %1070 = vector.broadcast %cst_137 : f32 to vector<2x128xf32>
    %1071 = arith.mulf %1070, %1059 : vector<2x128xf32>
    %1072 = arith.addf %1066, %1071 : vector<2x128xf32>
    %1073 = arith.mulf %979, %983 : vector<2x128xf32>
    %1074 = arith.mulf %980, %984 : vector<2x128xf32>
    %1075 = arith.addf %1073, %1074 : vector<2x128xf32>
    %1076 = arith.mulf %980, %983 : vector<2x128xf32>
    %1077 = arith.mulf %979, %984 : vector<2x128xf32>
    %1078 = arith.subf %1076, %1077 : vector<2x128xf32>
    %1079 = arith.mulf %981, %985 : vector<2x128xf32>
    %1080 = arith.mulf %982, %986 : vector<2x128xf32>
    %1081 = arith.addf %1079, %1080 : vector<2x128xf32>
    %1082 = arith.mulf %982, %985 : vector<2x128xf32>
    %1083 = arith.mulf %981, %986 : vector<2x128xf32>
    %1084 = arith.subf %1082, %1083 : vector<2x128xf32>
    %1085 = arith.addf %1075, %1081 : vector<2x128xf32>
    %1086 = arith.addf %1078, %1084 : vector<2x128xf32>
    %1087 = arith.mulf %991, %983 : vector<2x128xf32>
    %1088 = arith.mulf %992, %984 : vector<2x128xf32>
    %1089 = arith.addf %1087, %1088 : vector<2x128xf32>
    %1090 = arith.mulf %992, %983 : vector<2x128xf32>
    %1091 = arith.mulf %991, %984 : vector<2x128xf32>
    %1092 = arith.subf %1090, %1091 : vector<2x128xf32>
    %1093 = arith.mulf %993, %985 : vector<2x128xf32>
    %1094 = arith.mulf %994, %986 : vector<2x128xf32>
    %1095 = arith.addf %1093, %1094 : vector<2x128xf32>
    %1096 = arith.mulf %994, %985 : vector<2x128xf32>
    %1097 = arith.mulf %993, %986 : vector<2x128xf32>
    %1098 = arith.subf %1096, %1097 : vector<2x128xf32>
    %1099 = arith.addf %1089, %1095 : vector<2x128xf32>
    %1100 = arith.addf %1092, %1098 : vector<2x128xf32>
    %1101 = arith.mulf %991, %1085 : vector<2x128xf32>
    %1102 = arith.mulf %992, %1086 : vector<2x128xf32>
    %1103 = arith.subf %1101, %1102 : vector<2x128xf32>
    %1104 = arith.mulf %991, %1086 : vector<2x128xf32>
    %1105 = arith.mulf %992, %1085 : vector<2x128xf32>
    %1106 = arith.addf %1104, %1105 : vector<2x128xf32>
    %1107 = arith.mulf %979, %1099 : vector<2x128xf32>
    %1108 = arith.addf %1103, %1107 : vector<2x128xf32>
    %1109 = arith.mulf %980, %1100 : vector<2x128xf32>
    %1110 = arith.subf %1108, %1109 : vector<2x128xf32>
    %1111 = arith.mulf %979, %1100 : vector<2x128xf32>
    %1112 = arith.addf %1106, %1111 : vector<2x128xf32>
    %1113 = arith.mulf %980, %1099 : vector<2x128xf32>
    %1114 = arith.addf %1112, %1113 : vector<2x128xf32>
    %1115 = arith.addf %1110, %1114 : vector<2x128xf32>
    %cst_138 = arith.constant 0.00135501055 : f32
    %1116 = vector.broadcast %cst_138 : f32 to vector<2x128xf32>
    %1117 = arith.mulf %1116, %1115 : vector<2x128xf32>
    %cst_139 = arith.constant 0.00197981461 : f32
    %1118 = vector.broadcast %cst_139 : f32 to vector<2x128xf32>
    %1119 = arith.mulf %1118, %1114 : vector<2x128xf32>
    %1120 = arith.subf %1117, %1119 : vector<2x128xf32>
    %cst_140 = arith.constant -7.30206433E-4 : f32
    %1121 = vector.broadcast %cst_140 : f32 to vector<2x128xf32>
    %1122 = arith.mulf %1121, %1110 : vector<2x128xf32>
    %1123 = arith.addf %1117, %1122 : vector<2x128xf32>
    %1124 = arith.addf %1046, %1120 : vector<2x128xf32>
    %1125 = arith.addf %1049, %1123 : vector<2x128xf32>
    %1126 = arith.mulf %993, %1085 : vector<2x128xf32>
    %1127 = arith.mulf %994, %1086 : vector<2x128xf32>
    %1128 = arith.subf %1126, %1127 : vector<2x128xf32>
    %1129 = arith.mulf %993, %1086 : vector<2x128xf32>
    %1130 = arith.mulf %994, %1085 : vector<2x128xf32>
    %1131 = arith.addf %1129, %1130 : vector<2x128xf32>
    %1132 = arith.mulf %981, %1099 : vector<2x128xf32>
    %1133 = arith.addf %1128, %1132 : vector<2x128xf32>
    %1134 = arith.mulf %982, %1100 : vector<2x128xf32>
    %1135 = arith.subf %1133, %1134 : vector<2x128xf32>
    %1136 = arith.mulf %981, %1100 : vector<2x128xf32>
    %1137 = arith.addf %1131, %1136 : vector<2x128xf32>
    %1138 = arith.mulf %982, %1099 : vector<2x128xf32>
    %1139 = arith.addf %1137, %1138 : vector<2x128xf32>
    %1140 = arith.addf %1135, %1139 : vector<2x128xf32>
    %cst_141 = arith.constant 0.00135501055 : f32
    %1141 = vector.broadcast %cst_141 : f32 to vector<2x128xf32>
    %1142 = arith.mulf %1141, %1140 : vector<2x128xf32>
    %cst_142 = arith.constant 0.00197981461 : f32
    %1143 = vector.broadcast %cst_142 : f32 to vector<2x128xf32>
    %1144 = arith.mulf %1143, %1139 : vector<2x128xf32>
    %1145 = arith.subf %1142, %1144 : vector<2x128xf32>
    %cst_143 = arith.constant -7.30206433E-4 : f32
    %1146 = vector.broadcast %cst_143 : f32 to vector<2x128xf32>
    %1147 = arith.mulf %1146, %1135 : vector<2x128xf32>
    %1148 = arith.addf %1142, %1147 : vector<2x128xf32>
    %1149 = arith.addf %1069, %1145 : vector<2x128xf32>
    %1150 = arith.addf %1072, %1148 : vector<2x128xf32>
    %1151 = arith.mulf %983, %979 : vector<2x128xf32>
    %1152 = arith.mulf %984, %980 : vector<2x128xf32>
    %1153 = arith.addf %1151, %1152 : vector<2x128xf32>
    %1154 = arith.mulf %984, %979 : vector<2x128xf32>
    %1155 = arith.mulf %983, %980 : vector<2x128xf32>
    %1156 = arith.subf %1154, %1155 : vector<2x128xf32>
    %1157 = arith.mulf %985, %981 : vector<2x128xf32>
    %1158 = arith.mulf %986, %982 : vector<2x128xf32>
    %1159 = arith.addf %1157, %1158 : vector<2x128xf32>
    %1160 = arith.mulf %986, %981 : vector<2x128xf32>
    %1161 = arith.mulf %985, %982 : vector<2x128xf32>
    %1162 = arith.subf %1160, %1161 : vector<2x128xf32>
    %1163 = arith.addf %1153, %1159 : vector<2x128xf32>
    %1164 = arith.addf %1156, %1162 : vector<2x128xf32>
    %1165 = arith.mulf %983, %1163 : vector<2x128xf32>
    %1166 = arith.mulf %984, %1164 : vector<2x128xf32>
    %1167 = arith.subf %1165, %1166 : vector<2x128xf32>
    %1168 = arith.mulf %983, %1164 : vector<2x128xf32>
    %1169 = arith.mulf %984, %1163 : vector<2x128xf32>
    %1170 = arith.addf %1168, %1169 : vector<2x128xf32>
    %1171 = arith.addf %1167, %1170 : vector<2x128xf32>
    %cst_144 = arith.constant -4.09605593E-4 : f32
    %1172 = vector.broadcast %cst_144 : f32 to vector<2x128xf32>
    %1173 = arith.mulf %1172, %1171 : vector<2x128xf32>
    %cst_145 = arith.constant 0.00127247209 : f32
    %1174 = vector.broadcast %cst_145 : f32 to vector<2x128xf32>
    %1175 = arith.mulf %1174, %1170 : vector<2x128xf32>
    %1176 = arith.subf %1173, %1175 : vector<2x128xf32>
    %cst_146 = arith.constant 0.00209168321 : f32
    %1177 = vector.broadcast %cst_146 : f32 to vector<2x128xf32>
    %1178 = arith.mulf %1177, %1167 : vector<2x128xf32>
    %1179 = arith.addf %1173, %1178 : vector<2x128xf32>
    %1180 = arith.addf %1124, %1176 : vector<2x128xf32>
    %1181 = arith.addf %1125, %1179 : vector<2x128xf32>
    %1182 = arith.mulf %985, %1163 : vector<2x128xf32>
    %1183 = arith.mulf %986, %1164 : vector<2x128xf32>
    %1184 = arith.subf %1182, %1183 : vector<2x128xf32>
    %1185 = arith.mulf %985, %1164 : vector<2x128xf32>
    %1186 = arith.mulf %986, %1163 : vector<2x128xf32>
    %1187 = arith.addf %1185, %1186 : vector<2x128xf32>
    %1188 = arith.addf %1184, %1187 : vector<2x128xf32>
    %cst_147 = arith.constant -4.09605593E-4 : f32
    %1189 = vector.broadcast %cst_147 : f32 to vector<2x128xf32>
    %1190 = arith.mulf %1189, %1188 : vector<2x128xf32>
    %cst_148 = arith.constant 0.00127247209 : f32
    %1191 = vector.broadcast %cst_148 : f32 to vector<2x128xf32>
    %1192 = arith.mulf %1191, %1187 : vector<2x128xf32>
    %1193 = arith.subf %1190, %1192 : vector<2x128xf32>
    %cst_149 = arith.constant 0.00209168321 : f32
    %1194 = vector.broadcast %cst_149 : f32 to vector<2x128xf32>
    %1195 = arith.mulf %1194, %1184 : vector<2x128xf32>
    %1196 = arith.addf %1190, %1195 : vector<2x128xf32>
    %1197 = arith.addf %1149, %1193 : vector<2x128xf32>
    %1198 = arith.addf %1150, %1196 : vector<2x128xf32>
    %1199 = arith.mulf %983, %983 : vector<2x128xf32>
    %1200 = arith.mulf %984, %984 : vector<2x128xf32>
    %1201 = arith.addf %1199, %1200 : vector<2x128xf32>
    %1202 = arith.mulf %984, %983 : vector<2x128xf32>
    %1203 = arith.mulf %983, %984 : vector<2x128xf32>
    %1204 = arith.subf %1202, %1203 : vector<2x128xf32>
    %1205 = arith.mulf %985, %985 : vector<2x128xf32>
    %1206 = arith.mulf %986, %986 : vector<2x128xf32>
    %1207 = arith.addf %1205, %1206 : vector<2x128xf32>
    %1208 = arith.mulf %986, %985 : vector<2x128xf32>
    %1209 = arith.mulf %985, %986 : vector<2x128xf32>
    %1210 = arith.subf %1208, %1209 : vector<2x128xf32>
    %1211 = arith.addf %1201, %1207 : vector<2x128xf32>
    %1212 = arith.addf %1204, %1210 : vector<2x128xf32>
    %1213 = arith.mulf %987, %983 : vector<2x128xf32>
    %1214 = arith.mulf %988, %984 : vector<2x128xf32>
    %1215 = arith.addf %1213, %1214 : vector<2x128xf32>
    %1216 = arith.mulf %988, %983 : vector<2x128xf32>
    %1217 = arith.mulf %987, %984 : vector<2x128xf32>
    %1218 = arith.subf %1216, %1217 : vector<2x128xf32>
    %1219 = arith.mulf %989, %985 : vector<2x128xf32>
    %1220 = arith.mulf %990, %986 : vector<2x128xf32>
    %1221 = arith.addf %1219, %1220 : vector<2x128xf32>
    %1222 = arith.mulf %990, %985 : vector<2x128xf32>
    %1223 = arith.mulf %989, %986 : vector<2x128xf32>
    %1224 = arith.subf %1222, %1223 : vector<2x128xf32>
    %1225 = arith.addf %1215, %1221 : vector<2x128xf32>
    %1226 = arith.addf %1218, %1224 : vector<2x128xf32>
    %1227 = arith.mulf %987, %1211 : vector<2x128xf32>
    %1228 = arith.mulf %988, %1212 : vector<2x128xf32>
    %1229 = arith.subf %1227, %1228 : vector<2x128xf32>
    %1230 = arith.mulf %987, %1212 : vector<2x128xf32>
    %1231 = arith.mulf %988, %1211 : vector<2x128xf32>
    %1232 = arith.addf %1230, %1231 : vector<2x128xf32>
    %1233 = arith.mulf %983, %1225 : vector<2x128xf32>
    %1234 = arith.addf %1229, %1233 : vector<2x128xf32>
    %1235 = arith.mulf %984, %1226 : vector<2x128xf32>
    %1236 = arith.subf %1234, %1235 : vector<2x128xf32>
    %1237 = arith.mulf %983, %1226 : vector<2x128xf32>
    %1238 = arith.addf %1232, %1237 : vector<2x128xf32>
    %1239 = arith.mulf %984, %1225 : vector<2x128xf32>
    %1240 = arith.addf %1238, %1239 : vector<2x128xf32>
    %1241 = arith.addf %1236, %1240 : vector<2x128xf32>
    %cst_150 = arith.constant -7.71885505E-4 : f32
    %1242 = vector.broadcast %cst_150 : f32 to vector<2x128xf32>
    %1243 = arith.mulf %1242, %1241 : vector<2x128xf32>
    %cst_151 = arith.constant -0.00157989841 : f32
    %1244 = vector.broadcast %cst_151 : f32 to vector<2x128xf32>
    %1245 = arith.mulf %1244, %1240 : vector<2x128xf32>
    %1246 = arith.subf %1243, %1245 : vector<2x128xf32>
    %cst_152 = arith.constant -3.61273414E-5 : f32
    %1247 = vector.broadcast %cst_152 : f32 to vector<2x128xf32>
    %1248 = arith.mulf %1247, %1236 : vector<2x128xf32>
    %1249 = arith.addf %1243, %1248 : vector<2x128xf32>
    %1250 = arith.addf %1180, %1246 : vector<2x128xf32>
    %1251 = arith.addf %1181, %1249 : vector<2x128xf32>
    %1252 = arith.mulf %989, %1211 : vector<2x128xf32>
    %1253 = arith.mulf %990, %1212 : vector<2x128xf32>
    %1254 = arith.subf %1252, %1253 : vector<2x128xf32>
    %1255 = arith.mulf %989, %1212 : vector<2x128xf32>
    %1256 = arith.mulf %990, %1211 : vector<2x128xf32>
    %1257 = arith.addf %1255, %1256 : vector<2x128xf32>
    %1258 = arith.mulf %985, %1225 : vector<2x128xf32>
    %1259 = arith.addf %1254, %1258 : vector<2x128xf32>
    %1260 = arith.mulf %986, %1226 : vector<2x128xf32>
    %1261 = arith.subf %1259, %1260 : vector<2x128xf32>
    %1262 = arith.mulf %985, %1226 : vector<2x128xf32>
    %1263 = arith.addf %1257, %1262 : vector<2x128xf32>
    %1264 = arith.mulf %986, %1225 : vector<2x128xf32>
    %1265 = arith.addf %1263, %1264 : vector<2x128xf32>
    %1266 = arith.addf %1261, %1265 : vector<2x128xf32>
    %cst_153 = arith.constant -7.71885505E-4 : f32
    %1267 = vector.broadcast %cst_153 : f32 to vector<2x128xf32>
    %1268 = arith.mulf %1267, %1266 : vector<2x128xf32>
    %cst_154 = arith.constant -0.00157989841 : f32
    %1269 = vector.broadcast %cst_154 : f32 to vector<2x128xf32>
    %1270 = arith.mulf %1269, %1265 : vector<2x128xf32>
    %1271 = arith.subf %1268, %1270 : vector<2x128xf32>
    %cst_155 = arith.constant -3.61273414E-5 : f32
    %1272 = vector.broadcast %cst_155 : f32 to vector<2x128xf32>
    %1273 = arith.mulf %1272, %1261 : vector<2x128xf32>
    %1274 = arith.addf %1268, %1273 : vector<2x128xf32>
    %1275 = arith.addf %1197, %1271 : vector<2x128xf32>
    %1276 = arith.addf %1198, %1274 : vector<2x128xf32>
    %1277 = arith.mulf %983, %987 : vector<2x128xf32>
    %1278 = arith.mulf %984, %988 : vector<2x128xf32>
    %1279 = arith.addf %1277, %1278 : vector<2x128xf32>
    %1280 = arith.mulf %984, %987 : vector<2x128xf32>
    %1281 = arith.mulf %983, %988 : vector<2x128xf32>
    %1282 = arith.subf %1280, %1281 : vector<2x128xf32>
    %1283 = arith.mulf %985, %989 : vector<2x128xf32>
    %1284 = arith.mulf %986, %990 : vector<2x128xf32>
    %1285 = arith.addf %1283, %1284 : vector<2x128xf32>
    %1286 = arith.mulf %986, %989 : vector<2x128xf32>
    %1287 = arith.mulf %985, %990 : vector<2x128xf32>
    %1288 = arith.subf %1286, %1287 : vector<2x128xf32>
    %1289 = arith.addf %1279, %1285 : vector<2x128xf32>
    %1290 = arith.addf %1282, %1288 : vector<2x128xf32>
    %1291 = arith.mulf %991, %987 : vector<2x128xf32>
    %1292 = arith.mulf %992, %988 : vector<2x128xf32>
    %1293 = arith.addf %1291, %1292 : vector<2x128xf32>
    %1294 = arith.mulf %992, %987 : vector<2x128xf32>
    %1295 = arith.mulf %991, %988 : vector<2x128xf32>
    %1296 = arith.subf %1294, %1295 : vector<2x128xf32>
    %1297 = arith.mulf %993, %989 : vector<2x128xf32>
    %1298 = arith.mulf %994, %990 : vector<2x128xf32>
    %1299 = arith.addf %1297, %1298 : vector<2x128xf32>
    %1300 = arith.mulf %994, %989 : vector<2x128xf32>
    %1301 = arith.mulf %993, %990 : vector<2x128xf32>
    %1302 = arith.subf %1300, %1301 : vector<2x128xf32>
    %1303 = arith.addf %1293, %1299 : vector<2x128xf32>
    %1304 = arith.addf %1296, %1302 : vector<2x128xf32>
    %1305 = arith.mulf %991, %1289 : vector<2x128xf32>
    %1306 = arith.mulf %992, %1290 : vector<2x128xf32>
    %1307 = arith.subf %1305, %1306 : vector<2x128xf32>
    %1308 = arith.mulf %991, %1290 : vector<2x128xf32>
    %1309 = arith.mulf %992, %1289 : vector<2x128xf32>
    %1310 = arith.addf %1308, %1309 : vector<2x128xf32>
    %1311 = arith.mulf %983, %1303 : vector<2x128xf32>
    %1312 = arith.addf %1307, %1311 : vector<2x128xf32>
    %1313 = arith.mulf %984, %1304 : vector<2x128xf32>
    %1314 = arith.subf %1312, %1313 : vector<2x128xf32>
    %1315 = arith.mulf %983, %1304 : vector<2x128xf32>
    %1316 = arith.addf %1310, %1315 : vector<2x128xf32>
    %1317 = arith.mulf %984, %1303 : vector<2x128xf32>
    %1318 = arith.addf %1316, %1317 : vector<2x128xf32>
    %1319 = arith.addf %1314, %1318 : vector<2x128xf32>
    %cst_156 = arith.constant 3.80941725E-4 : f32
    %1320 = vector.broadcast %cst_156 : f32 to vector<2x128xf32>
    %1321 = arith.mulf %1320, %1319 : vector<2x128xf32>
    %cst_157 = arith.constant -0.00198527635 : f32
    %1322 = vector.broadcast %cst_157 : f32 to vector<2x128xf32>
    %1323 = arith.mulf %1322, %1318 : vector<2x128xf32>
    %1324 = arith.subf %1321, %1323 : vector<2x128xf32>
    %cst_158 = arith.constant -0.00274715968 : f32
    %1325 = vector.broadcast %cst_158 : f32 to vector<2x128xf32>
    %1326 = arith.mulf %1325, %1314 : vector<2x128xf32>
    %1327 = arith.addf %1321, %1326 : vector<2x128xf32>
    %1328 = arith.addf %1250, %1324 : vector<2x128xf32>
    %1329 = arith.addf %1251, %1327 : vector<2x128xf32>
    %1330 = arith.mulf %993, %1289 : vector<2x128xf32>
    %1331 = arith.mulf %994, %1290 : vector<2x128xf32>
    %1332 = arith.subf %1330, %1331 : vector<2x128xf32>
    %1333 = arith.mulf %993, %1290 : vector<2x128xf32>
    %1334 = arith.mulf %994, %1289 : vector<2x128xf32>
    %1335 = arith.addf %1333, %1334 : vector<2x128xf32>
    %1336 = arith.mulf %985, %1303 : vector<2x128xf32>
    %1337 = arith.addf %1332, %1336 : vector<2x128xf32>
    %1338 = arith.mulf %986, %1304 : vector<2x128xf32>
    %1339 = arith.subf %1337, %1338 : vector<2x128xf32>
    %1340 = arith.mulf %985, %1304 : vector<2x128xf32>
    %1341 = arith.addf %1335, %1340 : vector<2x128xf32>
    %1342 = arith.mulf %986, %1303 : vector<2x128xf32>
    %1343 = arith.addf %1341, %1342 : vector<2x128xf32>
    %1344 = arith.addf %1339, %1343 : vector<2x128xf32>
    %cst_159 = arith.constant 3.80941725E-4 : f32
    %1345 = vector.broadcast %cst_159 : f32 to vector<2x128xf32>
    %1346 = arith.mulf %1345, %1344 : vector<2x128xf32>
    %cst_160 = arith.constant -0.00198527635 : f32
    %1347 = vector.broadcast %cst_160 : f32 to vector<2x128xf32>
    %1348 = arith.mulf %1347, %1343 : vector<2x128xf32>
    %1349 = arith.subf %1346, %1348 : vector<2x128xf32>
    %cst_161 = arith.constant -0.00274715968 : f32
    %1350 = vector.broadcast %cst_161 : f32 to vector<2x128xf32>
    %1351 = arith.mulf %1350, %1339 : vector<2x128xf32>
    %1352 = arith.addf %1346, %1351 : vector<2x128xf32>
    %1353 = arith.addf %1275, %1349 : vector<2x128xf32>
    %1354 = arith.addf %1276, %1352 : vector<2x128xf32>
    %1355 = arith.mulf %983, %991 : vector<2x128xf32>
    %1356 = arith.mulf %984, %992 : vector<2x128xf32>
    %1357 = arith.addf %1355, %1356 : vector<2x128xf32>
    %1358 = arith.mulf %984, %991 : vector<2x128xf32>
    %1359 = arith.mulf %983, %992 : vector<2x128xf32>
    %1360 = arith.subf %1358, %1359 : vector<2x128xf32>
    %1361 = arith.mulf %985, %993 : vector<2x128xf32>
    %1362 = arith.mulf %986, %994 : vector<2x128xf32>
    %1363 = arith.addf %1361, %1362 : vector<2x128xf32>
    %1364 = arith.mulf %986, %993 : vector<2x128xf32>
    %1365 = arith.mulf %985, %994 : vector<2x128xf32>
    %1366 = arith.subf %1364, %1365 : vector<2x128xf32>
    %1367 = arith.addf %1357, %1363 : vector<2x128xf32>
    %1368 = arith.addf %1360, %1366 : vector<2x128xf32>
    %1369 = arith.mulf %995, %991 : vector<2x128xf32>
    %1370 = arith.mulf %996, %992 : vector<2x128xf32>
    %1371 = arith.addf %1369, %1370 : vector<2x128xf32>
    %1372 = arith.mulf %996, %991 : vector<2x128xf32>
    %1373 = arith.mulf %995, %992 : vector<2x128xf32>
    %1374 = arith.subf %1372, %1373 : vector<2x128xf32>
    %1375 = arith.mulf %997, %993 : vector<2x128xf32>
    %1376 = arith.mulf %998, %994 : vector<2x128xf32>
    %1377 = arith.addf %1375, %1376 : vector<2x128xf32>
    %1378 = arith.mulf %998, %993 : vector<2x128xf32>
    %1379 = arith.mulf %997, %994 : vector<2x128xf32>
    %1380 = arith.subf %1378, %1379 : vector<2x128xf32>
    %1381 = arith.addf %1371, %1377 : vector<2x128xf32>
    %1382 = arith.addf %1374, %1380 : vector<2x128xf32>
    %1383 = arith.mulf %995, %1367 : vector<2x128xf32>
    %1384 = arith.mulf %996, %1368 : vector<2x128xf32>
    %1385 = arith.subf %1383, %1384 : vector<2x128xf32>
    %1386 = arith.mulf %995, %1368 : vector<2x128xf32>
    %1387 = arith.mulf %996, %1367 : vector<2x128xf32>
    %1388 = arith.addf %1386, %1387 : vector<2x128xf32>
    %1389 = arith.mulf %983, %1381 : vector<2x128xf32>
    %1390 = arith.addf %1385, %1389 : vector<2x128xf32>
    %1391 = arith.mulf %984, %1382 : vector<2x128xf32>
    %1392 = arith.subf %1390, %1391 : vector<2x128xf32>
    %1393 = arith.mulf %983, %1382 : vector<2x128xf32>
    %1394 = arith.addf %1388, %1393 : vector<2x128xf32>
    %1395 = arith.mulf %984, %1381 : vector<2x128xf32>
    %1396 = arith.addf %1394, %1395 : vector<2x128xf32>
    %1397 = arith.addf %1392, %1396 : vector<2x128xf32>
    %cst_162 = arith.constant 1.88891918E-5 : f32
    %1398 = vector.broadcast %cst_162 : f32 to vector<2x128xf32>
    %1399 = arith.mulf %1398, %1397 : vector<2x128xf32>
    %cst_163 = arith.constant 9.14835546E-4 : f32
    %1400 = vector.broadcast %cst_163 : f32 to vector<2x128xf32>
    %1401 = arith.mulf %1400, %1396 : vector<2x128xf32>
    %1402 = arith.subf %1399, %1401 : vector<2x128xf32>
    %cst_164 = arith.constant 8.77057144E-4 : f32
    %1403 = vector.broadcast %cst_164 : f32 to vector<2x128xf32>
    %1404 = arith.mulf %1403, %1392 : vector<2x128xf32>
    %1405 = arith.addf %1399, %1404 : vector<2x128xf32>
    %1406 = arith.addf %1328, %1402 : vector<2x128xf32>
    %1407 = arith.addf %1329, %1405 : vector<2x128xf32>
    %1408 = arith.mulf %997, %1367 : vector<2x128xf32>
    %1409 = arith.mulf %998, %1368 : vector<2x128xf32>
    %1410 = arith.subf %1408, %1409 : vector<2x128xf32>
    %1411 = arith.mulf %997, %1368 : vector<2x128xf32>
    %1412 = arith.mulf %998, %1367 : vector<2x128xf32>
    %1413 = arith.addf %1411, %1412 : vector<2x128xf32>
    %1414 = arith.mulf %985, %1381 : vector<2x128xf32>
    %1415 = arith.addf %1410, %1414 : vector<2x128xf32>
    %1416 = arith.mulf %986, %1382 : vector<2x128xf32>
    %1417 = arith.subf %1415, %1416 : vector<2x128xf32>
    %1418 = arith.mulf %985, %1382 : vector<2x128xf32>
    %1419 = arith.addf %1413, %1418 : vector<2x128xf32>
    %1420 = arith.mulf %986, %1381 : vector<2x128xf32>
    %1421 = arith.addf %1419, %1420 : vector<2x128xf32>
    %1422 = arith.addf %1417, %1421 : vector<2x128xf32>
    %cst_165 = arith.constant 1.88891918E-5 : f32
    %1423 = vector.broadcast %cst_165 : f32 to vector<2x128xf32>
    %1424 = arith.mulf %1423, %1422 : vector<2x128xf32>
    %cst_166 = arith.constant 9.14835546E-4 : f32
    %1425 = vector.broadcast %cst_166 : f32 to vector<2x128xf32>
    %1426 = arith.mulf %1425, %1421 : vector<2x128xf32>
    %1427 = arith.subf %1424, %1426 : vector<2x128xf32>
    %cst_167 = arith.constant 8.77057144E-4 : f32
    %1428 = vector.broadcast %cst_167 : f32 to vector<2x128xf32>
    %1429 = arith.mulf %1428, %1417 : vector<2x128xf32>
    %1430 = arith.addf %1424, %1429 : vector<2x128xf32>
    %1431 = arith.addf %1353, %1427 : vector<2x128xf32>
    %1432 = arith.addf %1354, %1430 : vector<2x128xf32>
    %1433 = arith.mulf %987, %987 : vector<2x128xf32>
    %1434 = arith.mulf %988, %988 : vector<2x128xf32>
    %1435 = arith.addf %1433, %1434 : vector<2x128xf32>
    %1436 = arith.mulf %988, %987 : vector<2x128xf32>
    %1437 = arith.mulf %987, %988 : vector<2x128xf32>
    %1438 = arith.subf %1436, %1437 : vector<2x128xf32>
    %1439 = arith.mulf %989, %989 : vector<2x128xf32>
    %1440 = arith.mulf %990, %990 : vector<2x128xf32>
    %1441 = arith.addf %1439, %1440 : vector<2x128xf32>
    %1442 = arith.mulf %990, %989 : vector<2x128xf32>
    %1443 = arith.mulf %989, %990 : vector<2x128xf32>
    %1444 = arith.subf %1442, %1443 : vector<2x128xf32>
    %1445 = arith.addf %1435, %1441 : vector<2x128xf32>
    %1446 = arith.addf %1438, %1444 : vector<2x128xf32>
    %1447 = arith.mulf %987, %1445 : vector<2x128xf32>
    %1448 = arith.mulf %988, %1446 : vector<2x128xf32>
    %1449 = arith.subf %1447, %1448 : vector<2x128xf32>
    %1450 = arith.mulf %987, %1446 : vector<2x128xf32>
    %1451 = arith.mulf %988, %1445 : vector<2x128xf32>
    %1452 = arith.addf %1450, %1451 : vector<2x128xf32>
    %1453 = arith.addf %1449, %1452 : vector<2x128xf32>
    %cst_168 = arith.constant 5.74556529E-4 : f32
    %1454 = vector.broadcast %cst_168 : f32 to vector<2x128xf32>
    %1455 = arith.mulf %1454, %1453 : vector<2x128xf32>
    %cst_169 = arith.constant 0.00203736406 : f32
    %1456 = vector.broadcast %cst_169 : f32 to vector<2x128xf32>
    %1457 = arith.mulf %1456, %1452 : vector<2x128xf32>
    %1458 = arith.subf %1455, %1457 : vector<2x128xf32>
    %cst_170 = arith.constant 8.88251117E-4 : f32
    %1459 = vector.broadcast %cst_170 : f32 to vector<2x128xf32>
    %1460 = arith.mulf %1459, %1449 : vector<2x128xf32>
    %1461 = arith.addf %1455, %1460 : vector<2x128xf32>
    %1462 = arith.addf %1406, %1458 : vector<2x128xf32>
    %1463 = arith.addf %1407, %1461 : vector<2x128xf32>
    %1464 = arith.mulf %989, %1445 : vector<2x128xf32>
    %1465 = arith.mulf %990, %1446 : vector<2x128xf32>
    %1466 = arith.subf %1464, %1465 : vector<2x128xf32>
    %1467 = arith.mulf %989, %1446 : vector<2x128xf32>
    %1468 = arith.mulf %990, %1445 : vector<2x128xf32>
    %1469 = arith.addf %1467, %1468 : vector<2x128xf32>
    %1470 = arith.addf %1466, %1469 : vector<2x128xf32>
    %cst_171 = arith.constant 5.74556529E-4 : f32
    %1471 = vector.broadcast %cst_171 : f32 to vector<2x128xf32>
    %1472 = arith.mulf %1471, %1470 : vector<2x128xf32>
    %cst_172 = arith.constant 0.00203736406 : f32
    %1473 = vector.broadcast %cst_172 : f32 to vector<2x128xf32>
    %1474 = arith.mulf %1473, %1469 : vector<2x128xf32>
    %1475 = arith.subf %1472, %1474 : vector<2x128xf32>
    %cst_173 = arith.constant 8.88251117E-4 : f32
    %1476 = vector.broadcast %cst_173 : f32 to vector<2x128xf32>
    %1477 = arith.mulf %1476, %1466 : vector<2x128xf32>
    %1478 = arith.addf %1472, %1477 : vector<2x128xf32>
    %1479 = arith.addf %1431, %1475 : vector<2x128xf32>
    %1480 = arith.addf %1432, %1478 : vector<2x128xf32>
    %1481 = arith.mulf %987, %991 : vector<2x128xf32>
    %1482 = arith.mulf %988, %992 : vector<2x128xf32>
    %1483 = arith.addf %1481, %1482 : vector<2x128xf32>
    %1484 = arith.mulf %988, %991 : vector<2x128xf32>
    %1485 = arith.mulf %987, %992 : vector<2x128xf32>
    %1486 = arith.subf %1484, %1485 : vector<2x128xf32>
    %1487 = arith.mulf %989, %993 : vector<2x128xf32>
    %1488 = arith.mulf %990, %994 : vector<2x128xf32>
    %1489 = arith.addf %1487, %1488 : vector<2x128xf32>
    %1490 = arith.mulf %990, %993 : vector<2x128xf32>
    %1491 = arith.mulf %989, %994 : vector<2x128xf32>
    %1492 = arith.subf %1490, %1491 : vector<2x128xf32>
    %1493 = arith.addf %1483, %1489 : vector<2x128xf32>
    %1494 = arith.addf %1486, %1492 : vector<2x128xf32>
    %1495 = arith.mulf %991, %991 : vector<2x128xf32>
    %1496 = arith.mulf %992, %992 : vector<2x128xf32>
    %1497 = arith.addf %1495, %1496 : vector<2x128xf32>
    %1498 = arith.mulf %992, %991 : vector<2x128xf32>
    %1499 = arith.mulf %991, %992 : vector<2x128xf32>
    %1500 = arith.subf %1498, %1499 : vector<2x128xf32>
    %1501 = arith.mulf %993, %993 : vector<2x128xf32>
    %1502 = arith.mulf %994, %994 : vector<2x128xf32>
    %1503 = arith.addf %1501, %1502 : vector<2x128xf32>
    %1504 = arith.mulf %994, %993 : vector<2x128xf32>
    %1505 = arith.mulf %993, %994 : vector<2x128xf32>
    %1506 = arith.subf %1504, %1505 : vector<2x128xf32>
    %1507 = arith.addf %1497, %1503 : vector<2x128xf32>
    %1508 = arith.addf %1500, %1506 : vector<2x128xf32>
    %1509 = arith.mulf %991, %1493 : vector<2x128xf32>
    %1510 = arith.mulf %992, %1494 : vector<2x128xf32>
    %1511 = arith.subf %1509, %1510 : vector<2x128xf32>
    %1512 = arith.mulf %991, %1494 : vector<2x128xf32>
    %1513 = arith.mulf %992, %1493 : vector<2x128xf32>
    %1514 = arith.addf %1512, %1513 : vector<2x128xf32>
    %1515 = arith.mulf %987, %1507 : vector<2x128xf32>
    %1516 = arith.addf %1511, %1515 : vector<2x128xf32>
    %1517 = arith.mulf %988, %1508 : vector<2x128xf32>
    %1518 = arith.subf %1516, %1517 : vector<2x128xf32>
    %1519 = arith.mulf %987, %1508 : vector<2x128xf32>
    %1520 = arith.addf %1514, %1519 : vector<2x128xf32>
    %1521 = arith.mulf %988, %1507 : vector<2x128xf32>
    %1522 = arith.addf %1520, %1521 : vector<2x128xf32>
    %1523 = arith.addf %1518, %1522 : vector<2x128xf32>
    %cst_174 = arith.constant -7.5327896E-4 : f32
    %1524 = vector.broadcast %cst_174 : f32 to vector<2x128xf32>
    %1525 = arith.mulf %1524, %1523 : vector<2x128xf32>
    %cst_175 = arith.constant -0.00134880771 : f32
    %1526 = vector.broadcast %cst_175 : f32 to vector<2x128xf32>
    %1527 = arith.mulf %1526, %1522 : vector<2x128xf32>
    %1528 = arith.subf %1525, %1527 : vector<2x128xf32>
    %cst_176 = arith.constant 1.57750212E-4 : f32
    %1529 = vector.broadcast %cst_176 : f32 to vector<2x128xf32>
    %1530 = arith.mulf %1529, %1518 : vector<2x128xf32>
    %1531 = arith.addf %1525, %1530 : vector<2x128xf32>
    %1532 = arith.addf %1462, %1528 : vector<2x128xf32>
    %1533 = arith.addf %1463, %1531 : vector<2x128xf32>
    %1534 = arith.mulf %993, %1493 : vector<2x128xf32>
    %1535 = arith.mulf %994, %1494 : vector<2x128xf32>
    %1536 = arith.subf %1534, %1535 : vector<2x128xf32>
    %1537 = arith.mulf %993, %1494 : vector<2x128xf32>
    %1538 = arith.mulf %994, %1493 : vector<2x128xf32>
    %1539 = arith.addf %1537, %1538 : vector<2x128xf32>
    %1540 = arith.mulf %989, %1507 : vector<2x128xf32>
    %1541 = arith.addf %1536, %1540 : vector<2x128xf32>
    %1542 = arith.mulf %990, %1508 : vector<2x128xf32>
    %1543 = arith.subf %1541, %1542 : vector<2x128xf32>
    %1544 = arith.mulf %989, %1508 : vector<2x128xf32>
    %1545 = arith.addf %1539, %1544 : vector<2x128xf32>
    %1546 = arith.mulf %990, %1507 : vector<2x128xf32>
    %1547 = arith.addf %1545, %1546 : vector<2x128xf32>
    %1548 = arith.addf %1543, %1547 : vector<2x128xf32>
    %cst_177 = arith.constant -7.5327896E-4 : f32
    %1549 = vector.broadcast %cst_177 : f32 to vector<2x128xf32>
    %1550 = arith.mulf %1549, %1548 : vector<2x128xf32>
    %cst_178 = arith.constant -0.00134880771 : f32
    %1551 = vector.broadcast %cst_178 : f32 to vector<2x128xf32>
    %1552 = arith.mulf %1551, %1547 : vector<2x128xf32>
    %1553 = arith.subf %1550, %1552 : vector<2x128xf32>
    %cst_179 = arith.constant 1.57750212E-4 : f32
    %1554 = vector.broadcast %cst_179 : f32 to vector<2x128xf32>
    %1555 = arith.mulf %1554, %1543 : vector<2x128xf32>
    %1556 = arith.addf %1550, %1555 : vector<2x128xf32>
    %1557 = arith.addf %1479, %1553 : vector<2x128xf32>
    %1558 = arith.addf %1480, %1556 : vector<2x128xf32>
    %1559 = arith.mulf %987, %995 : vector<2x128xf32>
    %1560 = arith.mulf %988, %996 : vector<2x128xf32>
    %1561 = arith.addf %1559, %1560 : vector<2x128xf32>
    %1562 = arith.mulf %988, %995 : vector<2x128xf32>
    %1563 = arith.mulf %987, %996 : vector<2x128xf32>
    %1564 = arith.subf %1562, %1563 : vector<2x128xf32>
    %1565 = arith.mulf %989, %997 : vector<2x128xf32>
    %1566 = arith.mulf %990, %998 : vector<2x128xf32>
    %1567 = arith.addf %1565, %1566 : vector<2x128xf32>
    %1568 = arith.mulf %990, %997 : vector<2x128xf32>
    %1569 = arith.mulf %989, %998 : vector<2x128xf32>
    %1570 = arith.subf %1568, %1569 : vector<2x128xf32>
    %1571 = arith.addf %1561, %1567 : vector<2x128xf32>
    %1572 = arith.addf %1564, %1570 : vector<2x128xf32>
    %1573 = arith.mulf %995, %995 : vector<2x128xf32>
    %1574 = arith.mulf %996, %996 : vector<2x128xf32>
    %1575 = arith.addf %1573, %1574 : vector<2x128xf32>
    %1576 = arith.mulf %996, %995 : vector<2x128xf32>
    %1577 = arith.mulf %995, %996 : vector<2x128xf32>
    %1578 = arith.subf %1576, %1577 : vector<2x128xf32>
    %1579 = arith.mulf %997, %997 : vector<2x128xf32>
    %1580 = arith.mulf %998, %998 : vector<2x128xf32>
    %1581 = arith.addf %1579, %1580 : vector<2x128xf32>
    %1582 = arith.mulf %998, %997 : vector<2x128xf32>
    %1583 = arith.mulf %997, %998 : vector<2x128xf32>
    %1584 = arith.subf %1582, %1583 : vector<2x128xf32>
    %1585 = arith.addf %1575, %1581 : vector<2x128xf32>
    %1586 = arith.addf %1578, %1584 : vector<2x128xf32>
    %1587 = arith.mulf %995, %1571 : vector<2x128xf32>
    %1588 = arith.mulf %996, %1572 : vector<2x128xf32>
    %1589 = arith.subf %1587, %1588 : vector<2x128xf32>
    %1590 = arith.mulf %995, %1572 : vector<2x128xf32>
    %1591 = arith.mulf %996, %1571 : vector<2x128xf32>
    %1592 = arith.addf %1590, %1591 : vector<2x128xf32>
    %1593 = arith.mulf %987, %1585 : vector<2x128xf32>
    %1594 = arith.addf %1589, %1593 : vector<2x128xf32>
    %1595 = arith.mulf %988, %1586 : vector<2x128xf32>
    %1596 = arith.subf %1594, %1595 : vector<2x128xf32>
    %1597 = arith.mulf %987, %1586 : vector<2x128xf32>
    %1598 = arith.addf %1592, %1597 : vector<2x128xf32>
    %1599 = arith.mulf %988, %1585 : vector<2x128xf32>
    %1600 = arith.addf %1598, %1599 : vector<2x128xf32>
    %1601 = arith.addf %1596, %1600 : vector<2x128xf32>
    %cst_180 = arith.constant 2.30166232E-4 : f32
    %1602 = vector.broadcast %cst_180 : f32 to vector<2x128xf32>
    %1603 = arith.mulf %1602, %1601 : vector<2x128xf32>
    %cst_181 = arith.constant 0.00143940106 : f32
    %1604 = vector.broadcast %cst_181 : f32 to vector<2x128xf32>
    %1605 = arith.mulf %1604, %1600 : vector<2x128xf32>
    %1606 = arith.subf %1603, %1605 : vector<2x128xf32>
    %cst_182 = arith.constant 9.79068572E-4 : f32
    %1607 = vector.broadcast %cst_182 : f32 to vector<2x128xf32>
    %1608 = arith.mulf %1607, %1596 : vector<2x128xf32>
    %1609 = arith.addf %1603, %1608 : vector<2x128xf32>
    %1610 = arith.addf %1532, %1606 : vector<2x128xf32>
    %1611 = arith.addf %1533, %1609 : vector<2x128xf32>
    %1612 = arith.mulf %997, %1571 : vector<2x128xf32>
    %1613 = arith.mulf %998, %1572 : vector<2x128xf32>
    %1614 = arith.subf %1612, %1613 : vector<2x128xf32>
    %1615 = arith.mulf %997, %1572 : vector<2x128xf32>
    %1616 = arith.mulf %998, %1571 : vector<2x128xf32>
    %1617 = arith.addf %1615, %1616 : vector<2x128xf32>
    %1618 = arith.mulf %989, %1585 : vector<2x128xf32>
    %1619 = arith.addf %1614, %1618 : vector<2x128xf32>
    %1620 = arith.mulf %990, %1586 : vector<2x128xf32>
    %1621 = arith.subf %1619, %1620 : vector<2x128xf32>
    %1622 = arith.mulf %989, %1586 : vector<2x128xf32>
    %1623 = arith.addf %1617, %1622 : vector<2x128xf32>
    %1624 = arith.mulf %990, %1585 : vector<2x128xf32>
    %1625 = arith.addf %1623, %1624 : vector<2x128xf32>
    %1626 = arith.addf %1621, %1625 : vector<2x128xf32>
    %cst_183 = arith.constant 2.30166232E-4 : f32
    %1627 = vector.broadcast %cst_183 : f32 to vector<2x128xf32>
    %1628 = arith.mulf %1627, %1626 : vector<2x128xf32>
    %cst_184 = arith.constant 0.00143940106 : f32
    %1629 = vector.broadcast %cst_184 : f32 to vector<2x128xf32>
    %1630 = arith.mulf %1629, %1625 : vector<2x128xf32>
    %1631 = arith.subf %1628, %1630 : vector<2x128xf32>
    %cst_185 = arith.constant 9.79068572E-4 : f32
    %1632 = vector.broadcast %cst_185 : f32 to vector<2x128xf32>
    %1633 = arith.mulf %1632, %1621 : vector<2x128xf32>
    %1634 = arith.addf %1628, %1633 : vector<2x128xf32>
    %1635 = arith.addf %1557, %1631 : vector<2x128xf32>
    %1636 = arith.addf %1558, %1634 : vector<2x128xf32>
    %1637 = arith.mulf %991, %995 : vector<2x128xf32>
    %1638 = arith.mulf %992, %996 : vector<2x128xf32>
    %1639 = arith.addf %1637, %1638 : vector<2x128xf32>
    %1640 = arith.mulf %992, %995 : vector<2x128xf32>
    %1641 = arith.mulf %991, %996 : vector<2x128xf32>
    %1642 = arith.subf %1640, %1641 : vector<2x128xf32>
    %1643 = arith.mulf %993, %997 : vector<2x128xf32>
    %1644 = arith.mulf %994, %998 : vector<2x128xf32>
    %1645 = arith.addf %1643, %1644 : vector<2x128xf32>
    %1646 = arith.mulf %994, %997 : vector<2x128xf32>
    %1647 = arith.mulf %993, %998 : vector<2x128xf32>
    %1648 = arith.subf %1646, %1647 : vector<2x128xf32>
    %1649 = arith.addf %1639, %1645 : vector<2x128xf32>
    %1650 = arith.addf %1642, %1648 : vector<2x128xf32>
    %1651 = arith.mulf %991, %1649 : vector<2x128xf32>
    %1652 = arith.mulf %992, %1650 : vector<2x128xf32>
    %1653 = arith.subf %1651, %1652 : vector<2x128xf32>
    %1654 = arith.mulf %991, %1650 : vector<2x128xf32>
    %1655 = arith.mulf %992, %1649 : vector<2x128xf32>
    %1656 = arith.addf %1654, %1655 : vector<2x128xf32>
    %1657 = arith.addf %1653, %1656 : vector<2x128xf32>
    %cst_186 = arith.constant -0.0014893437 : f32
    %1658 = vector.broadcast %cst_186 : f32 to vector<2x128xf32>
    %1659 = arith.mulf %1658, %1657 : vector<2x128xf32>
    %cst_187 = arith.constant -1.35899754E-5 : f32
    %1660 = vector.broadcast %cst_187 : f32 to vector<2x128xf32>
    %1661 = arith.mulf %1660, %1656 : vector<2x128xf32>
    %1662 = arith.subf %1659, %1661 : vector<2x128xf32>
    %cst_188 = arith.constant 0.00296509732 : f32
    %1663 = vector.broadcast %cst_188 : f32 to vector<2x128xf32>
    %1664 = arith.mulf %1663, %1653 : vector<2x128xf32>
    %1665 = arith.addf %1659, %1664 : vector<2x128xf32>
    %1666 = arith.addf %1610, %1662 : vector<2x128xf32>
    %1667 = arith.addf %1611, %1665 : vector<2x128xf32>
    %1668 = arith.mulf %993, %1649 : vector<2x128xf32>
    %1669 = arith.mulf %994, %1650 : vector<2x128xf32>
    %1670 = arith.subf %1668, %1669 : vector<2x128xf32>
    %1671 = arith.mulf %993, %1650 : vector<2x128xf32>
    %1672 = arith.mulf %994, %1649 : vector<2x128xf32>
    %1673 = arith.addf %1671, %1672 : vector<2x128xf32>
    %1674 = arith.addf %1670, %1673 : vector<2x128xf32>
    %cst_189 = arith.constant -0.0014893437 : f32
    %1675 = vector.broadcast %cst_189 : f32 to vector<2x128xf32>
    %1676 = arith.mulf %1675, %1674 : vector<2x128xf32>
    %cst_190 = arith.constant -1.35899754E-5 : f32
    %1677 = vector.broadcast %cst_190 : f32 to vector<2x128xf32>
    %1678 = arith.mulf %1677, %1673 : vector<2x128xf32>
    %1679 = arith.subf %1676, %1678 : vector<2x128xf32>
    %cst_191 = arith.constant 0.00296509732 : f32
    %1680 = vector.broadcast %cst_191 : f32 to vector<2x128xf32>
    %1681 = arith.mulf %1680, %1670 : vector<2x128xf32>
    %1682 = arith.addf %1676, %1681 : vector<2x128xf32>
    %1683 = arith.addf %1635, %1679 : vector<2x128xf32>
    %1684 = arith.addf %1636, %1682 : vector<2x128xf32>
    %1685 = vector.broadcast %0 : vector<2x1xf32> to vector<2x128xf32>
    %1686 = arith.mulf %1685, %1666 : vector<2x128xf32>
    %1687 = arith.addf %987, %1686 : vector<2x128xf32>
    %1688 = vector.broadcast %0 : vector<2x1xf32> to vector<2x128xf32>
    %1689 = arith.mulf %1688, %1667 : vector<2x128xf32>
    %1690 = arith.addf %988, %1689 : vector<2x128xf32>
    %1691 = vector.broadcast %0 : vector<2x1xf32> to vector<2x128xf32>
    %1692 = arith.mulf %1691, %1683 : vector<2x128xf32>
    %1693 = arith.addf %989, %1692 : vector<2x128xf32>
    %1694 = vector.broadcast %0 : vector<2x1xf32> to vector<2x128xf32>
    %1695 = arith.mulf %1694, %1684 : vector<2x128xf32>
    %1696 = arith.addf %990, %1695 : vector<2x128xf32>
    %c0_192 = arith.constant 0 : index
    %c0_193 = arith.constant 0 : index
    %1697 = vector.load %arg6[%c0_192, %c0_193] : memref<2x128xf32, #tpu.memory_space<vmem>>, vector<2x128xf32>
    tpu.vector_store %arg6[%c0_192, %c0_193], %1687 {strides = array<i32>} : memref<2x128xf32, #tpu.memory_space<vmem>>, vector<2x128xf32>,
    %c0_194 = arith.constant 0 : index
    %c0_195 = arith.constant 0 : index
    %1698 = vector.load %arg7[%c0_194, %c0_195] : memref<2x128xf32, #tpu.memory_space<vmem>>, vector<2x128xf32>
    tpu.vector_store %arg7[%c0_194, %c0_195], %1690 {strides = array<i32>} : memref<2x128xf32, #tpu.memory_space<vmem>>, vector<2x128xf32>,
    %c0_196 = arith.constant 0 : index
    %c0_197 = arith.constant 0 : index
    %1699 = vector.load %arg8[%c0_196, %c0_197] : memref<2x128xf32, #tpu.memory_space<vmem>>, vector<2x128xf32>
    tpu.vector_store %arg8[%c0_196, %c0_197], %1693 {strides = array<i32>} : memref<2x128xf32, #tpu.memory_space<vmem>>, vector<2x128xf32>,
    %c0_198 = arith.constant 0 : index
    %c0_199 = arith.constant 0 : index
    %1700 = vector.load %arg9[%c0_198, %c0_199] : memref<2x128xf32, #tpu.memory_space<vmem>>, vector<2x128xf32>
    tpu.vector_store %arg9[%c0_198, %c0_199], %1696 {strides = array<i32>} : memref<2x128xf32, #tpu.memory_space<vmem>>, vector<2x128xf32>,
    return
  }
  func.func @transform_0(%arg0: i32) -> (i32, i32, i32) {
    %c0_i32 = arith.constant 0 : i32
    %c0_i32_0 = arith.constant 0 : i32
    %c0_i32_1 = arith.constant 0 : i32
    return %arg0, %c0_i32, %c0_i32_0 : i32, i32, i32
  }
  func.func @transform_1(%arg0: i32) -> (i32, i32, i32) {
    %c0_i32 = arith.constant 0 : i32
    %c0_i32_0 = arith.constant 0 : i32
    %c0_i32_1 = arith.constant 0 : i32
    return %arg0, %c0_i32, %c0_i32_0 : i32, i32, i32
  }
  func.func @transform_2(%arg0: i32) -> (i32, i32, i32) {
    %c0_i32 = arith.constant 0 : i32
    %c0_i32_0 = arith.constant 0 : i32
    %c0_i32_1 = arith.constant 0 : i32
    return %arg0, %c0_i32, %c0_i32_0 : i32, i32, i32
  }
  func.func @transform_3(%arg0: i32) -> (i32, i32, i32) {
    %c0_i32 = arith.constant 0 : i32
    %c0_i32_0 = arith.constant 0 : i32
    %c0_i32_1 = arith.constant 0 : i32
    return %arg0, %c0_i32, %c0_i32_0 : i32, i32, i32
  }
  func.func @transform_4(%arg0: i32) -> (i32, i32) {
    %c0_i32 = arith.constant 0 : i32
    %c0_i32_0 = arith.constant 0 : i32
    %c0_i32_1 = arith.constant 0 : i32
    return %c0_i32, %c0_i32_0 : i32, i32
  }
  func.func @transform_5(%arg0: i32) -> (i32, i32) {
    %c0_i32 = arith.constant 0 : i32
    %c0_i32_0 = arith.constant 0 : i32
    return %c0_i32, %arg0 : i32, i32
  }
  func.func @transform_6(%arg0: i32) -> (i32, i32) {
    %c0_i32 = arith.constant 0 : i32
    %c0_i32_0 = arith.constant 0 : i32
    return %c0_i32, %arg0 : i32, i32
  }
  func.func @transform_7(%arg0: i32) -> (i32, i32) {
    %c0_i32 = arith.constant 0 : i32
    %c0_i32_0 = arith.constant 0 : i32
    return %c0_i32, %arg0 : i32, i32
  }
  func.func @transform_8(%arg0: i32) -> (i32, i32) {
    %c0_i32 = arith.constant 0 : i32
    %c0_i32_0 = arith.constant 0 : i32
    return %c0_i32, %arg0 : i32, i32
  }
}

</mosaic_0001>

<llo_original>
// kernel: tpu_custom_call.1
$region0: #{tpu_custom_call.1}
  #allocation0 [shape = 'u32[]', space=smem, size = 0x4, offset = 0x4, fixed_abs, tag = 'smem constant byte address 0x4 - core index']
  #allocation1 [shape = 'u32[144,128]{1,0:T(1,128)}', space=vmem, size = 0x12000, scoped, tag = 'internal scratch']
  %s0 = inlined_call_operand.hbm [shape: f32[3,2,144], index: 0, kind: input, shape index: {}]
  %s1 = inlined_call_operand.hbm [shape: f32[3,2,144], index: 1, kind: input, shape index: {}]
  %s2 = inlined_call_operand.hbm [shape: f32[3,2,144], index: 2, kind: input, shape index: {}]
  %s3 = inlined_call_operand.hbm [shape: f32[3,2,144], index: 3, kind: input, shape index: {}]
  %s4 = inlined_call_operand.vmem [shape: f32[2,1], index: 4, kind: input, shape index: {}]
  %s5 = inlined_call_operand.hbm [shape: f32[2,384], index: 5, kind: output, shape index: {0}]
  %s6 = inlined_call_operand.hbm [shape: f32[2,384], index: 6, kind: output, shape index: {1}]
  %s7 = inlined_call_operand.hbm [shape: f32[2,384], index: 7, kind: output, shape index: {2}]
  %s8 = inlined_call_operand.hbm [shape: f32[2,384], index: 8, kind: output, shape index: {3}]
  %9 = xla_tuple %s5, %s6, %s7, %s8
  %s10 = sld [smem:[#allocation0]]
  $region93: #{tpu_custom_call.1} parent=0
    _
  %s12 = ssub.s32 1, %s10
  %s13 = scalar_select 0, %s12, %s10
  $region1: #{tpu_custom_call.1} parent=0
    #allocation2 [shape = 'u8[4096]{0}', space=vmem, size = 0x1000, scoped, tag = 'input window, operand 0']
    #allocation3 [shape = 's32[2]{0}', space=sflag, size = 0x8, scoped, tag = 'scoped memory for tpu_custom_call.1']
    #allocation4 [shape = 's32[2]{0}', space=sflag, size = 0x8, scoped, tag = 'scoped memory for tpu_custom_call.1']
    #allocation5 [shape = 'u8[4096]{0}', space=vmem, size = 0x1000, scoped, tag = 'input window, operand 1']
    #allocation6 [shape = 's32[2]{0}', space=sflag, size = 0x8, scoped, tag = 'scoped memory for tpu_custom_call.1']
    #allocation7 [shape = 'u8[4096]{0}', space=vmem, size = 0x1000, scoped, tag = 'input window, operand 2']
    #allocation8 [shape = 'u8[4096]{0}', space=vmem, size = 0x1000, scoped, tag = 'input window, operand 3']
    #allocation9 [shape = 's32[2]{0}', space=sflag, size = 0x8, scoped, tag = 'scoped memory for tpu_custom_call.1']
    #allocation10 [shape = 'u8[2048]{0}', space=vmem, size = 0x800, scoped, tag = 'output window, operand 0']
    #allocation11 [shape = 'u8[2048]{0}', space=vmem, size = 0x800, scoped, tag = 'output window, operand 1']
    #allocation12 [shape = 's32[2]{0}', space=sflag, size = 0x8, scoped, tag = 'scoped memory for tpu_custom_call.1']
    #allocation13 [shape = 'u8[2048]{0}', space=vmem, size = 0x800, scoped, tag = 'output window, operand 2']
    #allocation14 [shape = 'u8[2048]{0}', space=vmem, size = 0x800, scoped, tag = 'output window, operand 3']
    #allocation15 [shape = 's32[2]{0}', space=sflag, size = 0x8, scoped, tag = 'scoped memory for tpu_custom_call.1']
    %14 = vsyncpa [#allocation3], 0
    %s15 = scalar_lea.sflag [#allocation3], 1
    %16 = vsyncpa %s15, 0
    %17 = vsyncpa [#allocation6], 0
    %s18 = scalar_lea.sflag [#allocation6], 1
    %19 = vsyncpa %s18, 0
    %20 = vsyncpa [#allocation9], 0
    %s21 = scalar_lea.sflag [#allocation9], 1
    %22 = vsyncpa %s21, 0
    %23 = vsyncpa [#allocation4], 0
    %s24 = scalar_lea.sflag [#allocation4], 1
    %25 = vsyncpa %s24, 0
    %26 = vsyncpa [#allocation12], 0
    %s27 = scalar_lea.sflag [#allocation12], 1
    %28 = vsyncpa %s27, 0
    %29 = vsyncpa [#allocation15], 0
    %s30 = scalar_lea.sflag [#allocation15], 1
    %31 = vsyncpa %s30, 0
    loop: start=0, step=1, limit=5
    $region2: #{tpu_custom_call.1} parent=1 // loop_pre_header
      _
    $region3: #{tpu_custom_call.1} parent=1 // loop_header
      %s33 = sphi 0, %s37
      %p34 = scmp.ge.s32.totalorder %s33, 5
      %s43 = sphi 0, %s45
      %s46 = sphi 0, %s43
      %s47 = sphi 0, %s46
      %s63 = sphi 0, %s47
      %s69 = sphi 0, %s71
      %s72 = sphi 0, %s69
      %s73 = sphi 0, %s72
      %s89 = sphi 0, %s73
      %s95 = sphi 0, %s97
      %s98 = sphi 0, %s95
      %s99 = sphi 0, %s98
      %s115 = sphi 0, %s99
      %s121 = sphi 0, %s123
      %s124 = sphi 0, %s121
      %s125 = sphi 0, %s124
      %s141 = sphi 0, %s125
      %s145 = sphi 0, %s145
      %s147 = sphi 0, %s145
      %s148 = sphi 0, %s147
      %s162 = sphi 0, %s148
      %s168 = sphi 0, %s170
      %s171 = sphi 0, %s168
      %s172 = sphi 0, %s171
      %s188 = sphi 0, %s172
      %s194 = sphi 0, %s196
      %s197 = sphi 0, %s194
      %s198 = sphi 0, %s197
      %s214 = sphi 0, %s198
      %s220 = sphi 0, %s222
      %s223 = sphi 0, %s220
      %s224 = sphi 0, %s223
      %s240 = sphi 0, %s224
      %s246 = sphi 0, %s248
      %s249 = sphi 0, %s246
      %s250 = sphi 0, %s249
      %s266 = sphi 0, %s250
    $region4: #{tpu_custom_call.1} parent=1 // loop_header_branch
      %36 = sbr.rel (%p34) target = $region8
    $region5: #{tpu_custom_call.1} parent=1 // loop_body
      %s38 = ssub.s32 %s33, 1
      %s39 = ssub.s32 %s33, 2
      %s40 = sadd.s32 %s33, 1
      %s41 = ssub.s32 %s33, %s40
      %p42 = scmp.eq.s32.totalorder %s41, 0
      %s44 = sadd.s32 %s43, 1
      %s45 = scalar_select %p42, %s43, %s44
      %p48 = pneg %p42
      %p49 = scmp.eq.s32.totalorder %s33, 2
      %p50 = por %p48, %p49
      %p51 = scmp.ne.s32.totalorder %s43, %s46
      %p52 = scmp.eq.s32.totalorder %s33, 0
      %p53 = por %p51, %p52
      %p54 = scmp.ne.s32.totalorder %s43, %s46
      %p55 = scmp.eq.s32.totalorder %s38, 2
      %p56 = por %p54, %p55
      %p57 = scmp.ne.s32.totalorder %s46, %s47
      %p58 = scmp.eq.s32.totalorder %s38, 0
      %p59 = por %p57, %p58
      %p60 = scmp.ne.s32.totalorder %s46, %s47
      %p61 = scmp.eq.s32.totalorder %s39, 2
      %p62 = por %p60, %p61
      %p64 = scmp.ne.s32.totalorder %s47, %s63
      %p65 = scmp.eq.s32.totalorder %s39, 0
      %p66 = por %p64, %p65
      %s67 = ssub.s32 %s33, %s40
      %p68 = scmp.eq.s32.totalorder %s67, 0
      %s70 = sadd.s32 %s69, 1
      %s71 = scalar_select %p68, %s69, %s70
      %p74 = pneg %p68
      %p75 = scmp.eq.s32.totalorder %s33, 2
      %p76 = por %p74, %p75
      %p77 = scmp.ne.s32.totalorder %s69, %s72
      %p78 = scmp.eq.s32.totalorder %s33, 0
      %p79 = por %p77, %p78
      %p80 = scmp.ne.s32.totalorder %s69, %s72
      %p81 = scmp.eq.s32.totalorder %s38, 2
      %p82 = por %p80, %p81
      %p83 = scmp.ne.s32.totalorder %s72, %s73
      %p84 = scmp.eq.s32.totalorder %s38, 0
      %p85 = por %p83, %p84
      %p86 = scmp.ne.s32.totalorder %s72, %s73
      %p87 = scmp.eq.s32.totalorder %s39, 2
      %p88 = por %p86, %p87
      %p90 = scmp.ne.s32.totalorder %s73, %s89
      %p91 = scmp.eq.s32.totalorder %s39, 0
      %p92 = por %p90, %p91
      %s93 = ssub.s32 %s33, %s40
      %p94 = scmp.eq.s32.totalorder %s93, 0
      %s96 = sadd.s32 %s95, 1
      %s97 = scalar_select %p94, %s95, %s96
      %p100 = pneg %p94
      %p101 = scmp.eq.s32.totalorder %s33, 2
      %p102 = por %p100, %p101
      %p103 = scmp.ne.s32.totalorder %s95, %s98
      %p104 = scmp.eq.s32.totalorder %s33, 0
      %p105 = por %p103, %p104
      %p106 = scmp.ne.s32.totalorder %s95, %s98
      %p107 = scmp.eq.s32.totalorder %s38, 2
      %p108 = por %p106, %p107
      %p109 = scmp.ne.s32.totalorder %s98, %s99
      %p110 = scmp.eq.s32.totalorder %s38, 0
      %p111 = por %p109, %p110
      %p112 = scmp.ne.s32.totalorder %s98, %s99
      %p113 = scmp.eq.s32.totalorder %s39, 2
      %p114 = por %p112, %p113
      %p116 = scmp.ne.s32.totalorder %s99, %s115
      %p117 = scmp.eq.s32.totalorder %s39, 0
      %p118 = por %p116, %p117
      %s119 = ssub.s32 %s33, %s40
      %p120 = scmp.eq.s32.totalorder %s119, 0
      %s122 = sadd.s32 %s121, 1
      %s123 = scalar_select %p120, %s121, %s122
      %p126 = pneg %p120
      %p127 = scmp.eq.s32.totalorder %s33, 2
      %p128 = por %p126, %p127
      %p129 = scmp.ne.s32.totalorder %s121, %s124
      %p130 = scmp.eq.s32.totalorder %s33, 0
      %p131 = por %p129, %p130
      %p132 = scmp.ne.s32.totalorder %s121, %s124
      %p133 = scmp.eq.s32.totalorder %s38, 2
      %p134 = por %p132, %p133
      %p135 = scmp.ne.s32.totalorder %s124, %s125
      %p136 = scmp.eq.s32.totalorder %s38, 0
      %p137 = por %p135, %p136
      %p138 = scmp.ne.s32.totalorder %s124, %s125
      %p139 = scmp.eq.s32.totalorder %s39, 2
      %p140 = por %p138, %p139
      %p142 = scmp.ne.s32.totalorder %s125, %s141
      %p143 = scmp.eq.s32.totalorder %s39, 0
      %p144 = por %p142, %p143
      %s146 = sadd.s32 %s145, 1
      %p149 = scmp.eq.s32.totalorder %s33, 2
      %p150 = scmp.ne.s32.totalorder %s145, %s147
      %p151 = scmp.eq.s32.totalorder %s33, 0
      %p152 = por %p150, %p151
      %p153 = scmp.ne.s32.totalorder %s145, %s147
      %p154 = scmp.eq.s32.totalorder %s38, 2
      %p155 = por %p153, %p154
      %p156 = scmp.ne.s32.totalorder %s147, %s148
      %p157 = scmp.eq.s32.totalorder %s38, 0
      %p158 = por %p156, %p157
      %p159 = scmp.ne.s32.totalorder %s147, %s148
      %p160 = scmp.eq.s32.totalorder %s39, 2
      %p161 = por %p159, %p160
      %p163 = scmp.ne.s32.totalorder %s148, %s162
      %p164 = scmp.eq.s32.totalorder %s39, 0
      %p165 = por %p163, %p164
      %s166 = ssub.s32 %s33, %s40
      %p167 = scmp.eq.s32.totalorder %s166, 0
      %s169 = sadd.s32 %s168, 1
      %s170 = scalar_select %p167, %s168, %s169
      %p173 = pneg %p167
      %p174 = scmp.eq.s32.totalorder %s33, 2
      %p175 = por %p173, %p174
      %p176 = scmp.ne.s32.totalorder %s168, %s171
      %p177 = scmp.eq.s32.totalorder %s33, 0
      %p178 = por %p176, %p177
      %p179 = scmp.ne.s32.totalorder %s168, %s171
      %p180 = scmp.eq.s32.totalorder %s38, 2
      %p181 = por %p179, %p180
      %p182 = scmp.ne.s32.totalorder %s171, %s172
      %p183 = scmp.eq.s32.totalorder %s38, 0
      %p184 = por %p182, %p183
      %p185 = scmp.ne.s32.totalorder %s171, %s172
      %p186 = scmp.eq.s32.totalorder %s39, 2
      %p187 = por %p185, %p186
      %p189 = scmp.ne.s32.totalorder %s172, %s188
      %p190 = scmp.eq.s32.totalorder %s39, 0
      %p191 = por %p189, %p190
      %s192 = ssub.s32 %s33, %s40
      %p193 = scmp.eq.s32.totalorder %s192, 0
      %s195 = sadd.s32 %s194, 1
      %s196 = scalar_select %p193, %s194, %s195
      %p199 = pneg %p193
      %p200 = scmp.eq.s32.totalorder %s33, 2
      %p201 = por %p199, %p200
      %p202 = scmp.ne.s32.totalorder %s194, %s197
      %p203 = scmp.eq.s32.totalorder %s33, 0
      %p204 = por %p202, %p203
      %p205 = scmp.ne.s32.totalorder %s194, %s197
      %p206 = scmp.eq.s32.totalorder %s38, 2
      %p207 = por %p205, %p206
      %p208 = scmp.ne.s32.totalorder %s197, %s198
      %p209 = scmp.eq.s32.totalorder %s38, 0
      %p210 = por %p208, %p209
      %p211 = scmp.ne.s32.totalorder %s197, %s198
      %p212 = scmp.eq.s32.totalorder %s39, 2
      %p213 = por %p211, %p212
      %p215 = scmp.ne.s32.totalorder %s198, %s214
      %p216 = scmp.eq.s32.totalorder %s39, 0
      %p217 = por %p215, %p216
      %s218 = ssub.s32 %s33, %s40
      %p219 = scmp.eq.s32.totalorder %s218, 0
      %s221 = sadd.s32 %s220, 1
      %s222 = scalar_select %p219, %s220, %s221
      %p225 = pneg %p219
      %p226 = scmp.eq.s32.totalorder %s33, 2
      %p227 = por %p225, %p226
      %p228 = scmp.ne.s32.totalorder %s220, %s223
      %p229 = scmp.eq.s32.totalorder %s33, 0
      %p230 = por %p228, %p229
      %p231 = scmp.ne.s32.totalorder %s220, %s223
      %p232 = scmp.eq.s32.totalorder %s38, 2
      %p233 = por %p231, %p232
      %p234 = scmp.ne.s32.totalorder %s223, %s224
      %p235 = scmp.eq.s32.totalorder %s38, 0
      %p236 = por %p234, %p235
      %p237 = scmp.ne.s32.totalorder %s223, %s224
      %p238 = scmp.eq.s32.totalorder %s39, 2
      %p239 = por %p237, %p238
      %p241 = scmp.ne.s32.totalorder %s224, %s240
      %p242 = scmp.eq.s32.totalorder %s39, 0
      %p243 = por %p241, %p242
      %s244 = ssub.s32 %s33, %s40
      %p245 = scmp.eq.s32.totalorder %s244, 0
      %s247 = sadd.s32 %s246, 1
      %s248 = scalar_select %p245, %s246, %s247
      %p251 = pneg %p245
      %p252 = scmp.eq.s32.totalorder %s33, 2
      %p253 = por %p251, %p252
      %p254 = scmp.ne.s32.totalorder %s246, %s249
      %p255 = scmp.eq.s32.totalorder %s33, 0
      %p256 = por %p254, %p255
      %p257 = scmp.ne.s32.totalorder %s246, %s249
      %p258 = scmp.eq.s32.totalorder %s38, 2
      %p259 = por %p257, %p258
      %p260 = scmp.ne.s32.totalorder %s249, %s250
      %p261 = scmp.eq.s32.totalorder %s38, 0
      %p262 = por %p260, %p261
      %p263 = scmp.ne.s32.totalorder %s249, %s250
      %p264 = scmp.eq.s32.totalorder %s39, 2
      %p265 = por %p263, %p264
      %p267 = scmp.ne.s32.totalorder %s250, %s266
      %p268 = scmp.eq.s32.totalorder %s39, 0
      %p269 = por %p267, %p268
      %p270 = scmp.le.s32.totalorder 1, %s33
      %p271 = scmp.lt.s32.totalorder %s33, 4
      %p272 = pnand %p270, %p271
      %p273 = pneg %p272
      // Predicated region
      $region9: #{tpu_custom_call.1} parent=5 // pred_check
        _
      $region10: #{tpu_custom_call.1} parent=5 // pred_check_branch
        %275 = sbr.rel (%p272) target = $region12
      $region11: #{tpu_custom_call.1} parent=5 // pred_region
        %s276 = ssub.s32 %s33, 1
        // Predicated region
        $region13: #{tpu_custom_call.1} parent=11 // pred_check
          %p277 = pneg %p158
        $region14: #{tpu_custom_call.1} parent=11 // pred_check_branch
          %279 = sbr.rel (%p277) target = $region16
        $region15: #{tpu_custom_call.1} parent=11 // pred_region
          _
        $region16: #{tpu_custom_call.1} parent=11 // pred_fallthru
          _
      $region12: #{tpu_custom_call.1} parent=5 // pred_fallthru
        _
      %p280 = scmp.lt.s32.totalorder %s33, 3
      // Predicated region
      $region17: #{tpu_custom_call.1} parent=5 // pred_check
        %p281 = pneg %p280
      $region18: #{tpu_custom_call.1} parent=5 // pred_check_branch
        %283 = sbr.rel (%p281) target = $region20
      $region19: #{tpu_custom_call.1} parent=5 // pred_region
        // Predicated region
        $region21: #{tpu_custom_call.1} parent=19 // pred_check
          %p284 = pneg %p53
        $region22: #{tpu_custom_call.1} parent=19 // pred_check_branch
          %286 = sbr.rel (%p284) target = $region24
        $region23: #{tpu_custom_call.1} parent=19 // pred_region
          %s287 = sand.u32 %s43, 1
          %s288 = scalar_lea.sflag [#allocation3], %s287
          %s289 = sand.u32 %s43, 1
          %s290 = smul.addr %s289, 4
          %s291 = scalar_lea.vmem [#allocation2], %s290
          %s293 = ssub.s32 64, 64
          %294 = vsyncadd %s288, %s293
          %s295 = smul.addr %s33, 2
          %s296 = smul.addr %s295, 32
          %s297 = scalar_lea.hbm %s0, %s296
          %s299 = sshll.u32 %s291, 4
          %s300 = int_to_ptr.vmem [resolvable:$true] %s299
          %302 = dma.hbm_to_vmem [thread:$0]  %s297, 64, %s300, %s288
        $region24: #{tpu_custom_call.1} parent=19 // pred_fallthru
          _
        // Predicated region
        $region25: #{tpu_custom_call.1} parent=19 // pred_check
          %p303 = pneg %p79
        $region26: #{tpu_custom_call.1} parent=19 // pred_check_branch
          %305 = sbr.rel (%p303) target = $region28
        $region27: #{tpu_custom_call.1} parent=19 // pred_region
          %s306 = sand.u32 %s33, 1
          %s307 = scalar_lea.sflag [#allocation6], %s306
          %s308 = sand.u32 %s69, 1
          %s309 = smul.addr %s308, 4
          %s310 = scalar_lea.vmem [#allocation5], %s309
          %s312 = ssub.s32 64, 64
          %313 = vsyncadd %s307, %s312
          %s314 = smul.addr %s33, 2
          %s315 = smul.addr %s314, 32
          %s316 = scalar_lea.hbm %s1, %s315
          %s318 = sshll.u32 %s310, 4
          %s319 = int_to_ptr.vmem [resolvable:$true] %s318
          %321 = dma.hbm_to_vmem [thread:$0]  %s316, 64, %s319, %s307
        $region28: #{tpu_custom_call.1} parent=19 // pred_fallthru
          _
        // Predicated region
        $region29: #{tpu_custom_call.1} parent=19 // pred_check
          %p322 = pneg %p105
        $region30: #{tpu_custom_call.1} parent=19 // pred_check_branch
          %324 = sbr.rel (%p322) target = $region32
        $region31: #{tpu_custom_call.1} parent=19 // pred_region
          %s325 = sand.u32 %s33, 1
          %s326 = scalar_lea.sflag [#allocation6], %s325
          %s327 = sand.u32 %s95, 1
          %s328 = smul.addr %s327, 4
          %s329 = scalar_lea.vmem [#allocation7], %s328
          %s331 = ssub.s32 64, 64
          %332 = vsyncadd %s326, %s331
          %s333 = smul.addr %s33, 2
          %s334 = smul.addr %s333, 32
          %s335 = scalar_lea.hbm %s2, %s334
          %s337 = sshll.u32 %s329, 4
          %s338 = int_to_ptr.vmem [resolvable:$true] %s337
          %340 = dma.hbm_to_vmem [thread:$0]  %s335, 64, %s338, %s326
        $region32: #{tpu_custom_call.1} parent=19 // pred_fallthru
          _
        // Predicated region
        $region33: #{tpu_custom_call.1} parent=19 // pred_check
          %p341 = pneg %p131
        $region34: #{tpu_custom_call.1} parent=19 // pred_check_branch
          %343 = sbr.rel (%p341) target = $region36
        $region35: #{tpu_custom_call.1} parent=19 // pred_region
          %s344 = sand.u32 %s121, 1
          %s345 = scalar_lea.sflag [#allocation9], %s344
          %s346 = sand.u32 %s121, 1
          %s347 = smul.addr %s346, 4
          %s348 = scalar_lea.vmem [#allocation8], %s347
          %s350 = ssub.s32 64, 64
          %351 = vsyncadd %s345, %s350
          %s352 = smul.addr %s33, 2
          %s353 = smul.addr %s352, 32
          %s354 = scalar_lea.hbm %s3, %s353
          %s356 = sshll.u32 %s348, 4
          %s357 = int_to_ptr.vmem [resolvable:$true] %s356
          %359 = dma.hbm_to_vmem [thread:$0]  %s354, 64, %s357, %s345
        $region36: #{tpu_custom_call.1} parent=19 // pred_fallthru
          _
      $region20: #{tpu_custom_call.1} parent=5 // pred_fallthru
        _
      %p360 = scmp.le.s32.totalorder 1, %s33
      %p361 = scmp.lt.s32.totalorder %s33, 4
      %p362 = pnand %p360, %p361
      %p363 = pneg %p362
      // Predicated region
      $region37: #{tpu_custom_call.1} parent=5 // pred_check
        _
      $region38: #{tpu_custom_call.1} parent=5 // pred_check_branch
        %365 = sbr.rel (%p362) target = $region40
      $region39: #{tpu_custom_call.1} parent=5 // pred_region
        %s366 = ssub.s32 %s33, 1
        %s367 = sand.u32 %s46, 1
        %s368 = scalar_lea.sflag [#allocation3], %s367
        %s369 = sand.u32 %s46, 1
        %s370 = smul.addr %s369, 4
        %s371 = scalar_lea.vmem [#allocation2], %s370
        // Predicated region
        $region41: #{tpu_custom_call.1} parent=39 // pred_check
          %p372 = pneg %p59
        $region42: #{tpu_custom_call.1} parent=39 // pred_check_branch
          %374 = sbr.rel (%p372) target = $region44
        $region43: #{tpu_custom_call.1} parent=39 // pred_region
          %375 = dma.done %s368, 64
        $region44: #{tpu_custom_call.1} parent=39 // pred_fallthru
          _
        %s376 = sand.u32 %s38, 1
        %s377 = scalar_lea.sflag [#allocation6], %s376
        %s378 = sand.u32 %s72, 1
        %s379 = smul.addr %s378, 4
        %s380 = scalar_lea.vmem [#allocation5], %s379
        // Predicated region
        $region45: #{tpu_custom_call.1} parent=39 // pred_check
          %p381 = pneg %p85
        $region46: #{tpu_custom_call.1} parent=39 // pred_check_branch
          %383 = sbr.rel (%p381) target = $region48
        $region47: #{tpu_custom_call.1} parent=39 // pred_region
          %384 = dma.done %s377, 64
        $region48: #{tpu_custom_call.1} parent=39 // pred_fallthru
          _
        %s385 = sand.u32 %s38, 1
        %s386 = scalar_lea.sflag [#allocation6], %s385
        %s387 = sand.u32 %s98, 1
        %s388 = smul.addr %s387, 4
        %s389 = scalar_lea.vmem [#allocation7], %s388
        // Predicated region
        $region49: #{tpu_custom_call.1} parent=39 // pred_check
          %p390 = pneg %p111
        $region50: #{tpu_custom_call.1} parent=39 // pred_check_branch
          %392 = sbr.rel (%p390) target = $region52
        $region51: #{tpu_custom_call.1} parent=39 // pred_region
          %393 = dma.done %s386, 64
        $region52: #{tpu_custom_call.1} parent=39 // pred_fallthru
          _
        %s394 = sand.u32 %s124, 1
        %s395 = scalar_lea.sflag [#allocation9], %s394
        %s396 = sand.u32 %s124, 1
        %s397 = smul.addr %s396, 4
        %s398 = scalar_lea.vmem [#allocation8], %s397
        // Predicated region
        $region53: #{tpu_custom_call.1} parent=39 // pred_check
          %p399 = pneg %p137
        $region54: #{tpu_custom_call.1} parent=39 // pred_check_branch
          %401 = sbr.rel (%p399) target = $region56
        $region55: #{tpu_custom_call.1} parent=39 // pred_region
          %402 = dma.done %s395, 64
        $region56: #{tpu_custom_call.1} parent=39 // pred_fallthru
          _
        %s403 = sand.u32 %s46, 1
        %s404 = scalar_lea.sflag [#allocation3], %s403
        %s405 = sand.u32 %s46, 1
        %s406 = smul.addr %s405, 4
        %s407 = scalar_lea.vmem [#allocation2], %s406
        %p408 = pneg %p59
        %p409 = pneg %p56
        %s410 = sand.u32 %s38, 1
        %s411 = scalar_lea.sflag [#allocation6], %s410
        %s412 = sand.u32 %s72, 1
        %s413 = smul.addr %s412, 4
        %s414 = scalar_lea.vmem [#allocation5], %s413
        %p415 = pneg %p85
        %p416 = pneg %p82
        %s417 = sand.u32 %s38, 1
        %s418 = scalar_lea.sflag [#allocation6], %s417
        %s419 = sand.u32 %s98, 1
        %s420 = smul.addr %s419, 4
        %s421 = scalar_lea.vmem [#allocation7], %s420
        %p422 = pneg %p111
        %p423 = pneg %p108
        %s424 = sand.u32 %s124, 1
        %s425 = scalar_lea.sflag [#allocation9], %s424
        %s426 = sand.u32 %s124, 1
        %s427 = smul.addr %s426, 4
        %s428 = scalar_lea.vmem [#allocation8], %s427
        %p429 = pneg %p137
        %p430 = pneg %p134
        %p431 = pneg %p158
        %p432 = pneg %p155
        %p433 = pneg %p184
        %p434 = pneg %p181
        %s435 = sand.u32 %s171, 1
        %s436 = scalar_lea.sflag [#allocation4], %s435
        %s437 = sand.u32 %s171, 1
        %s438 = smul.addr %s437, 2
        %s439 = scalar_lea.vmem [#allocation10], %s438
        %p440 = pneg %p210
        %p441 = pneg %p207
        %s442 = sand.u32 %s38, 1
        %s443 = scalar_lea.sflag [#allocation12], %s442
        %s444 = sand.u32 %s197, 1
        %s445 = smul.addr %s444, 2
        %s446 = scalar_lea.vmem [#allocation11], %s445
        %p447 = pneg %p236
        %p448 = pneg %p233
        %s449 = sand.u32 %s38, 1
        %s450 = scalar_lea.sflag [#allocation12], %s449
        %s451 = sand.u32 %s223, 1
        %s452 = smul.addr %s451, 2
        %s453 = scalar_lea.vmem [#allocation13], %s452
        %p454 = pneg %p262
        %p455 = pneg %p259
        %s456 = sand.u32 %s249, 1
        %s457 = scalar_lea.sflag [#allocation15], %s456
        %s458 = sand.u32 %s249, 1
        %s459 = smul.addr %s458, 2
        %s460 = scalar_lea.vmem [#allocation14], %s459
        %v461 = vld [vmem:[%s4] sm:$0x3]
        %v462 = vld [vmem:[%s371] sm:$0xf]
        %v463 = vld [vmem:[%s380] sm:$0xf]
        %v464 = vld [vmem:[%s389] sm:$0xf]
        %v465 = vld [vmem:[%s398] sm:$0xf]
        %v466 = vadd.f32 %v462, %v463
        %v467 = vmul.f32 %v466, 0.0
        %v468 = vmul.f32 %v463, -7.266348e-11
        %v469 = vsub.f32 %v467, %v468
        %v470 = vmul.f32 %v462, -7.266348e-11
        %v471 = vadd.f32 %v467, %v470
        %v472 = vmul.f32 %v463, 4.980429e-10
        %v473 = vsub.f32 %v467, %v472
        %v474 = vmul.f32 %v462, 4.980429e-10
        %v475 = vadd.f32 %v467, %v474
        %477 = vrot.lane.b32.xlu0 %v473, 127
        %v478 = vpop.permute.xlu0 %477
        %v479 = vrot.slane %v478, 2
        %vm480 = vcmask 1039360
        %v481 = vsel %vm480, %v478, %v479
        %v483 = vadd.f32 %v469, %v481
        %485 = vrot.lane.b32.xlu0 %v475, 127
        %v486 = vpop.permute.xlu0 %485
        %v487 = vrot.slane %v486, 2
        %v488 = vsel %vm480, %v486, %v487
        %v490 = vadd.f32 %v471, %v488
        %v491 = vsub.f32 %v466, %v463
        %v492 = vmul.f32 %v462, -1.0
        %v493 = vadd.f32 %v466, %v492
        %495 = vrot.lane.b32.xlu0 %v491, 126
        %v496 = vpop.permute.xlu0 %495
        %v497 = vrot.slane %v496, 2
        %vm498 = vcmask 1031168
        %v499 = vsel %vm498, %v496, %v497
        %v501 = vadd.f32 %v483, %v499
        %503 = vrot.lane.b32.xlu0 %v493, 126
        %v504 = vpop.permute.xlu0 %503
        %v505 = vrot.slane %v504, 2
        %v506 = vsel %vm498, %v504, %v505
        %v508 = vadd.f32 %v490, %v506
        %509 = vrot.lane.b32.xlu0 %v473, 125
        %v510 = vpop.permute.xlu0 %509
        %v511 = vrot.slane %v510, 2
        %vm512 = vcmask 1022976
        %v513 = vsel %vm512, %v510, %v511
        %v515 = vadd.f32 %v501, %v513
        %516 = vrot.lane.b32.xlu0 %v475, 125
        %v517 = vpop.permute.xlu0 %516
        %v518 = vrot.slane %v517, 2
        %v519 = vsel %vm512, %v517, %v518
        %v521 = vadd.f32 %v508, %v519
        %523 = vrot.lane.b32.xlu0 %v469, 124
        %v524 = vpop.permute.xlu0 %523
        %v525 = vrot.slane %v524, 2
        %vm526 = vcmask 1014784
        %v527 = vsel %vm526, %v524, %v525
        %v529 = vadd.f32 %v515, %v527
        %531 = vrot.lane.b32.xlu0 %v471, 124
        %v532 = vpop.permute.xlu0 %531
        %v533 = vrot.slane %v532, 2
        %v534 = vsel %vm526, %v532, %v533
        %v536 = vadd.f32 %v521, %v534
        %v537 = vadd.f32 %v464, %v465
        %v538 = vmul.f32 %v537, 0.0
        %v539 = vmul.f32 %v465, -7.266348e-11
        %v540 = vsub.f32 %v538, %v539
        %v541 = vmul.f32 %v464, -7.266348e-11
        %v542 = vadd.f32 %v538, %v541
        %v543 = vmul.f32 %v465, 4.980429e-10
        %v544 = vsub.f32 %v538, %v543
        %v545 = vmul.f32 %v464, 4.980429e-10
        %v546 = vadd.f32 %v538, %v545
        %548 = vrot.lane.b32.xlu0 %v544, 127
        %v549 = vpop.permute.xlu0 %548
        %v550 = vrot.slane %v549, 2
        %v551 = vsel %vm480, %v549, %v550
        %v553 = vadd.f32 %v540, %v551
        %555 = vrot.lane.b32.xlu0 %v546, 127
        %v556 = vpop.permute.xlu0 %555
        %v557 = vrot.slane %v556, 2
        %v558 = vsel %vm480, %v556, %v557
        %v560 = vadd.f32 %v542, %v558
        %v561 = vsub.f32 %v537, %v465
        %v562 = vmul.f32 %v464, -1.0
        %v563 = vadd.f32 %v537, %v562
        %565 = vrot.lane.b32.xlu0 %v561, 126
        %v566 = vpop.permute.xlu0 %565
        %v567 = vrot.slane %v566, 2
        %v568 = vsel %vm498, %v566, %v567
        %v570 = vadd.f32 %v553, %v568
        %572 = vrot.lane.b32.xlu0 %v563, 126
        %v573 = vpop.permute.xlu0 %572
        %v574 = vrot.slane %v573, 2
        %v575 = vsel %vm498, %v573, %v574
        %v577 = vadd.f32 %v560, %v575
        %578 = vrot.lane.b32.xlu0 %v544, 125
        %v579 = vpop.permute.xlu0 %578
        %v580 = vrot.slane %v579, 2
        %v581 = vsel %vm512, %v579, %v580
        %v583 = vadd.f32 %v570, %v581
        %584 = vrot.lane.b32.xlu0 %v546, 125
        %v585 = vpop.permute.xlu0 %584
        %v586 = vrot.slane %v585, 2
        %v587 = vsel %vm512, %v585, %v586
        %v589 = vadd.f32 %v577, %v587
        %591 = vrot.lane.b32.xlu0 %v540, 124
        %v592 = vpop.permute.xlu0 %591
        %v593 = vrot.slane %v592, 2
        %v594 = vsel %vm526, %v592, %v593
        %v596 = vadd.f32 %v583, %v594
        %598 = vrot.lane.b32.xlu0 %v542, 124
        %v599 = vpop.permute.xlu0 %598
        %v600 = vrot.slane %v599, 2
        %v601 = vsel %vm526, %v599, %v600
        %v603 = vadd.f32 %v589, %v601
        %v604 = vmul.f32 %v529, %v529
        %v605 = vmul.f32 %v536, %v536
        %v606 = vadd.f32 %v604, %v605
        %v607 = vmul.f32 %v536, %v529
        %v608 = vsub.f32 %v607, %v607
        %v609 = vmul.f32 %v596, %v596
        %v610 = vmul.f32 %v603, %v603
        %v611 = vadd.f32 %v609, %v610
        %v612 = vmul.f32 %v603, %v596
        %v613 = vsub.f32 %v612, %v612
        %v614 = vadd.f32 %v606, %v611
        %v615 = vadd.f32 %v608, %v613
        %617 = vrot.lane.b32.xlu0 %v529, 2
        %v618 = vpop.permute.xlu0 %617
        %v619 = vrot.slane %v618, 6
        %vm620 = vcmask 15360
        %v621 = vsel %vm620, %v619, %v618
        %v623 = vmul.f32 %v529, %v621
        %625 = vrot.lane.b32.xlu0 %v536, 2
        %v626 = vpop.permute.xlu0 %625
        %v627 = vrot.slane %v626, 6
        %v628 = vsel %vm620, %v627, %v626
        %v630 = vmul.f32 %v536, %v628
        %v631 = vadd.f32 %v623, %v630
        %v632 = vmul.f32 %v536, %v621
        %v633 = vmul.f32 %v529, %v628
        %v634 = vsub.f32 %v632, %v633
        %636 = vrot.lane.b32.xlu0 %v596, 2
        %v637 = vpop.permute.xlu0 %636
        %v638 = vrot.slane %v637, 6
        %v639 = vsel %vm620, %v638, %v637
        %v641 = vmul.f32 %v596, %v639
        %643 = vrot.lane.b32.xlu0 %v603, 2
        %v644 = vpop.permute.xlu0 %643
        %v645 = vrot.slane %v644, 6
        %v646 = vsel %vm620, %v645, %v644
        %v648 = vmul.f32 %v603, %v646
        %v649 = vadd.f32 %v641, %v648
        %v650 = vmul.f32 %v603, %v639
        %v651 = vmul.f32 %v596, %v646
        %v652 = vsub.f32 %v650, %v651
        %v653 = vadd.f32 %v631, %v649
        %v654 = vadd.f32 %v634, %v652
        %656 = vrot.lane.b32.xlu0 %v614, 2
        %v657 = vpop.permute.xlu0 %656
        %v658 = vrot.slane %v657, 6
        %v659 = vsel %vm620, %v658, %v657
        %v661 = vmul.f32 %v529, %v659
        %663 = vrot.lane.b32.xlu0 %v615, 2
        %v664 = vpop.permute.xlu0 %663
        %v665 = vrot.slane %v664, 6
        %v666 = vsel %vm620, %v665, %v664
        %v668 = vmul.f32 %v536, %v666
        %v669 = vsub.f32 %v661, %v668
        %v670 = vmul.f32 %v529, %v666
        %v671 = vmul.f32 %v536, %v659
        %v672 = vadd.f32 %v670, %v671
        %674 = vrot.lane.b32.xlu0 %v653, 126
        %v675 = vpop.permute.xlu0 %674
        %v676 = vrot.slane %v675, 2
        %v677 = vsel %vm498, %v675, %v676
        %v679 = vmul.f32 %v529, %v677
        %681 = vrot.lane.b32.xlu0 %v679, 2
        %v682 = vpop.permute.xlu0 %681
        %v683 = vrot.slane %v682, 6
        %v684 = vsel %vm620, %v683, %v682
        %v686 = vadd.f32 %v669, %v684
        %688 = vrot.lane.b32.xlu0 %v654, 126
        %v689 = vpop.permute.xlu0 %688
        %v690 = vrot.slane %v689, 2
        %v691 = vsel %vm498, %v689, %v690
        %v693 = vmul.f32 %v536, %v691
        %695 = vrot.lane.b32.xlu0 %v693, 2
        %v696 = vpop.permute.xlu0 %695
        %v697 = vrot.slane %v696, 6
        %v698 = vsel %vm620, %v697, %v696
        %v700 = vsub.f32 %v686, %v698
        %v701 = vmul.f32 %v529, %v691
        %703 = vrot.lane.b32.xlu0 %v701, 2
        %v704 = vpop.permute.xlu0 %703
        %v705 = vrot.slane %v704, 6
        %v706 = vsel %vm620, %v705, %v704
        %v708 = vadd.f32 %v672, %v706
        %v709 = vmul.f32 %v536, %v677
        %711 = vrot.lane.b32.xlu0 %v709, 2
        %v712 = vpop.permute.xlu0 %711
        %v713 = vrot.slane %v712, 6
        %v714 = vsel %vm620, %v713, %v712
        %v716 = vadd.f32 %v708, %v714
        %v717 = vadd.f32 %v700, %v716
        %v718 = vmul.f32 %v717, 0.001295636
        %v719 = vmul.f32 %v716, 0.0006736923
        %v720 = vsub.f32 %v718, %v719
        %v721 = vmul.f32 %v700, -0.0019175796
        %v722 = vadd.f32 %v718, %v721
        %v723 = vmul.f32 %v596, %v659
        %v724 = vmul.f32 %v603, %v666
        %v725 = vsub.f32 %v723, %v724
        %v726 = vmul.f32 %v596, %v666
        %v727 = vmul.f32 %v603, %v659
        %v728 = vadd.f32 %v726, %v727
        %v729 = vmul.f32 %v596, %v677
        %731 = vrot.lane.b32.xlu0 %v729, 2
        %v732 = vpop.permute.xlu0 %731
        %v733 = vrot.slane %v732, 6
        %v734 = vsel %vm620, %v733, %v732
        %v736 = vadd.f32 %v725, %v734
        %v737 = vmul.f32 %v603, %v691
        %739 = vrot.lane.b32.xlu0 %v737, 2
        %v740 = vpop.permute.xlu0 %739
        %v741 = vrot.slane %v740, 6
        %v742 = vsel %vm620, %v741, %v740
        %v744 = vsub.f32 %v736, %v742
        %v745 = vmul.f32 %v596, %v691
        %747 = vrot.lane.b32.xlu0 %v745, 2
        %v748 = vpop.permute.xlu0 %747
        %v749 = vrot.slane %v748, 6
        %v750 = vsel %vm620, %v749, %v748
        %v752 = vadd.f32 %v728, %v750
        %v753 = vmul.f32 %v603, %v677
        %755 = vrot.lane.b32.xlu0 %v753, 2
        %v756 = vpop.permute.xlu0 %755
        %v757 = vrot.slane %v756, 6
        %v758 = vsel %vm620, %v757, %v756
        %v760 = vadd.f32 %v752, %v758
        %v761 = vadd.f32 %v744, %v760
        %v762 = vmul.f32 %v761, 0.001295636
        %v763 = vmul.f32 %v760, 0.0006736923
        %v764 = vsub.f32 %v762, %v763
        %v765 = vmul.f32 %v744, -0.0019175796
        %v766 = vadd.f32 %v762, %v765
        %767 = vrot.lane.b32.xlu0 %v529, 127
        %v768 = vpop.permute.xlu0 %767
        %v769 = vrot.slane %v768, 2
        %v770 = vsel %vm480, %v768, %v769
        %v772 = vmul.f32 %v529, %v770
        %773 = vrot.lane.b32.xlu0 %v536, 127
        %v774 = vpop.permute.xlu0 %773
        %v775 = vrot.slane %v774, 2
        %v776 = vsel %vm480, %v774, %v775
        %v778 = vmul.f32 %v536, %v776
        %v779 = vadd.f32 %v772, %v778
        %v780 = vmul.f32 %v536, %v770
        %v781 = vmul.f32 %v529, %v776
        %v782 = vsub.f32 %v780, %v781
        %783 = vrot.lane.b32.xlu0 %v596, 127
        %v784 = vpop.permute.xlu0 %783
        %v785 = vrot.slane %v784, 2
        %v786 = vsel %vm480, %v784, %v785
        %v788 = vmul.f32 %v596, %v786
        %789 = vrot.lane.b32.xlu0 %v603, 127
        %v790 = vpop.permute.xlu0 %789
        %v791 = vrot.slane %v790, 2
        %v792 = vsel %vm480, %v790, %v791
        %v794 = vmul.f32 %v603, %v792
        %v795 = vadd.f32 %v788, %v794
        %v796 = vmul.f32 %v603, %v786
        %v797 = vmul.f32 %v596, %v792
        %v798 = vsub.f32 %v796, %v797
        %v799 = vadd.f32 %v779, %v795
        %v800 = vadd.f32 %v782, %v798
        %802 = vrot.lane.b32.xlu0 %v799, 3
        %v803 = vpop.permute.xlu0 %802
        %v804 = vrot.slane %v803, 6
        %vm805 = vcmask 23552
        %v806 = vsel %vm805, %v804, %v803
        %v808 = vmul.f32 %v529, %v806
        %810 = vrot.lane.b32.xlu0 %v800, 3
        %v811 = vpop.permute.xlu0 %810
        %v812 = vrot.slane %v811, 6
        %v813 = vsel %vm805, %v812, %v811
        %v815 = vmul.f32 %v536, %v813
        %v816 = vsub.f32 %v808, %v815
        %v817 = vmul.f32 %v529, %v813
        %v818 = vmul.f32 %v536, %v806
        %v819 = vadd.f32 %v817, %v818
        %820 = vrot.lane.b32.xlu0 %v653, 125
        %v821 = vpop.permute.xlu0 %820
        %v822 = vrot.slane %v821, 2
        %v823 = vsel %vm512, %v821, %v822
        %v825 = vmul.f32 %v529, %v823
        %827 = vrot.lane.b32.xlu0 %v825, 3
        %v828 = vpop.permute.xlu0 %827
        %v829 = vrot.slane %v828, 6
        %v830 = vsel %vm805, %v829, %v828
        %v832 = vadd.f32 %v816, %v830
        %833 = vrot.lane.b32.xlu0 %v654, 125
        %v834 = vpop.permute.xlu0 %833
        %v835 = vrot.slane %v834, 2
        %v836 = vsel %vm512, %v834, %v835
        %v838 = vmul.f32 %v536, %v836
        %840 = vrot.lane.b32.xlu0 %v838, 3
        %v841 = vpop.permute.xlu0 %840
        %v842 = vrot.slane %v841, 6
        %v843 = vsel %vm805, %v842, %v841
        %v845 = vsub.f32 %v832, %v843
        %v846 = vmul.f32 %v529, %v836
        %848 = vrot.lane.b32.xlu0 %v846, 3
        %v849 = vpop.permute.xlu0 %848
        %v850 = vrot.slane %v849, 6
        %v851 = vsel %vm805, %v850, %v849
        %v853 = vadd.f32 %v819, %v851
        %v854 = vmul.f32 %v536, %v823
        %856 = vrot.lane.b32.xlu0 %v854, 3
        %v857 = vpop.permute.xlu0 %856
        %v858 = vrot.slane %v857, 6
        %v859 = vsel %vm805, %v858, %v857
        %v861 = vadd.f32 %v853, %v859
        %v862 = vadd.f32 %v845, %v861
        %v863 = vmul.f32 %v862, 0.0013550106
        %v864 = vmul.f32 %v861, 0.0019798146
        %v865 = vsub.f32 %v863, %v864
        %v866 = vmul.f32 %v845, -0.00073020643
        %v867 = vadd.f32 %v863, %v866
        %869 = vrot.lane.b32.xlu0 %v865, 127
        %v870 = vpop.permute.xlu0 %869
        %v871 = vrot.slane %v870, 2
        %v872 = vsel %vm480, %v870, %v871
        %v874 = vadd.f32 %v720, %v872
        %876 = vrot.lane.b32.xlu0 %v867, 127
        %v877 = vpop.permute.xlu0 %876
        %v878 = vrot.slane %v877, 2
        %v879 = vsel %vm480, %v877, %v878
        %v881 = vadd.f32 %v722, %v879
        %v882 = vmul.f32 %v596, %v806
        %v883 = vmul.f32 %v603, %v813
        %v884 = vsub.f32 %v882, %v883
        %v885 = vmul.f32 %v596, %v813
        %v886 = vmul.f32 %v603, %v806
        %v887 = vadd.f32 %v885, %v886
        %v888 = vmul.f32 %v596, %v823
        %890 = vrot.lane.b32.xlu0 %v888, 3
        %v891 = vpop.permute.xlu0 %890
        %v892 = vrot.slane %v891, 6
        %v893 = vsel %vm805, %v892, %v891
        %v895 = vadd.f32 %v884, %v893
        %v896 = vmul.f32 %v603, %v836
        %898 = vrot.lane.b32.xlu0 %v896, 3
        %v899 = vpop.permute.xlu0 %898
        %v900 = vrot.slane %v899, 6
        %v901 = vsel %vm805, %v900, %v899
        %v903 = vsub.f32 %v895, %v901
        %v904 = vmul.f32 %v596, %v836
        %906 = vrot.lane.b32.xlu0 %v904, 3
        %v907 = vpop.permute.xlu0 %906
        %v908 = vrot.slane %v907, 6
        %v909 = vsel %vm805, %v908, %v907
        %v911 = vadd.f32 %v887, %v909
        %v912 = vmul.f32 %v603, %v823
        %914 = vrot.lane.b32.xlu0 %v912, 3
        %v915 = vpop.permute.xlu0 %914
        %v916 = vrot.slane %v915, 6
        %v917 = vsel %vm805, %v916, %v915
        %v919 = vadd.f32 %v911, %v917
        %v920 = vadd.f32 %v903, %v919
        %v921 = vmul.f32 %v920, 0.0013550106
        %v922 = vmul.f32 %v919, 0.0019798146
        %v923 = vsub.f32 %v921, %v922
        %v924 = vmul.f32 %v903, -0.00073020643
        %v925 = vadd.f32 %v921, %v924
        %927 = vrot.lane.b32.xlu0 %v923, 127
        %v928 = vpop.permute.xlu0 %927
        %v929 = vrot.slane %v928, 2
        %v930 = vsel %vm480, %v928, %v929
        %v932 = vadd.f32 %v764, %v930
        %934 = vrot.lane.b32.xlu0 %v925, 127
        %v935 = vpop.permute.xlu0 %934
        %v936 = vrot.slane %v935, 2
        %v937 = vsel %vm480, %v935, %v936
        %v939 = vadd.f32 %v766, %v937
        %v940 = vsub.f32 %v781, %v780
        %v941 = vsub.f32 %v797, %v796
        %v942 = vadd.f32 %v940, %v941
        %943 = vrot.lane.b32.xlu0 %v799, 1
        %v944 = vpop.permute.xlu0 %943
        %v945 = vrot.slane %v944, 6
        %vm946 = vcmask 7168
        %v947 = vsel %vm946, %v945, %v944
        %v949 = vmul.f32 %v529, %v947
        %951 = vrot.lane.b32.xlu0 %v942, 1
        %v952 = vpop.permute.xlu0 %951
        %v953 = vrot.slane %v952, 6
        %v954 = vsel %vm946, %v953, %v952
        %v956 = vmul.f32 %v536, %v954
        %v957 = vsub.f32 %v949, %v956
        %v958 = vmul.f32 %v529, %v954
        %v959 = vmul.f32 %v536, %v947
        %v960 = vadd.f32 %v958, %v959
        %v961 = vadd.f32 %v957, %v960
        %v962 = vmul.f32 %v961, -0.0004096056
        %v963 = vmul.f32 %v960, 0.0012724721
        %v964 = vsub.f32 %v962, %v963
        %v965 = vmul.f32 %v957, 0.0020916832
        %v966 = vadd.f32 %v962, %v965
        %968 = vrot.lane.b32.xlu0 %v964, 1
        %v969 = vpop.permute.xlu0 %968
        %v970 = vrot.slane %v969, 6
        %v971 = vsel %vm946, %v970, %v969
        %v973 = vadd.f32 %v874, %v971
        %975 = vrot.lane.b32.xlu0 %v966, 1
        %v976 = vpop.permute.xlu0 %975
        %v977 = vrot.slane %v976, 6
        %v978 = vsel %vm946, %v977, %v976
        %v980 = vadd.f32 %v881, %v978
        %v981 = vmul.f32 %v596, %v947
        %v982 = vmul.f32 %v603, %v954
        %v983 = vsub.f32 %v981, %v982
        %v984 = vmul.f32 %v596, %v954
        %v985 = vmul.f32 %v603, %v947
        %v986 = vadd.f32 %v984, %v985
        %v987 = vadd.f32 %v983, %v986
        %v988 = vmul.f32 %v987, -0.0004096056
        %v989 = vmul.f32 %v986, 0.0012724721
        %v990 = vsub.f32 %v988, %v989
        %v991 = vmul.f32 %v983, 0.0020916832
        %v992 = vadd.f32 %v988, %v991
        %994 = vrot.lane.b32.xlu0 %v990, 1
        %v995 = vpop.permute.xlu0 %994
        %v996 = vrot.slane %v995, 6
        %v997 = vsel %vm946, %v996, %v995
        %v999 = vadd.f32 %v932, %v997
        %1001 = vrot.lane.b32.xlu0 %v992, 1
        %v1002 = vpop.permute.xlu0 %1001
        %v1003 = vrot.slane %v1002, 6
        %v1004 = vsel %vm946, %v1003, %v1002
        %v1006 = vadd.f32 %v939, %v1004
        %1007 = vrot.lane.b32.xlu0 %v529, 1
        %v1008 = vpop.permute.xlu0 %1007
        %v1009 = vrot.slane %v1008, 6
        %v1010 = vsel %vm946, %v1009, %v1008
        %v1012 = vmul.f32 %v529, %v1010
        %1013 = vrot.lane.b32.xlu0 %v536, 1
        %v1014 = vpop.permute.xlu0 %1013
        %v1015 = vrot.slane %v1014, 6
        %v1016 = vsel %vm946, %v1015, %v1014
        %v1018 = vmul.f32 %v536, %v1016
        %v1019 = vadd.f32 %v1012, %v1018
        %v1020 = vmul.f32 %v536, %v1010
        %v1021 = vmul.f32 %v529, %v1016
        %v1022 = vsub.f32 %v1020, %v1021
        %1023 = vrot.lane.b32.xlu0 %v596, 1
        %v1024 = vpop.permute.xlu0 %1023
        %v1025 = vrot.slane %v1024, 6
        %v1026 = vsel %vm946, %v1025, %v1024
        %v1028 = vmul.f32 %v596, %v1026
        %1029 = vrot.lane.b32.xlu0 %v603, 1
        %v1030 = vpop.permute.xlu0 %1029
        %v1031 = vrot.slane %v1030, 6
        %v1032 = vsel %vm946, %v1031, %v1030
        %v1034 = vmul.f32 %v603, %v1032
        %v1035 = vadd.f32 %v1028, %v1034
        %v1036 = vmul.f32 %v603, %v1026
        %v1037 = vmul.f32 %v596, %v1032
        %v1038 = vsub.f32 %v1036, %v1037
        %v1039 = vadd.f32 %v1019, %v1035
        %v1040 = vadd.f32 %v1022, %v1038
        %1041 = vrot.lane.b32.xlu0 %v614, 1
        %v1042 = vpop.permute.xlu0 %1041
        %v1043 = vrot.slane %v1042, 6
        %v1044 = vsel %vm946, %v1043, %v1042
        %v1046 = vmul.f32 %v529, %v1044
        %1047 = vrot.lane.b32.xlu0 %v615, 1
        %v1048 = vpop.permute.xlu0 %1047
        %v1049 = vrot.slane %v1048, 6
        %v1050 = vsel %vm946, %v1049, %v1048
        %v1052 = vmul.f32 %v536, %v1050
        %v1053 = vsub.f32 %v1046, %v1052
        %v1054 = vmul.f32 %v529, %v1050
        %v1055 = vmul.f32 %v536, %v1044
        %v1056 = vadd.f32 %v1054, %v1055
        %1058 = vrot.lane.b32.xlu0 %v1039, 127
        %v1059 = vpop.permute.xlu0 %1058
        %v1060 = vrot.slane %v1059, 2
        %v1061 = vsel %vm480, %v1059, %v1060
        %v1063 = vmul.f32 %v529, %v1061
        %1065 = vrot.lane.b32.xlu0 %v1063, 1
        %v1066 = vpop.permute.xlu0 %1065
        %v1067 = vrot.slane %v1066, 6
        %v1068 = vsel %vm946, %v1067, %v1066
        %v1070 = vadd.f32 %v1053, %v1068
        %1072 = vrot.lane.b32.xlu0 %v1040, 127
        %v1073 = vpop.permute.xlu0 %1072
        %v1074 = vrot.slane %v1073, 2
        %v1075 = vsel %vm480, %v1073, %v1074
        %v1077 = vmul.f32 %v536, %v1075
        %1079 = vrot.lane.b32.xlu0 %v1077, 1
        %v1080 = vpop.permute.xlu0 %1079
        %v1081 = vrot.slane %v1080, 6
        %v1082 = vsel %vm946, %v1081, %v1080
        %v1084 = vsub.f32 %v1070, %v1082
        %v1085 = vmul.f32 %v529, %v1075
        %1087 = vrot.lane.b32.xlu0 %v1085, 1
        %v1088 = vpop.permute.xlu0 %1087
        %v1089 = vrot.slane %v1088, 6
        %v1090 = vsel %vm946, %v1089, %v1088
        %v1092 = vadd.f32 %v1056, %v1090
        %v1093 = vmul.f32 %v536, %v1061
        %1095 = vrot.lane.b32.xlu0 %v1093, 1
        %v1096 = vpop.permute.xlu0 %1095
        %v1097 = vrot.slane %v1096, 6
        %v1098 = vsel %vm946, %v1097, %v1096
        %v1100 = vadd.f32 %v1092, %v1098
        %v1101 = vadd.f32 %v1084, %v1100
        %v1102 = vmul.f32 %v1101, -0.0007718855
        %v1103 = vmul.f32 %v1100, -0.0015798984
        %v1104 = vsub.f32 %v1102, %v1103
        %v1105 = vmul.f32 %v1084, -3.612734e-05
        %v1106 = vadd.f32 %v1102, %v1105
        %v1107 = vadd.f32 %v973, %v1104
        %v1108 = vadd.f32 %v980, %v1106
        %v1109 = vmul.f32 %v596, %v1044
        %v1110 = vmul.f32 %v603, %v1050
        %v1111 = vsub.f32 %v1109, %v1110
        %v1112 = vmul.f32 %v596, %v1050
        %v1113 = vmul.f32 %v603, %v1044
        %v1114 = vadd.f32 %v1112, %v1113
        %v1115 = vmul.f32 %v596, %v1061
        %1117 = vrot.lane.b32.xlu0 %v1115, 1
        %v1118 = vpop.permute.xlu0 %1117
        %v1119 = vrot.slane %v1118, 6
        %v1120 = vsel %vm946, %v1119, %v1118
        %v1122 = vadd.f32 %v1111, %v1120
        %v1123 = vmul.f32 %v603, %v1075
        %1125 = vrot.lane.b32.xlu0 %v1123, 1
        %v1126 = vpop.permute.xlu0 %1125
        %v1127 = vrot.slane %v1126, 6
        %v1128 = vsel %vm946, %v1127, %v1126
        %v1130 = vsub.f32 %v1122, %v1128
        %v1131 = vmul.f32 %v596, %v1075
        %1133 = vrot.lane.b32.xlu0 %v1131, 1
        %v1134 = vpop.permute.xlu0 %1133
        %v1135 = vrot.slane %v1134, 6
        %v1136 = vsel %vm946, %v1135, %v1134
        %v1138 = vadd.f32 %v1114, %v1136
        %v1139 = vmul.f32 %v603, %v1061
        %1141 = vrot.lane.b32.xlu0 %v1139, 1
        %v1142 = vpop.permute.xlu0 %1141
        %v1143 = vrot.slane %v1142, 6
        %v1144 = vsel %vm946, %v1143, %v1142
        %v1146 = vadd.f32 %v1138, %v1144
        %v1147 = vadd.f32 %v1130, %v1146
        %v1148 = vmul.f32 %v1147, -0.0007718855
        %v1149 = vmul.f32 %v1146, -0.0015798984
        %v1150 = vsub.f32 %v1148, %v1149
        %v1151 = vmul.f32 %v1130, -3.612734e-05
        %v1152 = vadd.f32 %v1148, %v1151
        %v1153 = vadd.f32 %v999, %v1150
        %v1154 = vadd.f32 %v1006, %v1152
        %v1155 = vsub.f32 %v1021, %v1020
        %v1156 = vsub.f32 %v1037, %v1036
        %v1157 = vadd.f32 %v1155, %v1156
        %1158 = vrot.lane.b32.xlu0 %v1039, 1
        %v1159 = vpop.permute.xlu0 %1158
        %v1160 = vrot.slane %v1159, 6
        %v1161 = vsel %vm946, %v1160, %v1159
        %v1163 = vmul.f32 %v529, %v1161
        %1165 = vrot.lane.b32.xlu0 %v1157, 1
        %v1166 = vpop.permute.xlu0 %1165
        %v1167 = vrot.slane %v1166, 6
        %v1168 = vsel %vm946, %v1167, %v1166
        %v1170 = vmul.f32 %v536, %v1168
        %v1171 = vsub.f32 %v1163, %v1170
        %v1172 = vmul.f32 %v529, %v1168
        %v1173 = vmul.f32 %v536, %v1161
        %v1174 = vadd.f32 %v1172, %v1173
        %1175 = vrot.lane.b32.xlu0 %v1039, 126
        %v1176 = vpop.permute.xlu0 %1175
        %v1177 = vrot.slane %v1176, 2
        %v1178 = vsel %vm498, %v1176, %v1177
        %v1180 = vmul.f32 %v529, %v1178
        %1182 = vrot.lane.b32.xlu0 %v1180, 2
        %v1183 = vpop.permute.xlu0 %1182
        %v1184 = vrot.slane %v1183, 6
        %v1185 = vsel %vm620, %v1184, %v1183
        %v1187 = vadd.f32 %v1171, %v1185
        %1188 = vrot.lane.b32.xlu0 %v1040, 126
        %v1189 = vpop.permute.xlu0 %1188
        %v1190 = vrot.slane %v1189, 2
        %v1191 = vsel %vm498, %v1189, %v1190
        %v1193 = vmul.f32 %v536, %v1191
        %1195 = vrot.lane.b32.xlu0 %v1193, 2
        %v1196 = vpop.permute.xlu0 %1195
        %v1197 = vrot.slane %v1196, 6
        %v1198 = vsel %vm620, %v1197, %v1196
        %v1200 = vsub.f32 %v1187, %v1198
        %v1201 = vmul.f32 %v529, %v1191
        %1203 = vrot.lane.b32.xlu0 %v1201, 2
        %v1204 = vpop.permute.xlu0 %1203
        %v1205 = vrot.slane %v1204, 6
        %v1206 = vsel %vm620, %v1205, %v1204
        %v1208 = vadd.f32 %v1174, %v1206
        %v1209 = vmul.f32 %v536, %v1178
        %1211 = vrot.lane.b32.xlu0 %v1209, 2
        %v1212 = vpop.permute.xlu0 %1211
        %v1213 = vrot.slane %v1212, 6
        %v1214 = vsel %vm620, %v1213, %v1212
        %v1216 = vadd.f32 %v1208, %v1214
        %v1217 = vadd.f32 %v1200, %v1216
        %v1218 = vmul.f32 %v1217, 0.00038094172
        %v1219 = vmul.f32 %v1216, -0.0019852764
        %v1220 = vsub.f32 %v1218, %v1219
        %v1221 = vmul.f32 %v1200, -0.0027471597
        %v1222 = vadd.f32 %v1218, %v1221
        %1224 = vrot.lane.b32.xlu0 %v1220, 127
        %v1225 = vpop.permute.xlu0 %1224
        %v1226 = vrot.slane %v1225, 2
        %v1227 = vsel %vm480, %v1225, %v1226
        %v1229 = vadd.f32 %v1107, %v1227
        %1231 = vrot.lane.b32.xlu0 %v1222, 127
        %v1232 = vpop.permute.xlu0 %1231
        %v1233 = vrot.slane %v1232, 2
        %v1234 = vsel %vm480, %v1232, %v1233
        %v1236 = vadd.f32 %v1108, %v1234
        %v1237 = vmul.f32 %v596, %v1161
        %v1238 = vmul.f32 %v603, %v1168
        %v1239 = vsub.f32 %v1237, %v1238
        %v1240 = vmul.f32 %v596, %v1168
        %v1241 = vmul.f32 %v603, %v1161
        %v1242 = vadd.f32 %v1240, %v1241
        %v1243 = vmul.f32 %v596, %v1178
        %1245 = vrot.lane.b32.xlu0 %v1243, 2
        %v1246 = vpop.permute.xlu0 %1245
        %v1247 = vrot.slane %v1246, 6
        %v1248 = vsel %vm620, %v1247, %v1246
        %v1250 = vadd.f32 %v1239, %v1248
        %v1251 = vmul.f32 %v603, %v1191
        %1253 = vrot.lane.b32.xlu0 %v1251, 2
        %v1254 = vpop.permute.xlu0 %1253
        %v1255 = vrot.slane %v1254, 6
        %v1256 = vsel %vm620, %v1255, %v1254
        %v1258 = vsub.f32 %v1250, %v1256
        %v1259 = vmul.f32 %v596, %v1191
        %1261 = vrot.lane.b32.xlu0 %v1259, 2
        %v1262 = vpop.permute.xlu0 %1261
        %v1263 = vrot.slane %v1262, 6
        %v1264 = vsel %vm620, %v1263, %v1262
        %v1266 = vadd.f32 %v1242, %v1264
        %v1267 = vmul.f32 %v603, %v1178
        %1269 = vrot.lane.b32.xlu0 %v1267, 2
        %v1270 = vpop.permute.xlu0 %1269
        %v1271 = vrot.slane %v1270, 6
        %v1272 = vsel %vm620, %v1271, %v1270
        %v1274 = vadd.f32 %v1266, %v1272
        %v1275 = vadd.f32 %v1258, %v1274
        %v1276 = vmul.f32 %v1275, 0.00038094172
        %v1277 = vmul.f32 %v1274, -0.0019852764
        %v1278 = vsub.f32 %v1276, %v1277
        %v1279 = vmul.f32 %v1258, -0.0027471597
        %v1280 = vadd.f32 %v1276, %v1279
        %1282 = vrot.lane.b32.xlu0 %v1278, 127
        %v1283 = vpop.permute.xlu0 %1282
        %v1284 = vrot.slane %v1283, 2
        %v1285 = vsel %vm480, %v1283, %v1284
        %v1287 = vadd.f32 %v1153, %v1285
        %1289 = vrot.lane.b32.xlu0 %v1280, 127
        %v1290 = vpop.permute.xlu0 %1289
        %v1291 = vrot.slane %v1290, 2
        %v1292 = vsel %vm480, %v1290, %v1291
        %v1294 = vadd.f32 %v1154, %v1292
        %v1295 = vsub.f32 %v633, %v632
        %v1296 = vsub.f32 %v651, %v650
        %v1297 = vadd.f32 %v1295, %v1296
        %1298 = vrot.lane.b32.xlu0 %v653, 1
        %v1299 = vpop.permute.xlu0 %1298
        %v1300 = vrot.slane %v1299, 6
        %v1301 = vsel %vm946, %v1300, %v1299
        %v1303 = vmul.f32 %v529, %v1301
        %1305 = vrot.lane.b32.xlu0 %v1297, 1
        %v1306 = vpop.permute.xlu0 %1305
        %v1307 = vrot.slane %v1306, 6
        %v1308 = vsel %vm946, %v1307, %v1306
        %v1310 = vmul.f32 %v536, %v1308
        %v1311 = vsub.f32 %v1303, %v1310
        %v1312 = vmul.f32 %v529, %v1308
        %v1313 = vmul.f32 %v536, %v1301
        %v1314 = vadd.f32 %v1312, %v1313
        %1315 = vrot.lane.b32.xlu0 %v1039, 125
        %v1316 = vpop.permute.xlu0 %1315
        %v1317 = vrot.slane %v1316, 2
        %v1318 = vsel %vm512, %v1316, %v1317
        %v1320 = vmul.f32 %v529, %v1318
        %1322 = vrot.lane.b32.xlu0 %v1320, 3
        %v1323 = vpop.permute.xlu0 %1322
        %v1324 = vrot.slane %v1323, 6
        %v1325 = vsel %vm805, %v1324, %v1323
        %v1327 = vadd.f32 %v1311, %v1325
        %1328 = vrot.lane.b32.xlu0 %v1040, 125
        %v1329 = vpop.permute.xlu0 %1328
        %v1330 = vrot.slane %v1329, 2
        %v1331 = vsel %vm512, %v1329, %v1330
        %v1333 = vmul.f32 %v536, %v1331
        %1335 = vrot.lane.b32.xlu0 %v1333, 3
        %v1336 = vpop.permute.xlu0 %1335
        %v1337 = vrot.slane %v1336, 6
        %v1338 = vsel %vm805, %v1337, %v1336
        %v1340 = vsub.f32 %v1327, %v1338
        %v1341 = vmul.f32 %v529, %v1331
        %1343 = vrot.lane.b32.xlu0 %v1341, 3
        %v1344 = vpop.permute.xlu0 %1343
        %v1345 = vrot.slane %v1344, 6
        %v1346 = vsel %vm805, %v1345, %v1344
        %v1348 = vadd.f32 %v1314, %v1346
        %v1349 = vmul.f32 %v536, %v1318
        %1351 = vrot.lane.b32.xlu0 %v1349, 3
        %v1352 = vpop.permute.xlu0 %1351
        %v1353 = vrot.slane %v1352, 6
        %v1354 = vsel %vm805, %v1353, %v1352
        %v1356 = vadd.f32 %v1348, %v1354
        %v1357 = vadd.f32 %v1340, %v1356
        %v1358 = vmul.f32 %v1357, 1.8889192e-05
        %v1359 = vmul.f32 %v1356, 0.00091483555
        %v1360 = vsub.f32 %v1358, %v1359
        %v1361 = vmul.f32 %v1340, 0.00087705714
        %v1362 = vadd.f32 %v1358, %v1361
        %1364 = vrot.lane.b32.xlu0 %v1360, 126
        %v1365 = vpop.permute.xlu0 %1364
        %v1366 = vrot.slane %v1365, 2
        %v1367 = vsel %vm498, %v1365, %v1366
        %v1369 = vadd.f32 %v1229, %v1367
        %1371 = vrot.lane.b32.xlu0 %v1362, 126
        %v1372 = vpop.permute.xlu0 %1371
        %v1373 = vrot.slane %v1372, 2
        %v1374 = vsel %vm498, %v1372, %v1373
        %v1376 = vadd.f32 %v1236, %v1374
        %v1377 = vmul.f32 %v596, %v1301
        %v1378 = vmul.f32 %v603, %v1308
        %v1379 = vsub.f32 %v1377, %v1378
        %v1380 = vmul.f32 %v596, %v1308
        %v1381 = vmul.f32 %v603, %v1301
        %v1382 = vadd.f32 %v1380, %v1381
        %v1383 = vmul.f32 %v596, %v1318
        %1385 = vrot.lane.b32.xlu0 %v1383, 3
        %v1386 = vpop.permute.xlu0 %1385
        %v1387 = vrot.slane %v1386, 6
        %v1388 = vsel %vm805, %v1387, %v1386
        %v1390 = vadd.f32 %v1379, %v1388
        %v1391 = vmul.f32 %v603, %v1331
        %1393 = vrot.lane.b32.xlu0 %v1391, 3
        %v1394 = vpop.permute.xlu0 %1393
        %v1395 = vrot.slane %v1394, 6
        %v1396 = vsel %vm805, %v1395, %v1394
        %v1398 = vsub.f32 %v1390, %v1396
        %v1399 = vmul.f32 %v596, %v1331
        %1401 = vrot.lane.b32.xlu0 %v1399, 3
        %v1402 = vpop.permute.xlu0 %1401
        %v1403 = vrot.slane %v1402, 6
        %v1404 = vsel %vm805, %v1403, %v1402
        %v1406 = vadd.f32 %v1382, %v1404
        %v1407 = vmul.f32 %v603, %v1318
        %1409 = vrot.lane.b32.xlu0 %v1407, 3
        %v1410 = vpop.permute.xlu0 %1409
        %v1411 = vrot.slane %v1410, 6
        %v1412 = vsel %vm805, %v1411, %v1410
        %v1414 = vadd.f32 %v1406, %v1412
        %v1415 = vadd.f32 %v1398, %v1414
        %v1416 = vmul.f32 %v1415, 1.8889192e-05
        %v1417 = vmul.f32 %v1414, 0.00091483555
        %v1418 = vsub.f32 %v1416, %v1417
        %v1419 = vmul.f32 %v1398, 0.00087705714
        %v1420 = vadd.f32 %v1416, %v1419
        %1422 = vrot.lane.b32.xlu0 %v1418, 126
        %v1423 = vpop.permute.xlu0 %1422
        %v1424 = vrot.slane %v1423, 2
        %v1425 = vsel %vm498, %v1423, %v1424
        %v1427 = vadd.f32 %v1287, %v1425
        %1429 = vrot.lane.b32.xlu0 %v1420, 126
        %v1430 = vpop.permute.xlu0 %1429
        %v1431 = vrot.slane %v1430, 2
        %v1432 = vsel %vm498, %v1430, %v1431
        %v1434 = vadd.f32 %v1294, %v1432
        %v1435 = vmul.f32 %v529, %v614
        %v1436 = vmul.f32 %v536, %v615
        %v1437 = vsub.f32 %v1435, %v1436
        %v1438 = vmul.f32 %v529, %v615
        %v1439 = vmul.f32 %v536, %v614
        %v1440 = vadd.f32 %v1438, %v1439
        %v1441 = vadd.f32 %v1437, %v1440
        %v1442 = vmul.f32 %v1441, 0.0005745565
        %v1443 = vmul.f32 %v1440, 0.002037364
        %v1444 = vsub.f32 %v1442, %v1443
        %v1445 = vmul.f32 %v1437, 0.0008882511
        %v1446 = vadd.f32 %v1442, %v1445
        %v1447 = vadd.f32 %v1369, %v1444
        %v1448 = vadd.f32 %v1376, %v1446
        %v1449 = vmul.f32 %v596, %v614
        %v1450 = vmul.f32 %v603, %v615
        %v1451 = vsub.f32 %v1449, %v1450
        %v1452 = vmul.f32 %v596, %v615
        %v1453 = vmul.f32 %v603, %v614
        %v1454 = vadd.f32 %v1452, %v1453
        %v1455 = vadd.f32 %v1451, %v1454
        %v1456 = vmul.f32 %v1455, 0.0005745565
        %v1457 = vmul.f32 %v1454, 0.002037364
        %v1458 = vsub.f32 %v1456, %v1457
        %v1459 = vmul.f32 %v1451, 0.0008882511
        %v1460 = vadd.f32 %v1456, %v1459
        %v1461 = vadd.f32 %v1427, %v1458
        %v1462 = vadd.f32 %v1434, %v1460
        %v1463 = vmul.f32 %v529, %v1039
        %v1464 = vmul.f32 %v536, %v1157
        %v1465 = vsub.f32 %v1463, %v1464
        %v1466 = vmul.f32 %v529, %v1157
        %v1467 = vmul.f32 %v536, %v1039
        %v1468 = vadd.f32 %v1466, %v1467
        %1469 = vrot.lane.b32.xlu0 %v614, 127
        %v1470 = vpop.permute.xlu0 %1469
        %v1471 = vrot.slane %v1470, 2
        %v1472 = vsel %vm480, %v1470, %v1471
        %v1474 = vmul.f32 %v529, %v1472
        %1476 = vrot.lane.b32.xlu0 %v1474, 1
        %v1477 = vpop.permute.xlu0 %1476
        %v1478 = vrot.slane %v1477, 6
        %v1479 = vsel %vm946, %v1478, %v1477
        %v1481 = vadd.f32 %v1465, %v1479
        %1482 = vrot.lane.b32.xlu0 %v615, 127
        %v1483 = vpop.permute.xlu0 %1482
        %v1484 = vrot.slane %v1483, 2
        %v1485 = vsel %vm480, %v1483, %v1484
        %v1487 = vmul.f32 %v536, %v1485
        %1489 = vrot.lane.b32.xlu0 %v1487, 1
        %v1490 = vpop.permute.xlu0 %1489
        %v1491 = vrot.slane %v1490, 6
        %v1492 = vsel %vm946, %v1491, %v1490
        %v1494 = vsub.f32 %v1481, %v1492
        %v1495 = vmul.f32 %v529, %v1485
        %1497 = vrot.lane.b32.xlu0 %v1495, 1
        %v1498 = vpop.permute.xlu0 %1497
        %v1499 = vrot.slane %v1498, 6
        %v1500 = vsel %vm946, %v1499, %v1498
        %v1502 = vadd.f32 %v1468, %v1500
        %v1503 = vmul.f32 %v536, %v1472
        %1505 = vrot.lane.b32.xlu0 %v1503, 1
        %v1506 = vpop.permute.xlu0 %1505
        %v1507 = vrot.slane %v1506, 6
        %v1508 = vsel %vm946, %v1507, %v1506
        %v1510 = vadd.f32 %v1502, %v1508
        %v1511 = vadd.f32 %v1494, %v1510
        %v1512 = vmul.f32 %v1511, -0.00075327896
        %v1513 = vmul.f32 %v1510, -0.0013488077
        %v1514 = vsub.f32 %v1512, %v1513
        %v1515 = vmul.f32 %v1494, 0.00015775021
        %v1516 = vadd.f32 %v1512, %v1515
        %1518 = vrot.lane.b32.xlu0 %v1514, 127
        %v1519 = vpop.permute.xlu0 %1518
        %v1520 = vrot.slane %v1519, 2
        %v1521 = vsel %vm480, %v1519, %v1520
        %v1523 = vadd.f32 %v1447, %v1521
        %1525 = vrot.lane.b32.xlu0 %v1516, 127
        %v1526 = vpop.permute.xlu0 %1525
        %v1527 = vrot.slane %v1526, 2
        %v1528 = vsel %vm480, %v1526, %v1527
        %v1530 = vadd.f32 %v1448, %v1528
        %v1531 = vmul.f32 %v596, %v1039
        %v1532 = vmul.f32 %v603, %v1157
        %v1533 = vsub.f32 %v1531, %v1532
        %v1534 = vmul.f32 %v596, %v1157
        %v1535 = vmul.f32 %v603, %v1039
        %v1536 = vadd.f32 %v1534, %v1535
        %v1537 = vmul.f32 %v596, %v1472
        %1539 = vrot.lane.b32.xlu0 %v1537, 1
        %v1540 = vpop.permute.xlu0 %1539
        %v1541 = vrot.slane %v1540, 6
        %v1542 = vsel %vm946, %v1541, %v1540
        %v1544 = vadd.f32 %v1533, %v1542
        %v1545 = vmul.f32 %v603, %v1485
        %1547 = vrot.lane.b32.xlu0 %v1545, 1
        %v1548 = vpop.permute.xlu0 %1547
        %v1549 = vrot.slane %v1548, 6
        %v1550 = vsel %vm946, %v1549, %v1548
        %v1552 = vsub.f32 %v1544, %v1550
        %v1553 = vmul.f32 %v596, %v1485
        %1555 = vrot.lane.b32.xlu0 %v1553, 1
        %v1556 = vpop.permute.xlu0 %1555
        %v1557 = vrot.slane %v1556, 6
        %v1558 = vsel %vm946, %v1557, %v1556
        %v1560 = vadd.f32 %v1536, %v1558
        %v1561 = vmul.f32 %v603, %v1472
        %1563 = vrot.lane.b32.xlu0 %v1561, 1
        %v1564 = vpop.permute.xlu0 %1563
        %v1565 = vrot.slane %v1564, 6
        %v1566 = vsel %vm946, %v1565, %v1564
        %v1568 = vadd.f32 %v1560, %v1566
        %v1569 = vadd.f32 %v1552, %v1568
        %v1570 = vmul.f32 %v1569, -0.00075327896
        %v1571 = vmul.f32 %v1568, -0.0013488077
        %v1572 = vsub.f32 %v1570, %v1571
        %v1573 = vmul.f32 %v1552, 0.00015775021
        %v1574 = vadd.f32 %v1570, %v1573
        %1576 = vrot.lane.b32.xlu0 %v1572, 127
        %v1577 = vpop.permute.xlu0 %1576
        %v1578 = vrot.slane %v1577, 2
        %v1579 = vsel %vm480, %v1577, %v1578
        %v1581 = vadd.f32 %v1461, %v1579
        %1583 = vrot.lane.b32.xlu0 %v1574, 127
        %v1584 = vpop.permute.xlu0 %1583
        %v1585 = vrot.slane %v1584, 2
        %v1586 = vsel %vm480, %v1584, %v1585
        %v1588 = vadd.f32 %v1462, %v1586
        %1589 = vrot.lane.b32.xlu0 %v529, 126
        %v1590 = vpop.permute.xlu0 %1589
        %v1591 = vrot.slane %v1590, 2
        %v1592 = vsel %vm498, %v1590, %v1591
        %v1594 = vmul.f32 %v529, %v1592
        %1595 = vrot.lane.b32.xlu0 %v536, 126
        %v1596 = vpop.permute.xlu0 %1595
        %v1597 = vrot.slane %v1596, 2
        %v1598 = vsel %vm498, %v1596, %v1597
        %v1600 = vmul.f32 %v536, %v1598
        %v1601 = vadd.f32 %v1594, %v1600
        %v1602 = vmul.f32 %v536, %v1592
        %v1603 = vmul.f32 %v529, %v1598
        %v1604 = vsub.f32 %v1602, %v1603
        %1605 = vrot.lane.b32.xlu0 %v596, 126
        %v1606 = vpop.permute.xlu0 %1605
        %v1607 = vrot.slane %v1606, 2
        %v1608 = vsel %vm498, %v1606, %v1607
        %v1610 = vmul.f32 %v596, %v1608
        %1611 = vrot.lane.b32.xlu0 %v603, 126
        %v1612 = vpop.permute.xlu0 %1611
        %v1613 = vrot.slane %v1612, 2
        %v1614 = vsel %vm498, %v1612, %v1613
        %v1616 = vmul.f32 %v603, %v1614
        %v1617 = vadd.f32 %v1610, %v1616
        %v1618 = vmul.f32 %v603, %v1608
        %v1619 = vmul.f32 %v596, %v1614
        %v1620 = vsub.f32 %v1618, %v1619
        %v1621 = vadd.f32 %v1601, %v1617
        %v1622 = vadd.f32 %v1604, %v1620
        %1624 = vrot.lane.b32.xlu0 %v1621, 2
        %v1625 = vpop.permute.xlu0 %1624
        %v1626 = vrot.slane %v1625, 6
        %v1627 = vsel %vm620, %v1626, %v1625
        %v1629 = vmul.f32 %v529, %v1627
        %1631 = vrot.lane.b32.xlu0 %v1622, 2
        %v1632 = vpop.permute.xlu0 %1631
        %v1633 = vrot.slane %v1632, 6
        %v1634 = vsel %vm620, %v1633, %v1632
        %v1636 = vmul.f32 %v536, %v1634
        %v1637 = vsub.f32 %v1629, %v1636
        %v1638 = vmul.f32 %v529, %v1634
        %v1639 = vmul.f32 %v536, %v1627
        %v1640 = vadd.f32 %v1638, %v1639
        %1641 = vrot.lane.b32.xlu0 %v614, 126
        %v1642 = vpop.permute.xlu0 %1641
        %v1643 = vrot.slane %v1642, 2
        %v1644 = vsel %vm498, %v1642, %v1643
        %v1646 = vmul.f32 %v529, %v1644
        %1648 = vrot.lane.b32.xlu0 %v1646, 2
        %v1649 = vpop.permute.xlu0 %1648
        %v1650 = vrot.slane %v1649, 6
        %v1651 = vsel %vm620, %v1650, %v1649
        %v1653 = vadd.f32 %v1637, %v1651
        %1654 = vrot.lane.b32.xlu0 %v615, 126
        %v1655 = vpop.permute.xlu0 %1654
        %v1656 = vrot.slane %v1655, 2
        %v1657 = vsel %vm498, %v1655, %v1656
        %v1659 = vmul.f32 %v536, %v1657
        %1661 = vrot.lane.b32.xlu0 %v1659, 2
        %v1662 = vpop.permute.xlu0 %1661
        %v1663 = vrot.slane %v1662, 6
        %v1664 = vsel %vm620, %v1663, %v1662
        %v1666 = vsub.f32 %v1653, %v1664
        %v1667 = vmul.f32 %v529, %v1657
        %1669 = vrot.lane.b32.xlu0 %v1667, 2
        %v1670 = vpop.permute.xlu0 %1669
        %v1671 = vrot.slane %v1670, 6
        %v1672 = vsel %vm620, %v1671, %v1670
        %v1674 = vadd.f32 %v1640, %v1672
        %v1675 = vmul.f32 %v536, %v1644
        %1677 = vrot.lane.b32.xlu0 %v1675, 2
        %v1678 = vpop.permute.xlu0 %1677
        %v1679 = vrot.slane %v1678, 6
        %v1680 = vsel %vm620, %v1679, %v1678
        %v1682 = vadd.f32 %v1674, %v1680
        %v1683 = vadd.f32 %v1666, %v1682
        %v1684 = vmul.f32 %v1683, 0.00023016623
        %v1685 = vmul.f32 %v1682, 0.0014394011
        %v1686 = vsub.f32 %v1684, %v1685
        %v1687 = vmul.f32 %v1666, 0.0009790686
        %v1688 = vadd.f32 %v1684, %v1687
        %1690 = vrot.lane.b32.xlu0 %v1686, 126
        %v1691 = vpop.permute.xlu0 %1690
        %v1692 = vrot.slane %v1691, 2
        %v1693 = vsel %vm498, %v1691, %v1692
        %v1695 = vadd.f32 %v1523, %v1693
        %1697 = vrot.lane.b32.xlu0 %v1688, 126
        %v1698 = vpop.permute.xlu0 %1697
        %v1699 = vrot.slane %v1698, 2
        %v1700 = vsel %vm498, %v1698, %v1699
        %v1702 = vadd.f32 %v1530, %v1700
        %v1703 = vmul.f32 %v596, %v1627
        %v1704 = vmul.f32 %v603, %v1634
        %v1705 = vsub.f32 %v1703, %v1704
        %v1706 = vmul.f32 %v596, %v1634
        %v1707 = vmul.f32 %v603, %v1627
        %v1708 = vadd.f32 %v1706, %v1707
        %v1709 = vmul.f32 %v596, %v1644
        %1711 = vrot.lane.b32.xlu0 %v1709, 2
        %v1712 = vpop.permute.xlu0 %1711
        %v1713 = vrot.slane %v1712, 6
        %v1714 = vsel %vm620, %v1713, %v1712
        %v1716 = vadd.f32 %v1705, %v1714
        %v1717 = vmul.f32 %v603, %v1657
        %1719 = vrot.lane.b32.xlu0 %v1717, 2
        %v1720 = vpop.permute.xlu0 %1719
        %v1721 = vrot.slane %v1720, 6
        %v1722 = vsel %vm620, %v1721, %v1720
        %v1724 = vsub.f32 %v1716, %v1722
        %v1725 = vmul.f32 %v596, %v1657
        %1727 = vrot.lane.b32.xlu0 %v1725, 2
        %v1728 = vpop.permute.xlu0 %1727
        %v1729 = vrot.slane %v1728, 6
        %v1730 = vsel %vm620, %v1729, %v1728
        %v1732 = vadd.f32 %v1708, %v1730
        %v1733 = vmul.f32 %v603, %v1644
        %1735 = vrot.lane.b32.xlu0 %v1733, 2
        %v1736 = vpop.permute.xlu0 %1735
        %v1737 = vrot.slane %v1736, 6
        %v1738 = vsel %vm620, %v1737, %v1736
        %v1740 = vadd.f32 %v1732, %v1738
        %v1741 = vadd.f32 %v1724, %v1740
        %v1742 = vmul.f32 %v1741, 0.00023016623
        %v1743 = vmul.f32 %v1740, 0.0014394011
        %v1744 = vsub.f32 %v1742, %v1743
        %v1745 = vmul.f32 %v1724, 0.0009790686
        %v1746 = vadd.f32 %v1742, %v1745
        %1748 = vrot.lane.b32.xlu0 %v1744, 126
        %v1749 = vpop.permute.xlu0 %1748
        %v1750 = vrot.slane %v1749, 2
        %v1751 = vsel %vm498, %v1749, %v1750
        %v1753 = vadd.f32 %v1581, %v1751
        %1755 = vrot.lane.b32.xlu0 %v1746, 126
        %v1756 = vpop.permute.xlu0 %1755
        %v1757 = vrot.slane %v1756, 2
        %v1758 = vsel %vm498, %v1756, %v1757
        %v1760 = vadd.f32 %v1588, %v1758
        %1761 = vrot.lane.b32.xlu0 %v1157, 127
        %v1762 = vpop.permute.xlu0 %1761
        %v1763 = vrot.slane %v1762, 2
        %v1764 = vsel %vm480, %v1762, %v1763
        %v1766 = vmul.f32 %v536, %v1764
        %v1767 = vsub.f32 %v1063, %v1766
        %v1768 = vmul.f32 %v529, %v1764
        %v1769 = vadd.f32 %v1768, %v1093
        %v1770 = vadd.f32 %v1767, %v1769
        %v1771 = vmul.f32 %v1770, -0.0014893437
        %v1772 = vmul.f32 %v1769, -1.3589975e-05
        %v1773 = vsub.f32 %v1771, %v1772
        %v1774 = vmul.f32 %v1767, 0.0029650973
        %v1775 = vadd.f32 %v1771, %v1774
        %1777 = vrot.lane.b32.xlu0 %v1773, 127
        %v1778 = vpop.permute.xlu0 %1777
        %v1779 = vrot.slane %v1778, 2
        %v1780 = vsel %vm480, %v1778, %v1779
        %v1782 = vadd.f32 %v1695, %v1780
        %1784 = vrot.lane.b32.xlu0 %v1775, 127
        %v1785 = vpop.permute.xlu0 %1784
        %v1786 = vrot.slane %v1785, 2
        %v1787 = vsel %vm480, %v1785, %v1786
        %v1789 = vadd.f32 %v1702, %v1787
        %v1790 = vmul.f32 %v603, %v1764
        %v1791 = vsub.f32 %v1115, %v1790
        %v1792 = vmul.f32 %v596, %v1764
        %v1793 = vadd.f32 %v1792, %v1139
        %v1794 = vadd.f32 %v1791, %v1793
        %v1795 = vmul.f32 %v1794, -0.0014893437
        %v1796 = vmul.f32 %v1793, -1.3589975e-05
        %v1797 = vsub.f32 %v1795, %v1796
        %v1798 = vmul.f32 %v1791, 0.0029650973
        %v1799 = vadd.f32 %v1795, %v1798
        %1801 = vrot.lane.b32.xlu0 %v1797, 127
        %v1802 = vpop.permute.xlu0 %1801
        %v1803 = vrot.slane %v1802, 2
        %v1804 = vsel %vm480, %v1802, %v1803
        %v1806 = vadd.f32 %v1753, %v1804
        %1808 = vrot.lane.b32.xlu0 %v1799, 127
        %v1809 = vpop.permute.xlu0 %1808
        %v1810 = vrot.slane %v1809, 2
        %v1811 = vsel %vm480, %v1809, %v1810
        %v1813 = vadd.f32 %v1760, %v1811
        %1815 = vset.pattern.permute.xlu0 0
        %1816 = vperm.xlu0 %1815, %v461
        %v1817 = vpop.permute.xlu0 %1816
        %v1821 = vunpack.c.l.s4 1983009808
        %v1822 = vunpack.c.0.s8 %v1821
        %v1823 = vlaneseq
        %v1824 = vshrl.u32 %v1823, 7
        %v1825 = vsub.s32 %v1822, %v1824
        %v1826 = vrot.slane %v1782, %v1825
        %v1827 = vcombine.high %v1826, %v1826
        %1828 = vrot.lane.b32.xlu0 %v1826, 126
        %v1829 = vpop.permute.xlu0 %1828
        %1830 = vrot.lane.b32.xlu0 %v1827, 126
        %v1831 = vpop.permute.xlu0 %1830
        %v1832 = vsel %vm498, %v1829, %v1831
        %v1835 = vmul.f32 %v1817, %v1832
        %v1836 = vmul.f32 %v1817, %v1831
        %v1839 = vcombine.low %v1835, %v1836
        %v1841 = vunpack.c.l.s4 1983009808
        %v1842 = vunpack.c.0.s8 %v1841
        %v1843 = vlaneseq
        %v1844 = vshrl.u32 %v1843, 7
        %v1845 = vsub.s32 %v1842, %v1844
        %v1846 = vrot.slane %v1839, %v1845
        %1847 = vrot.lane.b32.xlu0 %v1846, 2
        %v1848 = vpop.permute.xlu0 %1847
        %v1849 = vrot.slane %v1848, 6
        %v1850 = vsel %vm620, %v1849, %v1848
        %v1852 = vadd.f32 %v529, %v1850
        %v1855 = vunpack.c.l.s4 1983009808
        %v1856 = vunpack.c.0.s8 %v1855
        %v1857 = vlaneseq
        %v1858 = vshrl.u32 %v1857, 7
        %v1859 = vsub.s32 %v1856, %v1858
        %v1860 = vrot.slane %v1789, %v1859
        %v1861 = vcombine.high %v1860, %v1860
        %1862 = vrot.lane.b32.xlu0 %v1860, 126
        %v1863 = vpop.permute.xlu0 %1862
        %1864 = vrot.lane.b32.xlu0 %v1861, 126
        %v1865 = vpop.permute.xlu0 %1864
        %v1866 = vsel %vm498, %v1863, %v1865
        %v1869 = vmul.f32 %v1817, %v1866
        %v1870 = vmul.f32 %v1817, %v1865
        %v1873 = vcombine.low %v1869, %v1870
        %v1875 = vunpack.c.l.s4 1983009808
        %v1876 = vunpack.c.0.s8 %v1875
        %v1877 = vlaneseq
        %v1878 = vshrl.u32 %v1877, 7
        %v1879 = vsub.s32 %v1876, %v1878
        %v1880 = vrot.slane %v1873, %v1879
        %1881 = vrot.lane.b32.xlu0 %v1880, 2
        %v1882 = vpop.permute.xlu0 %1881
        %v1883 = vrot.slane %v1882, 6
        %v1884 = vsel %vm620, %v1883, %v1882
        %v1886 = vadd.f32 %v536, %v1884
        %v1889 = vunpack.c.l.s4 1983009808
        %v1890 = vunpack.c.0.s8 %v1889
        %v1891 = vlaneseq
        %v1892 = vshrl.u32 %v1891, 7
        %v1893 = vsub.s32 %v1890, %v1892
        %v1894 = vrot.slane %v1806, %v1893
        %v1895 = vcombine.high %v1894, %v1894
        %1896 = vrot.lane.b32.xlu0 %v1894, 126
        %v1897 = vpop.permute.xlu0 %1896
        %1898 = vrot.lane.b32.xlu0 %v1895, 126
        %v1899 = vpop.permute.xlu0 %1898
        %v1900 = vsel %vm498, %v1897, %v1899
        %v1903 = vmul.f32 %v1817, %v1900
        %v1904 = vmul.f32 %v1817, %v1899
        %v1907 = vcombine.low %v1903, %v1904
        %v1909 = vunpack.c.l.s4 1983009808
        %v1910 = vunpack.c.0.s8 %v1909
        %v1911 = vlaneseq
        %v1912 = vshrl.u32 %v1911, 7
        %v1913 = vsub.s32 %v1910, %v1912
        %v1914 = vrot.slane %v1907, %v1913
        %1915 = vrot.lane.b32.xlu0 %v1914, 2
        %v1916 = vpop.permute.xlu0 %1915
        %v1917 = vrot.slane %v1916, 6
        %v1918 = vsel %vm620, %v1917, %v1916
        %v1920 = vadd.f32 %v596, %v1918
        %v1923 = vunpack.c.l.s4 1983009808
        %v1924 = vunpack.c.0.s8 %v1923
        %v1925 = vlaneseq
        %v1926 = vshrl.u32 %v1925, 7
        %v1927 = vsub.s32 %v1924, %v1926
        %v1928 = vrot.slane %v1813, %v1927
        %v1929 = vcombine.high %v1928, %v1928
        %1930 = vrot.lane.b32.xlu0 %v1928, 126
        %v1931 = vpop.permute.xlu0 %1930
        %1932 = vrot.lane.b32.xlu0 %v1929, 126
        %v1933 = vpop.permute.xlu0 %1932
        %v1934 = vsel %vm498, %v1931, %v1933
        %v1937 = vmul.f32 %v1817, %v1934
        %v1938 = vmul.f32 %v1817, %v1933
        %v1941 = vcombine.low %v1937, %v1938
        %v1943 = vunpack.c.l.s4 1983009808
        %v1944 = vunpack.c.0.s8 %v1943
        %v1945 = vlaneseq
        %v1946 = vshrl.u32 %v1945, 7
        %v1947 = vsub.s32 %v1944, %v1946
        %v1948 = vrot.slane %v1941, %v1947
        %1949 = vrot.lane.b32.xlu0 %v1948, 2
        %v1950 = vpop.permute.xlu0 %1949
        %v1951 = vrot.slane %v1950, 6
        %v1952 = vsel %vm620, %v1951, %v1950
        %v1954 = vadd.f32 %v603, %v1952
        %v1955 = vadd.f32 %v1852, %v1886
        %v1956 = vmul.f32 %v1955, 0.0
        %v1957 = vmul.f32 %v1886, -7.266348e-11
        %v1958 = vsub.f32 %v1956, %v1957
        %v1959 = vmul.f32 %v1852, -7.266348e-11
        %v1960 = vadd.f32 %v1956, %v1959
        %v1961 = vmul.f32 %v1886, 4.980429e-10
        %v1962 = vsub.f32 %v1956, %v1961
        %v1963 = vmul.f32 %v1852, 4.980429e-10
        %v1964 = vadd.f32 %v1956, %v1963
        %1966 = vrot.lane.b32.xlu0 %v1962, 127
        %v1967 = vpop.permute.xlu0 %1966
        %v1968 = vrot.slane %v1967, 2
        %v1969 = vsel %vm480, %v1967, %v1968
        %v1971 = vadd.f32 %v1958, %v1969
        %1973 = vrot.lane.b32.xlu0 %v1964, 127
        %v1974 = vpop.permute.xlu0 %1973
        %v1975 = vrot.slane %v1974, 2
        %v1976 = vsel %vm480, %v1974, %v1975
        %v1978 = vadd.f32 %v1960, %v1976
        %v1979 = vsub.f32 %v1955, %v1886
        %v1980 = vmul.f32 %v1852, -1.0
        %v1981 = vadd.f32 %v1955, %v1980
        %1983 = vrot.lane.b32.xlu0 %v1979, 126
        %v1984 = vpop.permute.xlu0 %1983
        %v1985 = vrot.slane %v1984, 2
        %v1986 = vsel %vm498, %v1984, %v1985
        %v1988 = vadd.f32 %v1971, %v1986
        %1990 = vrot.lane.b32.xlu0 %v1981, 126
        %v1991 = vpop.permute.xlu0 %1990
        %v1992 = vrot.slane %v1991, 2
        %v1993 = vsel %vm498, %v1991, %v1992
        %v1995 = vadd.f32 %v1978, %v1993
        %1996 = vrot.lane.b32.xlu0 %v1962, 125
        %v1997 = vpop.permute.xlu0 %1996
        %v1998 = vrot.slane %v1997, 2
        %v1999 = vsel %vm512, %v1997, %v1998
        %v2001 = vadd.f32 %v1988, %v1999
        %2002 = vrot.lane.b32.xlu0 %v1964, 125
        %v2003 = vpop.permute.xlu0 %2002
        %v2004 = vrot.slane %v2003, 2
        %v2005 = vsel %vm512, %v2003, %v2004
        %v2007 = vadd.f32 %v1995, %v2005
        %2009 = vrot.lane.b32.xlu0 %v1958, 124
        %v2010 = vpop.permute.xlu0 %2009
        %v2011 = vrot.slane %v2010, 2
        %v2012 = vsel %vm526, %v2010, %v2011
        %v2014 = vadd.f32 %v2001, %v2012
        %2016 = vrot.lane.b32.xlu0 %v1960, 124
        %v2017 = vpop.permute.xlu0 %2016
        %v2018 = vrot.slane %v2017, 2
        %v2019 = vsel %vm526, %v2017, %v2018
        %v2021 = vadd.f32 %v2007, %v2019
        %v2022 = vadd.f32 %v1920, %v1954
        %v2023 = vmul.f32 %v2022, 0.0
        %v2024 = vmul.f32 %v1954, -7.266348e-11
        %v2025 = vsub.f32 %v2023, %v2024
        %v2026 = vmul.f32 %v1920, -7.266348e-11
        %v2027 = vadd.f32 %v2023, %v2026
        %v2028 = vmul.f32 %v1954, 4.980429e-10
        %v2029 = vsub.f32 %v2023, %v2028
        %v2030 = vmul.f32 %v1920, 4.980429e-10
        %v2031 = vadd.f32 %v2023, %v2030
        %2033 = vrot.lane.b32.xlu0 %v2029, 127
        %v2034 = vpop.permute.xlu0 %2033
        %v2035 = vrot.slane %v2034, 2
        %v2036 = vsel %vm480, %v2034, %v2035
        %v2038 = vadd.f32 %v2025, %v2036
        %2040 = vrot.lane.b32.xlu0 %v2031, 127
        %v2041 = vpop.permute.xlu0 %2040
        %v2042 = vrot.slane %v2041, 2
        %v2043 = vsel %vm480, %v2041, %v2042
        %v2045 = vadd.f32 %v2027, %v2043
        %v2046 = vsub.f32 %v2022, %v1954
        %v2047 = vmul.f32 %v1920, -1.0
        %v2048 = vadd.f32 %v2022, %v2047
        %2050 = vrot.lane.b32.xlu0 %v2046, 126
        %v2051 = vpop.permute.xlu0 %2050
        %v2052 = vrot.slane %v2051, 2
        %v2053 = vsel %vm498, %v2051, %v2052
        %v2055 = vadd.f32 %v2038, %v2053
        %2057 = vrot.lane.b32.xlu0 %v2048, 126
        %v2058 = vpop.permute.xlu0 %2057
        %v2059 = vrot.slane %v2058, 2
        %v2060 = vsel %vm498, %v2058, %v2059
        %v2062 = vadd.f32 %v2045, %v2060
        %2063 = vrot.lane.b32.xlu0 %v2029, 125
        %v2064 = vpop.permute.xlu0 %2063
        %v2065 = vrot.slane %v2064, 2
        %v2066 = vsel %vm512, %v2064, %v2065
        %v2068 = vadd.f32 %v2055, %v2066
        %2069 = vrot.lane.b32.xlu0 %v2031, 125
        %v2070 = vpop.permute.xlu0 %2069
        %v2071 = vrot.slane %v2070, 2
        %v2072 = vsel %vm512, %v2070, %v2071
        %v2074 = vadd.f32 %v2062, %v2072
        %2076 = vrot.lane.b32.xlu0 %v2025, 124
        %v2077 = vpop.permute.xlu0 %2076
        %v2078 = vrot.slane %v2077, 2
        %v2079 = vsel %vm526, %v2077, %v2078
        %v2081 = vadd.f32 %v2068, %v2079
        %2083 = vrot.lane.b32.xlu0 %v2027, 124
        %v2084 = vpop.permute.xlu0 %2083
        %v2085 = vrot.slane %v2084, 2
        %v2086 = vsel %vm526, %v2084, %v2085
        %v2088 = vadd.f32 %v2074, %v2086
        %v2089 = vmul.f32 %v2014, %v2014
        %v2090 = vmul.f32 %v2021, %v2021
        %v2091 = vadd.f32 %v2089, %v2090
        %v2092 = vmul.f32 %v2021, %v2014
        %v2093 = vsub.f32 %v2092, %v2092
        %v2094 = vmul.f32 %v2081, %v2081
        %v2095 = vmul.f32 %v2088, %v2088
        %v2096 = vadd.f32 %v2094, %v2095
        %v2097 = vmul.f32 %v2088, %v2081
        %v2098 = vsub.f32 %v2097, %v2097
        %v2099 = vadd.f32 %v2091, %v2096
        %v2100 = vadd.f32 %v2093, %v2098
        %2102 = vrot.lane.b32.xlu0 %v2014, 2
        %v2103 = vpop.permute.xlu0 %2102
        %v2104 = vrot.slane %v2103, 6
        %v2105 = vsel %vm620, %v2104, %v2103
        %v2107 = vmul.f32 %v2014, %v2105
        %2109 = vrot.lane.b32.xlu0 %v2021, 2
        %v2110 = vpop.permute.xlu0 %2109
        %v2111 = vrot.slane %v2110, 6
        %v2112 = vsel %vm620, %v2111, %v2110
        %v2114 = vmul.f32 %v2021, %v2112
        %v2115 = vadd.f32 %v2107, %v2114
        %v2116 = vmul.f32 %v2021, %v2105
        %v2117 = vmul.f32 %v2014, %v2112
        %v2118 = vsub.f32 %v2116, %v2117
        %2120 = vrot.lane.b32.xlu0 %v2081, 2
        %v2121 = vpop.permute.xlu0 %2120
        %v2122 = vrot.slane %v2121, 6
        %v2123 = vsel %vm620, %v2122, %v2121
        %v2125 = vmul.f32 %v2081, %v2123
        %2127 = vrot.lane.b32.xlu0 %v2088, 2
        %v2128 = vpop.permute.xlu0 %2127
        %v2129 = vrot.slane %v2128, 6
        %v2130 = vsel %vm620, %v2129, %v2128
        %v2132 = vmul.f32 %v2088, %v2130
        %v2133 = vadd.f32 %v2125, %v2132
        %v2134 = vmul.f32 %v2088, %v2123
        %v2135 = vmul.f32 %v2081, %v2130
        %v2136 = vsub.f32 %v2134, %v2135
        %v2137 = vadd.f32 %v2115, %v2133
        %v2138 = vadd.f32 %v2118, %v2136
        %2140 = vrot.lane.b32.xlu0 %v2099, 2
        %v2141 = vpop.permute.xlu0 %2140
        %v2142 = vrot.slane %v2141, 6
        %v2143 = vsel %vm620, %v2142, %v2141
        %v2145 = vmul.f32 %v2014, %v2143
        %2147 = vrot.lane.b32.xlu0 %v2100, 2
        %v2148 = vpop.permute.xlu0 %2147
        %v2149 = vrot.slane %v2148, 6
        %v2150 = vsel %vm620, %v2149, %v2148
        %v2152 = vmul.f32 %v2021, %v2150
        %v2153 = vsub.f32 %v2145, %v2152
        %v2154 = vmul.f32 %v2014, %v2150
        %v2155 = vmul.f32 %v2021, %v2143
        %v2156 = vadd.f32 %v2154, %v2155
        %2158 = vrot.lane.b32.xlu0 %v2137, 126
        %v2159 = vpop.permute.xlu0 %2158
        %v2160 = vrot.slane %v2159, 2
        %v2161 = vsel %vm498, %v2159, %v2160
        %v2163 = vmul.f32 %v2014, %v2161
        %2165 = vrot.lane.b32.xlu0 %v2163, 2
        %v2166 = vpop.permute.xlu0 %2165
        %v2167 = vrot.slane %v2166, 6
        %v2168 = vsel %vm620, %v2167, %v2166
        %v2170 = vadd.f32 %v2153, %v2168
        %2172 = vrot.lane.b32.xlu0 %v2138, 126
        %v2173 = vpop.permute.xlu0 %2172
        %v2174 = vrot.slane %v2173, 2
        %v2175 = vsel %vm498, %v2173, %v2174
        %v2177 = vmul.f32 %v2021, %v2175
        %2179 = vrot.lane.b32.xlu0 %v2177, 2
        %v2180 = vpop.permute.xlu0 %2179
        %v2181 = vrot.slane %v2180, 6
        %v2182 = vsel %vm620, %v2181, %v2180
        %v2184 = vsub.f32 %v2170, %v2182
        %v2185 = vmul.f32 %v2014, %v2175
        %2187 = vrot.lane.b32.xlu0 %v2185, 2
        %v2188 = vpop.permute.xlu0 %2187
        %v2189 = vrot.slane %v2188, 6
        %v2190 = vsel %vm620, %v2189, %v2188
        %v2192 = vadd.f32 %v2156, %v2190
        %v2193 = vmul.f32 %v2021, %v2161
        %2195 = vrot.lane.b32.xlu0 %v2193, 2
        %v2196 = vpop.permute.xlu0 %2195
        %v2197 = vrot.slane %v2196, 6
        %v2198 = vsel %vm620, %v2197, %v2196
        %v2200 = vadd.f32 %v2192, %v2198
        %v2201 = vadd.f32 %v2184, %v2200
        %v2202 = vmul.f32 %v2201, 0.001295636
        %v2203 = vmul.f32 %v2200, 0.0006736923
        %v2204 = vsub.f32 %v2202, %v2203
        %v2205 = vmul.f32 %v2184, -0.0019175796
        %v2206 = vadd.f32 %v2202, %v2205
        %v2207 = vmul.f32 %v2081, %v2143
        %v2208 = vmul.f32 %v2088, %v2150
        %v2209 = vsub.f32 %v2207, %v2208
        %v2210 = vmul.f32 %v2081, %v2150
        %v2211 = vmul.f32 %v2088, %v2143
        %v2212 = vadd.f32 %v2210, %v2211
        %v2213 = vmul.f32 %v2081, %v2161
        %2215 = vrot.lane.b32.xlu0 %v2213, 2
        %v2216 = vpop.permute.xlu0 %2215
        %v2217 = vrot.slane %v2216, 6
        %v2218 = vsel %vm620, %v2217, %v2216
        %v2220 = vadd.f32 %v2209, %v2218
        %v2221 = vmul.f32 %v2088, %v2175
        %2223 = vrot.lane.b32.xlu0 %v2221, 2
        %v2224 = vpop.permute.xlu0 %2223
        %v2225 = vrot.slane %v2224, 6
        %v2226 = vsel %vm620, %v2225, %v2224
        %v2228 = vsub.f32 %v2220, %v2226
        %v2229 = vmul.f32 %v2081, %v2175
        %2231 = vrot.lane.b32.xlu0 %v2229, 2
        %v2232 = vpop.permute.xlu0 %2231
        %v2233 = vrot.slane %v2232, 6
        %v2234 = vsel %vm620, %v2233, %v2232
        %v2236 = vadd.f32 %v2212, %v2234
        %v2237 = vmul.f32 %v2088, %v2161
        %2239 = vrot.lane.b32.xlu0 %v2237, 2
        %v2240 = vpop.permute.xlu0 %2239
        %v2241 = vrot.slane %v2240, 6
        %v2242 = vsel %vm620, %v2241, %v2240
        %v2244 = vadd.f32 %v2236, %v2242
        %v2245 = vadd.f32 %v2228, %v2244
        %v2246 = vmul.f32 %v2245, 0.001295636
        %v2247 = vmul.f32 %v2244, 0.0006736923
        %v2248 = vsub.f32 %v2246, %v2247
        %v2249 = vmul.f32 %v2228, -0.0019175796
        %v2250 = vadd.f32 %v2246, %v2249
        %2251 = vrot.lane.b32.xlu0 %v2014, 127
        %v2252 = vpop.permute.xlu0 %2251
        %v2253 = vrot.slane %v2252, 2
        %v2254 = vsel %vm480, %v2252, %v2253
        %v2256 = vmul.f32 %v2014, %v2254
        %2257 = vrot.lane.b32.xlu0 %v2021, 127
        %v2258 = vpop.permute.xlu0 %2257
        %v2259 = vrot.slane %v2258, 2
        %v2260 = vsel %vm480, %v2258, %v2259
        %v2262 = vmul.f32 %v2021, %v2260
        %v2263 = vadd.f32 %v2256, %v2262
        %v2264 = vmul.f32 %v2021, %v2254
        %v2265 = vmul.f32 %v2014, %v2260
        %v2266 = vsub.f32 %v2264, %v2265
        %2267 = vrot.lane.b32.xlu0 %v2081, 127
        %v2268 = vpop.permute.xlu0 %2267
        %v2269 = vrot.slane %v2268, 2
        %v2270 = vsel %vm480, %v2268, %v2269
        %v2272 = vmul.f32 %v2081, %v2270
        %2273 = vrot.lane.b32.xlu0 %v2088, 127
        %v2274 = vpop.permute.xlu0 %2273
        %v2275 = vrot.slane %v2274, 2
        %v2276 = vsel %vm480, %v2274, %v2275
        %v2278 = vmul.f32 %v2088, %v2276
        %v2279 = vadd.f32 %v2272, %v2278
        %v2280 = vmul.f32 %v2088, %v2270
        %v2281 = vmul.f32 %v2081, %v2276
        %v2282 = vsub.f32 %v2280, %v2281
        %v2283 = vadd.f32 %v2263, %v2279
        %v2284 = vadd.f32 %v2266, %v2282
        %2286 = vrot.lane.b32.xlu0 %v2283, 3
        %v2287 = vpop.permute.xlu0 %2286
        %v2288 = vrot.slane %v2287, 6
        %v2289 = vsel %vm805, %v2288, %v2287
        %v2291 = vmul.f32 %v2014, %v2289
        %2293 = vrot.lane.b32.xlu0 %v2284, 3
        %v2294 = vpop.permute.xlu0 %2293
        %v2295 = vrot.slane %v2294, 6
        %v2296 = vsel %vm805, %v2295, %v2294
        %v2298 = vmul.f32 %v2021, %v2296
        %v2299 = vsub.f32 %v2291, %v2298
        %v2300 = vmul.f32 %v2014, %v2296
        %v2301 = vmul.f32 %v2021, %v2289
        %v2302 = vadd.f32 %v2300, %v2301
        %2303 = vrot.lane.b32.xlu0 %v2137, 125
        %v2304 = vpop.permute.xlu0 %2303
        %v2305 = vrot.slane %v2304, 2
        %v2306 = vsel %vm512, %v2304, %v2305
        %v2308 = vmul.f32 %v2014, %v2306
        %2310 = vrot.lane.b32.xlu0 %v2308, 3
        %v2311 = vpop.permute.xlu0 %2310
        %v2312 = vrot.slane %v2311, 6
        %v2313 = vsel %vm805, %v2312, %v2311
        %v2315 = vadd.f32 %v2299, %v2313
        %2316 = vrot.lane.b32.xlu0 %v2138, 125
        %v2317 = vpop.permute.xlu0 %2316
        %v2318 = vrot.slane %v2317, 2
        %v2319 = vsel %vm512, %v2317, %v2318
        %v2321 = vmul.f32 %v2021, %v2319
        %2323 = vrot.lane.b32.xlu0 %v2321, 3
        %v2324 = vpop.permute.xlu0 %2323
        %v2325 = vrot.slane %v2324, 6
        %v2326 = vsel %vm805, %v2325, %v2324
        %v2328 = vsub.f32 %v2315, %v2326
        %v2329 = vmul.f32 %v2014, %v2319
        %2331 = vrot.lane.b32.xlu0 %v2329, 3
        %v2332 = vpop.permute.xlu0 %2331
        %v2333 = vrot.slane %v2332, 6
        %v2334 = vsel %vm805, %v2333, %v2332
        %v2336 = vadd.f32 %v2302, %v2334
        %v2337 = vmul.f32 %v2021, %v2306
        %2339 = vrot.lane.b32.xlu0 %v2337, 3
        %v2340 = vpop.permute.xlu0 %2339
        %v2341 = vrot.slane %v2340, 6
        %v2342 = vsel %vm805, %v2341, %v2340
        %v2344 = vadd.f32 %v2336, %v2342
        %v2345 = vadd.f32 %v2328, %v2344
        %v2346 = vmul.f32 %v2345, 0.0013550106
        %v2347 = vmul.f32 %v2344, 0.0019798146
        %v2348 = vsub.f32 %v2346, %v2347
        %v2349 = vmul.f32 %v2328, -0.00073020643
        %v2350 = vadd.f32 %v2346, %v2349
        %2352 = vrot.lane.b32.xlu0 %v2348, 127
        %v2353 = vpop.permute.xlu0 %2352
        %v2354 = vrot.slane %v2353, 2
        %v2355 = vsel %vm480, %v2353, %v2354
        %v2357 = vadd.f32 %v2204, %v2355
        %2359 = vrot.lane.b32.xlu0 %v2350, 127
        %v2360 = vpop.permute.xlu0 %2359
        %v2361 = vrot.slane %v2360, 2
        %v2362 = vsel %vm480, %v2360, %v2361
        %v2364 = vadd.f32 %v2206, %v2362
        %v2365 = vmul.f32 %v2081, %v2289
        %v2366 = vmul.f32 %v2088, %v2296
        %v2367 = vsub.f32 %v2365, %v2366
        %v2368 = vmul.f32 %v2081, %v2296
        %v2369 = vmul.f32 %v2088, %v2289
        %v2370 = vadd.f32 %v2368, %v2369
        %v2371 = vmul.f32 %v2081, %v2306
        %2373 = vrot.lane.b32.xlu0 %v2371, 3
        %v2374 = vpop.permute.xlu0 %2373
        %v2375 = vrot.slane %v2374, 6
        %v2376 = vsel %vm805, %v2375, %v2374
        %v2378 = vadd.f32 %v2367, %v2376
        %v2379 = vmul.f32 %v2088, %v2319
        %2381 = vrot.lane.b32.xlu0 %v2379, 3
        %v2382 = vpop.permute.xlu0 %2381
        %v2383 = vrot.slane %v2382, 6
        %v2384 = vsel %vm805, %v2383, %v2382
        %v2386 = vsub.f32 %v2378, %v2384
        %v2387 = vmul.f32 %v2081, %v2319
        %2389 = vrot.lane.b32.xlu0 %v2387, 3
        %v2390 = vpop.permute.xlu0 %2389
        %v2391 = vrot.slane %v2390, 6
        %v2392 = vsel %vm805, %v2391, %v2390
        %v2394 = vadd.f32 %v2370, %v2392
        %v2395 = vmul.f32 %v2088, %v2306
        %2397 = vrot.lane.b32.xlu0 %v2395, 3
        %v2398 = vpop.permute.xlu0 %2397
        %v2399 = vrot.slane %v2398, 6
        %v2400 = vsel %vm805, %v2399, %v2398
        %v2402 = vadd.f32 %v2394, %v2400
        %v2403 = vadd.f32 %v2386, %v2402
        %v2404 = vmul.f32 %v2403, 0.0013550106
        %v2405 = vmul.f32 %v2402, 0.0019798146
        %v2406 = vsub.f32 %v2404, %v2405
        %v2407 = vmul.f32 %v2386, -0.00073020643
        %v2408 = vadd.f32 %v2404, %v2407
        %2410 = vrot.lane.b32.xlu0 %v2406, 127
        %v2411 = vpop.permute.xlu0 %2410
        %v2412 = vrot.slane %v2411, 2
        %v2413 = vsel %vm480, %v2411, %v2412
        %v2415 = vadd.f32 %v2248, %v2413
        %2417 = vrot.lane.b32.xlu0 %v2408, 127
        %v2418 = vpop.permute.xlu0 %2417
        %v2419 = vrot.slane %v2418, 2
        %v2420 = vsel %vm480, %v2418, %v2419
        %v2422 = vadd.f32 %v2250, %v2420
        %v2423 = vsub.f32 %v2265, %v2264
        %v2424 = vsub.f32 %v2281, %v2280
        %v2425 = vadd.f32 %v2423, %v2424
        %2426 = vrot.lane.b32.xlu0 %v2283, 1
        %v2427 = vpop.permute.xlu0 %2426
        %v2428 = vrot.slane %v2427, 6
        %v2429 = vsel %vm946, %v2428, %v2427
        %v2431 = vmul.f32 %v2014, %v2429
        %2433 = vrot.lane.b32.xlu0 %v2425, 1
        %v2434 = vpop.permute.xlu0 %2433
        %v2435 = vrot.slane %v2434, 6
        %v2436 = vsel %vm946, %v2435, %v2434
        %v2438 = vmul.f32 %v2021, %v2436
        %v2439 = vsub.f32 %v2431, %v2438
        %v2440 = vmul.f32 %v2014, %v2436
        %v2441 = vmul.f32 %v2021, %v2429
        %v2442 = vadd.f32 %v2440, %v2441
        %v2443 = vadd.f32 %v2439, %v2442
        %v2444 = vmul.f32 %v2443, -0.0004096056
        %v2445 = vmul.f32 %v2442, 0.0012724721
        %v2446 = vsub.f32 %v2444, %v2445
        %v2447 = vmul.f32 %v2439, 0.0020916832
        %v2448 = vadd.f32 %v2444, %v2447
        %2450 = vrot.lane.b32.xlu0 %v2446, 1
        %v2451 = vpop.permute.xlu0 %2450
        %v2452 = vrot.slane %v2451, 6
        %v2453 = vsel %vm946, %v2452, %v2451
        %v2455 = vadd.f32 %v2357, %v2453
        %2457 = vrot.lane.b32.xlu0 %v2448, 1
        %v2458 = vpop.permute.xlu0 %2457
        %v2459 = vrot.slane %v2458, 6
        %v2460 = vsel %vm946, %v2459, %v2458
        %v2462 = vadd.f32 %v2364, %v2460
        %v2463 = vmul.f32 %v2081, %v2429
        %v2464 = vmul.f32 %v2088, %v2436
        %v2465 = vsub.f32 %v2463, %v2464
        %v2466 = vmul.f32 %v2081, %v2436
        %v2467 = vmul.f32 %v2088, %v2429
        %v2468 = vadd.f32 %v2466, %v2467
        %v2469 = vadd.f32 %v2465, %v2468
        %v2470 = vmul.f32 %v2469, -0.0004096056
        %v2471 = vmul.f32 %v2468, 0.0012724721
        %v2472 = vsub.f32 %v2470, %v2471
        %v2473 = vmul.f32 %v2465, 0.0020916832
        %v2474 = vadd.f32 %v2470, %v2473
        %2476 = vrot.lane.b32.xlu0 %v2472, 1
        %v2477 = vpop.permute.xlu0 %2476
        %v2478 = vrot.slane %v2477, 6
        %v2479 = vsel %vm946, %v2478, %v2477
        %v2481 = vadd.f32 %v2415, %v2479
        %2483 = vrot.lane.b32.xlu0 %v2474, 1
        %v2484 = vpop.permute.xlu0 %2483
        %v2485 = vrot.slane %v2484, 6
        %v2486 = vsel %vm946, %v2485, %v2484
        %v2488 = vadd.f32 %v2422, %v2486
        %2489 = vrot.lane.b32.xlu0 %v2014, 1
        %v2490 = vpop.permute.xlu0 %2489
        %v2491 = vrot.slane %v2490, 6
        %v2492 = vsel %vm946, %v2491, %v2490
        %v2494 = vmul.f32 %v2014, %v2492
        %2495 = vrot.lane.b32.xlu0 %v2021, 1
        %v2496 = vpop.permute.xlu0 %2495
        %v2497 = vrot.slane %v2496, 6
        %v2498 = vsel %vm946, %v2497, %v2496
        %v2500 = vmul.f32 %v2021, %v2498
        %v2501 = vadd.f32 %v2494, %v2500
        %v2502 = vmul.f32 %v2021, %v2492
        %v2503 = vmul.f32 %v2014, %v2498
        %v2504 = vsub.f32 %v2502, %v2503
        %2505 = vrot.lane.b32.xlu0 %v2081, 1
        %v2506 = vpop.permute.xlu0 %2505
        %v2507 = vrot.slane %v2506, 6
        %v2508 = vsel %vm946, %v2507, %v2506
        %v2510 = vmul.f32 %v2081, %v2508
        %2511 = vrot.lane.b32.xlu0 %v2088, 1
        %v2512 = vpop.permute.xlu0 %2511
        %v2513 = vrot.slane %v2512, 6
        %v2514 = vsel %vm946, %v2513, %v2512
        %v2516 = vmul.f32 %v2088, %v2514
        %v2517 = vadd.f32 %v2510, %v2516
        %v2518 = vmul.f32 %v2088, %v2508
        %v2519 = vmul.f32 %v2081, %v2514
        %v2520 = vsub.f32 %v2518, %v2519
        %v2521 = vadd.f32 %v2501, %v2517
        %v2522 = vadd.f32 %v2504, %v2520
        %2523 = vrot.lane.b32.xlu0 %v2099, 1
        %v2524 = vpop.permute.xlu0 %2523
        %v2525 = vrot.slane %v2524, 6
        %v2526 = vsel %vm946, %v2525, %v2524
        %v2528 = vmul.f32 %v2014, %v2526
        %2529 = vrot.lane.b32.xlu0 %v2100, 1
        %v2530 = vpop.permute.xlu0 %2529
        %v2531 = vrot.slane %v2530, 6
        %v2532 = vsel %vm946, %v2531, %v2530
        %v2534 = vmul.f32 %v2021, %v2532
        %v2535 = vsub.f32 %v2528, %v2534
        %v2536 = vmul.f32 %v2014, %v2532
        %v2537 = vmul.f32 %v2021, %v2526
        %v2538 = vadd.f32 %v2536, %v2537
        %2540 = vrot.lane.b32.xlu0 %v2521, 127
        %v2541 = vpop.permute.xlu0 %2540
        %v2542 = vrot.slane %v2541, 2
        %v2543 = vsel %vm480, %v2541, %v2542
        %v2545 = vmul.f32 %v2014, %v2543
        %2547 = vrot.lane.b32.xlu0 %v2545, 1
        %v2548 = vpop.permute.xlu0 %2547
        %v2549 = vrot.slane %v2548, 6
        %v2550 = vsel %vm946, %v2549, %v2548
        %v2552 = vadd.f32 %v2535, %v2550
        %2554 = vrot.lane.b32.xlu0 %v2522, 127
        %v2555 = vpop.permute.xlu0 %2554
        %v2556 = vrot.slane %v2555, 2
        %v2557 = vsel %vm480, %v2555, %v2556
        %v2559 = vmul.f32 %v2021, %v2557
        %2561 = vrot.lane.b32.xlu0 %v2559, 1
        %v2562 = vpop.permute.xlu0 %2561
        %v2563 = vrot.slane %v2562, 6
        %v2564 = vsel %vm946, %v2563, %v2562
        %v2566 = vsub.f32 %v2552, %v2564
        %v2567 = vmul.f32 %v2014, %v2557
        %2569 = vrot.lane.b32.xlu0 %v2567, 1
        %v2570 = vpop.permute.xlu0 %2569
        %v2571 = vrot.slane %v2570, 6
        %v2572 = vsel %vm946, %v2571, %v2570
        %v2574 = vadd.f32 %v2538, %v2572
        %v2575 = vmul.f32 %v2021, %v2543
        %2577 = vrot.lane.b32.xlu0 %v2575, 1
        %v2578 = vpop.permute.xlu0 %2577
        %v2579 = vrot.slane %v2578, 6
        %v2580 = vsel %vm946, %v2579, %v2578
        %v2582 = vadd.f32 %v2574, %v2580
        %v2583 = vadd.f32 %v2566, %v2582
        %v2584 = vmul.f32 %v2583, -0.0007718855
        %v2585 = vmul.f32 %v2582, -0.0015798984
        %v2586 = vsub.f32 %v2584, %v2585
        %v2587 = vmul.f32 %v2566, -3.612734e-05
        %v2588 = vadd.f32 %v2584, %v2587
        %v2589 = vadd.f32 %v2455, %v2586
        %v2590 = vadd.f32 %v2462, %v2588
        %v2591 = vmul.f32 %v2081, %v2526
        %v2592 = vmul.f32 %v2088, %v2532
        %v2593 = vsub.f32 %v2591, %v2592
        %v2594 = vmul.f32 %v2081, %v2532
        %v2595 = vmul.f32 %v2088, %v2526
        %v2596 = vadd.f32 %v2594, %v2595
        %v2597 = vmul.f32 %v2081, %v2543
        %2599 = vrot.lane.b32.xlu0 %v2597, 1
        %v2600 = vpop.permute.xlu0 %2599
        %v2601 = vrot.slane %v2600, 6
        %v2602 = vsel %vm946, %v2601, %v2600
        %v2604 = vadd.f32 %v2593, %v2602
        %v2605 = vmul.f32 %v2088, %v2557
        %2607 = vrot.lane.b32.xlu0 %v2605, 1
        %v2608 = vpop.permute.xlu0 %2607
        %v2609 = vrot.slane %v2608, 6
        %v2610 = vsel %vm946, %v2609, %v2608
        %v2612 = vsub.f32 %v2604, %v2610
        %v2613 = vmul.f32 %v2081, %v2557
        %2615 = vrot.lane.b32.xlu0 %v2613, 1
        %v2616 = vpop.permute.xlu0 %2615
        %v2617 = vrot.slane %v2616, 6
        %v2618 = vsel %vm946, %v2617, %v2616
        %v2620 = vadd.f32 %v2596, %v2618
        %v2621 = vmul.f32 %v2088, %v2543
        %2623 = vrot.lane.b32.xlu0 %v2621, 1
        %v2624 = vpop.permute.xlu0 %2623
        %v2625 = vrot.slane %v2624, 6
        %v2626 = vsel %vm946, %v2625, %v2624
        %v2628 = vadd.f32 %v2620, %v2626
        %v2629 = vadd.f32 %v2612, %v2628
        %v2630 = vmul.f32 %v2629, -0.0007718855
        %v2631 = vmul.f32 %v2628, -0.0015798984
        %v2632 = vsub.f32 %v2630, %v2631
        %v2633 = vmul.f32 %v2612, -3.612734e-05
        %v2634 = vadd.f32 %v2630, %v2633
        %v2635 = vadd.f32 %v2481, %v2632
        %v2636 = vadd.f32 %v2488, %v2634
        %v2637 = vsub.f32 %v2503, %v2502
        %v2638 = vsub.f32 %v2519, %v2518
        %v2639 = vadd.f32 %v2637, %v2638
        %2640 = vrot.lane.b32.xlu0 %v2521, 1
        %v2641 = vpop.permute.xlu0 %2640
        %v2642 = vrot.slane %v2641, 6
        %v2643 = vsel %vm946, %v2642, %v2641
        %v2645 = vmul.f32 %v2014, %v2643
        %2647 = vrot.lane.b32.xlu0 %v2639, 1
        %v2648 = vpop.permute.xlu0 %2647
        %v2649 = vrot.slane %v2648, 6
        %v2650 = vsel %vm946, %v2649, %v2648
        %v2652 = vmul.f32 %v2021, %v2650
        %v2653 = vsub.f32 %v2645, %v2652
        %v2654 = vmul.f32 %v2014, %v2650
        %v2655 = vmul.f32 %v2021, %v2643
        %v2656 = vadd.f32 %v2654, %v2655
        %2657 = vrot.lane.b32.xlu0 %v2521, 126
        %v2658 = vpop.permute.xlu0 %2657
        %v2659 = vrot.slane %v2658, 2
        %v2660 = vsel %vm498, %v2658, %v2659
        %v2662 = vmul.f32 %v2014, %v2660
        %2664 = vrot.lane.b32.xlu0 %v2662, 2
        %v2665 = vpop.permute.xlu0 %2664
        %v2666 = vrot.slane %v2665, 6
        %v2667 = vsel %vm620, %v2666, %v2665
        %v2669 = vadd.f32 %v2653, %v2667
        %2670 = vrot.lane.b32.xlu0 %v2522, 126
        %v2671 = vpop.permute.xlu0 %2670
        %v2672 = vrot.slane %v2671, 2
        %v2673 = vsel %vm498, %v2671, %v2672
        %v2675 = vmul.f32 %v2021, %v2673
        %2677 = vrot.lane.b32.xlu0 %v2675, 2
        %v2678 = vpop.permute.xlu0 %2677
        %v2679 = vrot.slane %v2678, 6
        %v2680 = vsel %vm620, %v2679, %v2678
        %v2682 = vsub.f32 %v2669, %v2680
        %v2683 = vmul.f32 %v2014, %v2673
        %2685 = vrot.lane.b32.xlu0 %v2683, 2
        %v2686 = vpop.permute.xlu0 %2685
        %v2687 = vrot.slane %v2686, 6
        %v2688 = vsel %vm620, %v2687, %v2686
        %v2690 = vadd.f32 %v2656, %v2688
        %v2691 = vmul.f32 %v2021, %v2660
        %2693 = vrot.lane.b32.xlu0 %v2691, 2
        %v2694 = vpop.permute.xlu0 %2693
        %v2695 = vrot.slane %v2694, 6
        %v2696 = vsel %vm620, %v2695, %v2694
        %v2698 = vadd.f32 %v2690, %v2696
        %v2699 = vadd.f32 %v2682, %v2698
        %v2700 = vmul.f32 %v2699, 0.00038094172
        %v2701 = vmul.f32 %v2698, -0.0019852764
        %v2702 = vsub.f32 %v2700, %v2701
        %v2703 = vmul.f32 %v2682, -0.0027471597
        %v2704 = vadd.f32 %v2700, %v2703
        %2706 = vrot.lane.b32.xlu0 %v2702, 127
        %v2707 = vpop.permute.xlu0 %2706
        %v2708 = vrot.slane %v2707, 2
        %v2709 = vsel %vm480, %v2707, %v2708
        %v2711 = vadd.f32 %v2589, %v2709
        %2713 = vrot.lane.b32.xlu0 %v2704, 127
        %v2714 = vpop.permute.xlu0 %2713
        %v2715 = vrot.slane %v2714, 2
        %v2716 = vsel %vm480, %v2714, %v2715
        %v2718 = vadd.f32 %v2590, %v2716
        %v2719 = vmul.f32 %v2081, %v2643
        %v2720 = vmul.f32 %v2088, %v2650
        %v2721 = vsub.f32 %v2719, %v2720
        %v2722 = vmul.f32 %v2081, %v2650
        %v2723 = vmul.f32 %v2088, %v2643
        %v2724 = vadd.f32 %v2722, %v2723
        %v2725 = vmul.f32 %v2081, %v2660
        %2727 = vrot.lane.b32.xlu0 %v2725, 2
        %v2728 = vpop.permute.xlu0 %2727
        %v2729 = vrot.slane %v2728, 6
        %v2730 = vsel %vm620, %v2729, %v2728
        %v2732 = vadd.f32 %v2721, %v2730
        %v2733 = vmul.f32 %v2088, %v2673
        %2735 = vrot.lane.b32.xlu0 %v2733, 2
        %v2736 = vpop.permute.xlu0 %2735
        %v2737 = vrot.slane %v2736, 6
        %v2738 = vsel %vm620, %v2737, %v2736
        %v2740 = vsub.f32 %v2732, %v2738
        %v2741 = vmul.f32 %v2081, %v2673
        %2743 = vrot.lane.b32.xlu0 %v2741, 2
        %v2744 = vpop.permute.xlu0 %2743
        %v2745 = vrot.slane %v2744, 6
        %v2746 = vsel %vm620, %v2745, %v2744
        %v2748 = vadd.f32 %v2724, %v2746
        %v2749 = vmul.f32 %v2088, %v2660
        %2751 = vrot.lane.b32.xlu0 %v2749, 2
        %v2752 = vpop.permute.xlu0 %2751
        %v2753 = vrot.slane %v2752, 6
        %v2754 = vsel %vm620, %v2753, %v2752
        %v2756 = vadd.f32 %v2748, %v2754
        %v2757 = vadd.f32 %v2740, %v2756
        %v2758 = vmul.f32 %v2757, 0.00038094172
        %v2759 = vmul.f32 %v2756, -0.0019852764
        %v2760 = vsub.f32 %v2758, %v2759
        %v2761 = vmul.f32 %v2740, -0.0027471597
        %v2762 = vadd.f32 %v2758, %v2761
        %2764 = vrot.lane.b32.xlu0 %v2760, 127
        %v2765 = vpop.permute.xlu0 %2764
        %v2766 = vrot.slane %v2765, 2
        %v2767 = vsel %vm480, %v2765, %v2766
        %v2769 = vadd.f32 %v2635, %v2767
        %2771 = vrot.lane.b32.xlu0 %v2762, 127
        %v2772 = vpop.permute.xlu0 %2771
        %v2773 = vrot.slane %v2772, 2
        %v2774 = vsel %vm480, %v2772, %v2773
        %v2776 = vadd.f32 %v2636, %v2774
        %v2777 = vsub.f32 %v2117, %v2116
        %v2778 = vsub.f32 %v2135, %v2134
        %v2779 = vadd.f32 %v2777, %v2778
        %2780 = vrot.lane.b32.xlu0 %v2137, 1
        %v2781 = vpop.permute.xlu0 %2780
        %v2782 = vrot.slane %v2781, 6
        %v2783 = vsel %vm946, %v2782, %v2781
        %v2785 = vmul.f32 %v2014, %v2783
        %2787 = vrot.lane.b32.xlu0 %v2779, 1
        %v2788 = vpop.permute.xlu0 %2787
        %v2789 = vrot.slane %v2788, 6
        %v2790 = vsel %vm946, %v2789, %v2788
        %v2792 = vmul.f32 %v2021, %v2790
        %v2793 = vsub.f32 %v2785, %v2792
        %v2794 = vmul.f32 %v2014, %v2790
        %v2795 = vmul.f32 %v2021, %v2783
        %v2796 = vadd.f32 %v2794, %v2795
        %2797 = vrot.lane.b32.xlu0 %v2521, 125
        %v2798 = vpop.permute.xlu0 %2797
        %v2799 = vrot.slane %v2798, 2
        %v2800 = vsel %vm512, %v2798, %v2799
        %v2802 = vmul.f32 %v2014, %v2800
        %2804 = vrot.lane.b32.xlu0 %v2802, 3
        %v2805 = vpop.permute.xlu0 %2804
        %v2806 = vrot.slane %v2805, 6
        %v2807 = vsel %vm805, %v2806, %v2805
        %v2809 = vadd.f32 %v2793, %v2807
        %2810 = vrot.lane.b32.xlu0 %v2522, 125
        %v2811 = vpop.permute.xlu0 %2810
        %v2812 = vrot.slane %v2811, 2
        %v2813 = vsel %vm512, %v2811, %v2812
        %v2815 = vmul.f32 %v2021, %v2813
        %2817 = vrot.lane.b32.xlu0 %v2815, 3
        %v2818 = vpop.permute.xlu0 %2817
        %v2819 = vrot.slane %v2818, 6
        %v2820 = vsel %vm805, %v2819, %v2818
        %v2822 = vsub.f32 %v2809, %v2820
        %v2823 = vmul.f32 %v2014, %v2813
        %2825 = vrot.lane.b32.xlu0 %v2823, 3
        %v2826 = vpop.permute.xlu0 %2825
        %v2827 = vrot.slane %v2826, 6
        %v2828 = vsel %vm805, %v2827, %v2826
        %v2830 = vadd.f32 %v2796, %v2828
        %v2831 = vmul.f32 %v2021, %v2800
        %2833 = vrot.lane.b32.xlu0 %v2831, 3
        %v2834 = vpop.permute.xlu0 %2833
        %v2835 = vrot.slane %v2834, 6
        %v2836 = vsel %vm805, %v2835, %v2834
        %v2838 = vadd.f32 %v2830, %v2836
        %v2839 = vadd.f32 %v2822, %v2838
        %v2840 = vmul.f32 %v2839, 1.8889192e-05
        %v2841 = vmul.f32 %v2838, 0.00091483555
        %v2842 = vsub.f32 %v2840, %v2841
        %v2843 = vmul.f32 %v2822, 0.00087705714
        %v2844 = vadd.f32 %v2840, %v2843
        %2846 = vrot.lane.b32.xlu0 %v2842, 126
        %v2847 = vpop.permute.xlu0 %2846
        %v2848 = vrot.slane %v2847, 2
        %v2849 = vsel %vm498, %v2847, %v2848
        %v2851 = vadd.f32 %v2711, %v2849
        %2853 = vrot.lane.b32.xlu0 %v2844, 126
        %v2854 = vpop.permute.xlu0 %2853
        %v2855 = vrot.slane %v2854, 2
        %v2856 = vsel %vm498, %v2854, %v2855
        %v2858 = vadd.f32 %v2718, %v2856
        %v2859 = vmul.f32 %v2081, %v2783
        %v2860 = vmul.f32 %v2088, %v2790
        %v2861 = vsub.f32 %v2859, %v2860
        %v2862 = vmul.f32 %v2081, %v2790
        %v2863 = vmul.f32 %v2088, %v2783
        %v2864 = vadd.f32 %v2862, %v2863
        %v2865 = vmul.f32 %v2081, %v2800
        %2867 = vrot.lane.b32.xlu0 %v2865, 3
        %v2868 = vpop.permute.xlu0 %2867
        %v2869 = vrot.slane %v2868, 6
        %v2870 = vsel %vm805, %v2869, %v2868
        %v2872 = vadd.f32 %v2861, %v2870
        %v2873 = vmul.f32 %v2088, %v2813
        %2875 = vrot.lane.b32.xlu0 %v2873, 3
        %v2876 = vpop.permute.xlu0 %2875
        %v2877 = vrot.slane %v2876, 6
        %v2878 = vsel %vm805, %v2877, %v2876
        %v2880 = vsub.f32 %v2872, %v2878
        %v2881 = vmul.f32 %v2081, %v2813
        %2883 = vrot.lane.b32.xlu0 %v2881, 3
        %v2884 = vpop.permute.xlu0 %2883
        %v2885 = vrot.slane %v2884, 6
        %v2886 = vsel %vm805, %v2885, %v2884
        %v2888 = vadd.f32 %v2864, %v2886
        %v2889 = vmul.f32 %v2088, %v2800
        %2891 = vrot.lane.b32.xlu0 %v2889, 3
        %v2892 = vpop.permute.xlu0 %2891
        %v2893 = vrot.slane %v2892, 6
        %v2894 = vsel %vm805, %v2893, %v2892
        %v2896 = vadd.f32 %v2888, %v2894
        %v2897 = vadd.f32 %v2880, %v2896
        %v2898 = vmul.f32 %v2897, 1.8889192e-05
        %v2899 = vmul.f32 %v2896, 0.00091483555
        %v2900 = vsub.f32 %v2898, %v2899
        %v2901 = vmul.f32 %v2880, 0.00087705714
        %v2902 = vadd.f32 %v2898, %v2901
        %2904 = vrot.lane.b32.xlu0 %v2900, 126
        %v2905 = vpop.permute.xlu0 %2904
        %v2906 = vrot.slane %v2905, 2
        %v2907 = vsel %vm498, %v2905, %v2906
        %v2909 = vadd.f32 %v2769, %v2907
        %2911 = vrot.lane.b32.xlu0 %v2902, 126
        %v2912 = vpop.permute.xlu0 %2911
        %v2913 = vrot.slane %v2912, 2
        %v2914 = vsel %vm498, %v2912, %v2913
        %v2916 = vadd.f32 %v2776, %v2914
        %v2917 = vmul.f32 %v2014, %v2099
        %v2918 = vmul.f32 %v2021, %v2100
        %v2919 = vsub.f32 %v2917, %v2918
        %v2920 = vmul.f32 %v2014, %v2100
        %v2921 = vmul.f32 %v2021, %v2099
        %v2922 = vadd.f32 %v2920, %v2921
        %v2923 = vadd.f32 %v2919, %v2922
        %v2924 = vmul.f32 %v2923, 0.0005745565
        %v2925 = vmul.f32 %v2922, 0.002037364
        %v2926 = vsub.f32 %v2924, %v2925
        %v2927 = vmul.f32 %v2919, 0.0008882511
        %v2928 = vadd.f32 %v2924, %v2927
        %v2929 = vadd.f32 %v2851, %v2926
        %v2930 = vadd.f32 %v2858, %v2928
        %v2931 = vmul.f32 %v2081, %v2099
        %v2932 = vmul.f32 %v2088, %v2100
        %v2933 = vsub.f32 %v2931, %v2932
        %v2934 = vmul.f32 %v2081, %v2100
        %v2935 = vmul.f32 %v2088, %v2099
        %v2936 = vadd.f32 %v2934, %v2935
        %v2937 = vadd.f32 %v2933, %v2936
        %v2938 = vmul.f32 %v2937, 0.0005745565
        %v2939 = vmul.f32 %v2936, 0.002037364
        %v2940 = vsub.f32 %v2938, %v2939
        %v2941 = vmul.f32 %v2933, 0.0008882511
        %v2942 = vadd.f32 %v2938, %v2941
        %v2943 = vadd.f32 %v2909, %v2940
        %v2944 = vadd.f32 %v2916, %v2942
        %v2945 = vmul.f32 %v2014, %v2521
        %v2946 = vmul.f32 %v2021, %v2639
        %v2947 = vsub.f32 %v2945, %v2946
        %v2948 = vmul.f32 %v2014, %v2639
        %v2949 = vmul.f32 %v2021, %v2521
        %v2950 = vadd.f32 %v2948, %v2949
        %2951 = vrot.lane.b32.xlu0 %v2099, 127
        %v2952 = vpop.permute.xlu0 %2951
        %v2953 = vrot.slane %v2952, 2
        %v2954 = vsel %vm480, %v2952, %v2953
        %v2956 = vmul.f32 %v2014, %v2954
        %2958 = vrot.lane.b32.xlu0 %v2956, 1
        %v2959 = vpop.permute.xlu0 %2958
        %v2960 = vrot.slane %v2959, 6
        %v2961 = vsel %vm946, %v2960, %v2959
        %v2963 = vadd.f32 %v2947, %v2961
        %2964 = vrot.lane.b32.xlu0 %v2100, 127
        %v2965 = vpop.permute.xlu0 %2964
        %v2966 = vrot.slane %v2965, 2
        %v2967 = vsel %vm480, %v2965, %v2966
        %v2969 = vmul.f32 %v2021, %v2967
        %2971 = vrot.lane.b32.xlu0 %v2969, 1
        %v2972 = vpop.permute.xlu0 %2971
        %v2973 = vrot.slane %v2972, 6
        %v2974 = vsel %vm946, %v2973, %v2972
        %v2976 = vsub.f32 %v2963, %v2974
        %v2977 = vmul.f32 %v2014, %v2967
        %2979 = vrot.lane.b32.xlu0 %v2977, 1
        %v2980 = vpop.permute.xlu0 %2979
        %v2981 = vrot.slane %v2980, 6
        %v2982 = vsel %vm946, %v2981, %v2980
        %v2984 = vadd.f32 %v2950, %v2982
        %v2985 = vmul.f32 %v2021, %v2954
        %2987 = vrot.lane.b32.xlu0 %v2985, 1
        %v2988 = vpop.permute.xlu0 %2987
        %v2989 = vrot.slane %v2988, 6
        %v2990 = vsel %vm946, %v2989, %v2988
        %v2992 = vadd.f32 %v2984, %v2990
        %v2993 = vadd.f32 %v2976, %v2992
        %v2994 = vmul.f32 %v2993, -0.00075327896
        %v2995 = vmul.f32 %v2992, -0.0013488077
        %v2996 = vsub.f32 %v2994, %v2995
        %v2997 = vmul.f32 %v2976, 0.00015775021
        %v2998 = vadd.f32 %v2994, %v2997
        %3000 = vrot.lane.b32.xlu0 %v2996, 127
        %v3001 = vpop.permute.xlu0 %3000
        %v3002 = vrot.slane %v3001, 2
        %v3003 = vsel %vm480, %v3001, %v3002
        %v3005 = vadd.f32 %v2929, %v3003
        %3007 = vrot.lane.b32.xlu0 %v2998, 127
        %v3008 = vpop.permute.xlu0 %3007
        %v3009 = vrot.slane %v3008, 2
        %v3010 = vsel %vm480, %v3008, %v3009
        %v3012 = vadd.f32 %v2930, %v3010
        %v3013 = vmul.f32 %v2081, %v2521
        %v3014 = vmul.f32 %v2088, %v2639
        %v3015 = vsub.f32 %v3013, %v3014
        %v3016 = vmul.f32 %v2081, %v2639
        %v3017 = vmul.f32 %v2088, %v2521
        %v3018 = vadd.f32 %v3016, %v3017
        %v3019 = vmul.f32 %v2081, %v2954
        %3021 = vrot.lane.b32.xlu0 %v3019, 1
        %v3022 = vpop.permute.xlu0 %3021
        %v3023 = vrot.slane %v3022, 6
        %v3024 = vsel %vm946, %v3023, %v3022
        %v3026 = vadd.f32 %v3015, %v3024
        %v3027 = vmul.f32 %v2088, %v2967
        %3029 = vrot.lane.b32.xlu0 %v3027, 1
        %v3030 = vpop.permute.xlu0 %3029
        %v3031 = vrot.slane %v3030, 6
        %v3032 = vsel %vm946, %v3031, %v3030
        %v3034 = vsub.f32 %v3026, %v3032
        %v3035 = vmul.f32 %v2081, %v2967
        %3037 = vrot.lane.b32.xlu0 %v3035, 1
        %v3038 = vpop.permute.xlu0 %3037
        %v3039 = vrot.slane %v3038, 6
        %v3040 = vsel %vm946, %v3039, %v3038
        %v3042 = vadd.f32 %v3018, %v3040
        %v3043 = vmul.f32 %v2088, %v2954
        %3045 = vrot.lane.b32.xlu0 %v3043, 1
        %v3046 = vpop.permute.xlu0 %3045
        %v3047 = vrot.slane %v3046, 6
        %v3048 = vsel %vm946, %v3047, %v3046
        %v3050 = vadd.f32 %v3042, %v3048
        %v3051 = vadd.f32 %v3034, %v3050
        %v3052 = vmul.f32 %v3051, -0.00075327896
        %v3053 = vmul.f32 %v3050, -0.0013488077
        %v3054 = vsub.f32 %v3052, %v3053
        %v3055 = vmul.f32 %v3034, 0.00015775021
        %v3056 = vadd.f32 %v3052, %v3055
        %3058 = vrot.lane.b32.xlu0 %v3054, 127
        %v3059 = vpop.permute.xlu0 %3058
        %v3060 = vrot.slane %v3059, 2
        %v3061 = vsel %vm480, %v3059, %v3060
        %v3063 = vadd.f32 %v2943, %v3061
        %3065 = vrot.lane.b32.xlu0 %v3056, 127
        %v3066 = vpop.permute.xlu0 %3065
        %v3067 = vrot.slane %v3066, 2
        %v3068 = vsel %vm480, %v3066, %v3067
        %v3070 = vadd.f32 %v2944, %v3068
        %3071 = vrot.lane.b32.xlu0 %v2014, 126
        %v3072 = vpop.permute.xlu0 %3071
        %v3073 = vrot.slane %v3072, 2
        %v3074 = vsel %vm498, %v3072, %v3073
        %v3076 = vmul.f32 %v2014, %v3074
        %3077 = vrot.lane.b32.xlu0 %v2021, 126
        %v3078 = vpop.permute.xlu0 %3077
        %v3079 = vrot.slane %v3078, 2
        %v3080 = vsel %vm498, %v3078, %v3079
        %v3082 = vmul.f32 %v2021, %v3080
        %v3083 = vadd.f32 %v3076, %v3082
        %v3084 = vmul.f32 %v2021, %v3074
        %v3085 = vmul.f32 %v2014, %v3080
        %v3086 = vsub.f32 %v3084, %v3085
        %3087 = vrot.lane.b32.xlu0 %v2081, 126
        %v3088 = vpop.permute.xlu0 %3087
        %v3089 = vrot.slane %v3088, 2
        %v3090 = vsel %vm498, %v3088, %v3089
        %v3092 = vmul.f32 %v2081, %v3090
        %3093 = vrot.lane.b32.xlu0 %v2088, 126
        %v3094 = vpop.permute.xlu0 %3093
        %v3095 = vrot.slane %v3094, 2
        %v3096 = vsel %vm498, %v3094, %v3095
        %v3098 = vmul.f32 %v2088, %v3096
        %v3099 = vadd.f32 %v3092, %v3098
        %v3100 = vmul.f32 %v2088, %v3090
        %v3101 = vmul.f32 %v2081, %v3096
        %v3102 = vsub.f32 %v3100, %v3101
        %v3103 = vadd.f32 %v3083, %v3099
        %v3104 = vadd.f32 %v3086, %v3102
        %3106 = vrot.lane.b32.xlu0 %v3103, 2
        %v3107 = vpop.permute.xlu0 %3106
        %v3108 = vrot.slane %v3107, 6
        %v3109 = vsel %vm620, %v3108, %v3107
        %v3111 = vmul.f32 %v2014, %v3109
        %3113 = vrot.lane.b32.xlu0 %v3104, 2
        %v3114 = vpop.permute.xlu0 %3113
        %v3115 = vrot.slane %v3114, 6
        %v3116 = vsel %vm620, %v3115, %v3114
        %v3118 = vmul.f32 %v2021, %v3116
        %v3119 = vsub.f32 %v3111, %v3118
        %v3120 = vmul.f32 %v2014, %v3116
        %v3121 = vmul.f32 %v2021, %v3109
        %v3122 = vadd.f32 %v3120, %v3121
        %3123 = vrot.lane.b32.xlu0 %v2099, 126
        %v3124 = vpop.permute.xlu0 %3123
        %v3125 = vrot.slane %v3124, 2
        %v3126 = vsel %vm498, %v3124, %v3125
        %v3128 = vmul.f32 %v2014, %v3126
        %3130 = vrot.lane.b32.xlu0 %v3128, 2
        %v3131 = vpop.permute.xlu0 %3130
        %v3132 = vrot.slane %v3131, 6
        %v3133 = vsel %vm620, %v3132, %v3131
        %v3135 = vadd.f32 %v3119, %v3133
        %3136 = vrot.lane.b32.xlu0 %v2100, 126
        %v3137 = vpop.permute.xlu0 %3136
        %v3138 = vrot.slane %v3137, 2
        %v3139 = vsel %vm498, %v3137, %v3138
        %v3141 = vmul.f32 %v2021, %v3139
        %3143 = vrot.lane.b32.xlu0 %v3141, 2
        %v3144 = vpop.permute.xlu0 %3143
        %v3145 = vrot.slane %v3144, 6
        %v3146 = vsel %vm620, %v3145, %v3144
        %v3148 = vsub.f32 %v3135, %v3146
        %v3149 = vmul.f32 %v2014, %v3139
        %3151 = vrot.lane.b32.xlu0 %v3149, 2
        %v3152 = vpop.permute.xlu0 %3151
        %v3153 = vrot.slane %v3152, 6
        %v3154 = vsel %vm620, %v3153, %v3152
        %v3156 = vadd.f32 %v3122, %v3154
        %v3157 = vmul.f32 %v2021, %v3126
        %3159 = vrot.lane.b32.xlu0 %v3157, 2
        %v3160 = vpop.permute.xlu0 %3159
        %v3161 = vrot.slane %v3160, 6
        %v3162 = vsel %vm620, %v3161, %v3160
        %v3164 = vadd.f32 %v3156, %v3162
        %v3165 = vadd.f32 %v3148, %v3164
        %v3166 = vmul.f32 %v3165, 0.00023016623
        %v3167 = vmul.f32 %v3164, 0.0014394011
        %v3168 = vsub.f32 %v3166, %v3167
        %v3169 = vmul.f32 %v3148, 0.0009790686
        %v3170 = vadd.f32 %v3166, %v3169
        %3172 = vrot.lane.b32.xlu0 %v3168, 126
        %v3173 = vpop.permute.xlu0 %3172
        %v3174 = vrot.slane %v3173, 2
        %v3175 = vsel %vm498, %v3173, %v3174
        %v3177 = vadd.f32 %v3005, %v3175
        %3179 = vrot.lane.b32.xlu0 %v3170, 126
        %v3180 = vpop.permute.xlu0 %3179
        %v3181 = vrot.slane %v3180, 2
        %v3182 = vsel %vm498, %v3180, %v3181
        %v3184 = vadd.f32 %v3012, %v3182
        %v3185 = vmul.f32 %v2081, %v3109
        %v3186 = vmul.f32 %v2088, %v3116
        %v3187 = vsub.f32 %v3185, %v3186
        %v3188 = vmul.f32 %v2081, %v3116
        %v3189 = vmul.f32 %v2088, %v3109
        %v3190 = vadd.f32 %v3188, %v3189
        %v3191 = vmul.f32 %v2081, %v3126
        %3193 = vrot.lane.b32.xlu0 %v3191, 2
        %v3194 = vpop.permute.xlu0 %3193
        %v3195 = vrot.slane %v3194, 6
        %v3196 = vsel %vm620, %v3195, %v3194
        %v3198 = vadd.f32 %v3187, %v3196
        %v3199 = vmul.f32 %v2088, %v3139
        %3201 = vrot.lane.b32.xlu0 %v3199, 2
        %v3202 = vpop.permute.xlu0 %3201
        %v3203 = vrot.slane %v3202, 6
        %v3204 = vsel %vm620, %v3203, %v3202
        %v3206 = vsub.f32 %v3198, %v3204
        %v3207 = vmul.f32 %v2081, %v3139
        %3209 = vrot.lane.b32.xlu0 %v3207, 2
        %v3210 = vpop.permute.xlu0 %3209
        %v3211 = vrot.slane %v3210, 6
        %v3212 = vsel %vm620, %v3211, %v3210
        %v3214 = vadd.f32 %v3190, %v3212
        %v3215 = vmul.f32 %v2088, %v3126
        %3217 = vrot.lane.b32.xlu0 %v3215, 2
        %v3218 = vpop.permute.xlu0 %3217
        %v3219 = vrot.slane %v3218, 6
        %v3220 = vsel %vm620, %v3219, %v3218
        %v3222 = vadd.f32 %v3214, %v3220
        %v3223 = vadd.f32 %v3206, %v3222
        %v3224 = vmul.f32 %v3223, 0.00023016623
        %v3225 = vmul.f32 %v3222, 0.0014394011
        %v3226 = vsub.f32 %v3224, %v3225
        %v3227 = vmul.f32 %v3206, 0.0009790686
        %v3228 = vadd.f32 %v3224, %v3227
        %3230 = vrot.lane.b32.xlu0 %v3226, 126
        %v3231 = vpop.permute.xlu0 %3230
        %v3232 = vrot.slane %v3231, 2
        %v3233 = vsel %vm498, %v3231, %v3232
        %v3235 = vadd.f32 %v3063, %v3233
        %3237 = vrot.lane.b32.xlu0 %v3228, 126
        %v3238 = vpop.permute.xlu0 %3237
        %v3239 = vrot.slane %v3238, 2
        %v3240 = vsel %vm498, %v3238, %v3239
        %v3242 = vadd.f32 %v3070, %v3240
        %3243 = vrot.lane.b32.xlu0 %v2639, 127
        %v3244 = vpop.permute.xlu0 %3243
        %v3245 = vrot.slane %v3244, 2
        %v3246 = vsel %vm480, %v3244, %v3245
        %v3248 = vmul.f32 %v2021, %v3246
        %v3249 = vsub.f32 %v2545, %v3248
        %v3250 = vmul.f32 %v2014, %v3246
        %v3251 = vadd.f32 %v3250, %v2575
        %v3252 = vadd.f32 %v3249, %v3251
        %v3253 = vmul.f32 %v3252, -0.0014893437
        %v3254 = vmul.f32 %v3251, -1.3589975e-05
        %v3255 = vsub.f32 %v3253, %v3254
        %v3256 = vmul.f32 %v3249, 0.0029650973
        %v3257 = vadd.f32 %v3253, %v3256
        %3259 = vrot.lane.b32.xlu0 %v3255, 127
        %v3260 = vpop.permute.xlu0 %3259
        %v3261 = vrot.slane %v3260, 2
        %v3262 = vsel %vm480, %v3260, %v3261
        %v3264 = vadd.f32 %v3177, %v3262
        %3266 = vrot.lane.b32.xlu0 %v3257, 127
        %v3267 = vpop.permute.xlu0 %3266
        %v3268 = vrot.slane %v3267, 2
        %v3269 = vsel %vm480, %v3267, %v3268
        %v3271 = vadd.f32 %v3184, %v3269
        %v3272 = vmul.f32 %v2088, %v3246
        %v3273 = vsub.f32 %v2597, %v3272
        %v3274 = vmul.f32 %v2081, %v3246
        %v3275 = vadd.f32 %v3274, %v2621
        %v3276 = vadd.f32 %v3273, %v3275
        %v3277 = vmul.f32 %v3276, -0.0014893437
        %v3278 = vmul.f32 %v3275, -1.3589975e-05
        %v3279 = vsub.f32 %v3277, %v3278
        %v3280 = vmul.f32 %v3273, 0.0029650973
        %v3281 = vadd.f32 %v3277, %v3280
        %3283 = vrot.lane.b32.xlu0 %v3279, 127
        %v3284 = vpop.permute.xlu0 %3283
        %v3285 = vrot.slane %v3284, 2
        %v3286 = vsel %vm480, %v3284, %v3285
        %v3288 = vadd.f32 %v3235, %v3286
        %3290 = vrot.lane.b32.xlu0 %v3281, 127
        %v3291 = vpop.permute.xlu0 %3290
        %v3292 = vrot.slane %v3291, 2
        %v3293 = vsel %vm480, %v3291, %v3292
        %v3295 = vadd.f32 %v3242, %v3293
        %v3298 = vunpack.c.l.s4 1983009808
        %v3299 = vunpack.c.0.s8 %v3298
        %v3300 = vlaneseq
        %v3301 = vshrl.u32 %v3300, 7
        %v3302 = vsub.s32 %v3299, %v3301
        %v3303 = vrot.slane %v3264, %v3302
        %v3304 = vcombine.high %v3303, %v3303
        %3305 = vrot.lane.b32.xlu0 %v3303, 124
        %v3306 = vpop.permute.xlu0 %3305
        %3307 = vrot.lane.b32.xlu0 %v3304, 124
        %v3308 = vpop.permute.xlu0 %3307
        %v3309 = vsel %vm526, %v3306, %v3308
        %v3311 = vmul.f32 %v1817, %v3309
        %v3314 = vunpack.c.l.s4 1983009808
        %v3315 = vunpack.c.0.s8 %v3314
        %v3316 = vlaneseq
        %v3317 = vshrl.u32 %v3316, 7
        %v3318 = vsub.s32 %v3315, %v3317
        %v3319 = vrot.slane %v3311, %v3318
        %3320 = vrot.lane.b32.xlu0 %v3319, 4
        %v3321 = vpop.permute.xlu0 %3320
        %v3322 = vrot.slane %v3321, 6
        %vm3323 = vcmask 31744
        %v3324 = vsel %vm3323, %v3322, %v3321
        %v3326 = vadd.f32 %v2014, %v3324
        %v3329 = vunpack.c.l.s4 1983009808
        %v3330 = vunpack.c.0.s8 %v3329
        %v3331 = vlaneseq
        %v3332 = vshrl.u32 %v3331, 7
        %v3333 = vsub.s32 %v3330, %v3332
        %v3334 = vrot.slane %v3271, %v3333
        %v3335 = vcombine.high %v3334, %v3334
        %3336 = vrot.lane.b32.xlu0 %v3334, 124
        %v3337 = vpop.permute.xlu0 %3336
        %3338 = vrot.lane.b32.xlu0 %v3335, 124
        %v3339 = vpop.permute.xlu0 %3338
        %v3340 = vsel %vm526, %v3337, %v3339
        %v3342 = vmul.f32 %v1817, %v3340
        %v3345 = vunpack.c.l.s4 1983009808
        %v3346 = vunpack.c.0.s8 %v3345
        %v3347 = vlaneseq
        %v3348 = vshrl.u32 %v3347, 7
        %v3349 = vsub.s32 %v3346, %v3348
        %v3350 = vrot.slane %v3342, %v3349
        %3351 = vrot.lane.b32.xlu0 %v3350, 4
        %v3352 = vpop.permute.xlu0 %3351
        %v3353 = vrot.slane %v3352, 6
        %v3354 = vsel %vm3323, %v3353, %v3352
        %v3356 = vadd.f32 %v2021, %v3354
        %v3359 = vunpack.c.l.s4 1983009808
        %v3360 = vunpack.c.0.s8 %v3359
        %v3361 = vlaneseq
        %v3362 = vshrl.u32 %v3361, 7
        %v3363 = vsub.s32 %v3360, %v3362
        %v3364 = vrot.slane %v3288, %v3363
        %v3365 = vcombine.high %v3364, %v3364
        %3366 = vrot.lane.b32.xlu0 %v3364, 124
        %v3367 = vpop.permute.xlu0 %3366
        %3368 = vrot.lane.b32.xlu0 %v3365, 124
        %v3369 = vpop.permute.xlu0 %3368
        %v3370 = vsel %vm526, %v3367, %v3369
        %v3372 = vmul.f32 %v1817, %v3370
        %v3375 = vunpack.c.l.s4 1983009808
        %v3376 = vunpack.c.0.s8 %v3375
        %v3377 = vlaneseq
        %v3378 = vshrl.u32 %v3377, 7
        %v3379 = vsub.s32 %v3376, %v3378
        %v3380 = vrot.slane %v3372, %v3379
        %3381 = vrot.lane.b32.xlu0 %v3380, 4
        %v3382 = vpop.permute.xlu0 %3381
        %v3383 = vrot.slane %v3382, 6
        %v3384 = vsel %vm3323, %v3383, %v3382
        %v3386 = vadd.f32 %v2081, %v3384
        %v3389 = vunpack.c.l.s4 1983009808
        %v3390 = vunpack.c.0.s8 %v3389
        %v3391 = vlaneseq
        %v3392 = vshrl.u32 %v3391, 7
        %v3393 = vsub.s32 %v3390, %v3392
        %v3394 = vrot.slane %v3295, %v3393
        %v3395 = vcombine.high %v3394, %v3394
        %3396 = vrot.lane.b32.xlu0 %v3394, 124
        %v3397 = vpop.permute.xlu0 %3396
        %3398 = vrot.lane.b32.xlu0 %v3395, 124
        %v3399 = vpop.permute.xlu0 %3398
        %v3400 = vsel %vm526, %v3397, %v3399
        %v3402 = vmul.f32 %v1817, %v3400
        %v3405 = vunpack.c.l.s4 1983009808
        %v3406 = vunpack.c.0.s8 %v3405
        %v3407 = vlaneseq
        %v3408 = vshrl.u32 %v3407, 7
        %v3409 = vsub.s32 %v3406, %v3408
        %v3410 = vrot.slane %v3402, %v3409
        %3411 = vrot.lane.b32.xlu0 %v3410, 4
        %v3412 = vpop.permute.xlu0 %3411
        %v3413 = vrot.slane %v3412, 6
        %v3414 = vsel %vm3323, %v3413, %v3412
        %v3416 = vadd.f32 %v2088, %v3414
        %v3419 = vunpack.c.l.s4 1983009808
        %v3420 = vunpack.c.0.s8 %v3419
        %v3421 = vlaneseq
        %v3422 = vshrl.u32 %v3421, 7
        %v3423 = vsub.s32 %v3420, %v3422
        %v3424 = vrot.slane %v3326, %v3423
        %v3425 = vcombine.high %v3424, %v3424
        %3426 = vrot.lane.b32.xlu0 %v3424, 124
        %v3427 = vpop.permute.xlu0 %3426
        %3428 = vrot.lane.b32.xlu0 %v3425, 124
        %v3429 = vpop.permute.xlu0 %3428
        %v3430 = vsel %vm526, %v3427, %v3429
        %3432 = vst [vmem:[%s439] sm:$0x3] %v3430
        %v3435 = vunpack.c.l.s4 1983009808
        %v3436 = vunpack.c.0.s8 %v3435
        %v3437 = vlaneseq
        %v3438 = vshrl.u32 %v3437, 7
        %v3439 = vsub.s32 %v3436, %v3438
        %v3440 = vrot.slane %v3356, %v3439
        %v3441 = vcombine.high %v3440, %v3440
        %3442 = vrot.lane.b32.xlu0 %v3440, 124
        %v3443 = vpop.permute.xlu0 %3442
        %3444 = vrot.lane.b32.xlu0 %v3441, 124
        %v3445 = vpop.permute.xlu0 %3444
        %v3446 = vsel %vm526, %v3443, %v3445
        %3448 = vst [vmem:[%s446] sm:$0x3] %v3446
        %v3451 = vunpack.c.l.s4 1983009808
        %v3452 = vunpack.c.0.s8 %v3451
        %v3453 = vlaneseq
        %v3454 = vshrl.u32 %v3453, 7
        %v3455 = vsub.s32 %v3452, %v3454
        %v3456 = vrot.slane %v3386, %v3455
        %v3457 = vcombine.high %v3456, %v3456
        %3458 = vrot.lane.b32.xlu0 %v3456, 124
        %v3459 = vpop.permute.xlu0 %3458
        %3460 = vrot.lane.b32.xlu0 %v3457, 124
        %v3461 = vpop.permute.xlu0 %3460
        %v3462 = vsel %vm526, %v3459, %v3461
        %3464 = vst [vmem:[%s453] sm:$0x3] %v3462
        %v3467 = vunpack.c.l.s4 1983009808
        %v3468 = vunpack.c.0.s8 %v3467
        %v3469 = vlaneseq
        %v3470 = vshrl.u32 %v3469, 7
        %v3471 = vsub.s32 %v3468, %v3470
        %v3472 = vrot.slane %v3416, %v3471
        %v3473 = vcombine.high %v3472, %v3472
        %3474 = vrot.lane.b32.xlu0 %v3472, 124
        %v3475 = vpop.permute.xlu0 %3474
        %3476 = vrot.lane.b32.xlu0 %v3473, 124
        %v3477 = vpop.permute.xlu0 %3476
        %v3478 = vsel %vm526, %v3475, %v3477
        %3480 = vst [vmem:[%s460] sm:$0x3] %v3478
        %s3481 = sand.u32 %s171, 1
        %s3482 = scalar_lea.sflag [#allocation4], %s3481
        %s3483 = sand.u32 %s171, 1
        %s3484 = smul.addr %s3483, 2
        %s3485 = scalar_lea.vmem [#allocation10], %s3484
        %s3486 = sand.u32 %s38, 1
        %s3487 = scalar_lea.sflag [#allocation12], %s3486
        %s3488 = sand.u32 %s197, 1
        %s3489 = smul.addr %s3488, 2
        %s3490 = scalar_lea.vmem [#allocation11], %s3489
        %s3491 = sand.u32 %s38, 1
        %s3492 = scalar_lea.sflag [#allocation12], %s3491
        %s3493 = sand.u32 %s223, 1
        %s3494 = smul.addr %s3493, 2
        %s3495 = scalar_lea.vmem [#allocation13], %s3494
        %s3496 = sand.u32 %s249, 1
        %s3497 = scalar_lea.sflag [#allocation15], %s3496
        %s3498 = sand.u32 %s249, 1
        %s3499 = smul.addr %s3498, 2
        %s3500 = scalar_lea.vmem [#allocation14], %s3499
        // Predicated region
        $region57: #{tpu_custom_call.1} parent=39 // pred_check
          %p3501 = pneg %p181
        $region58: #{tpu_custom_call.1} parent=39 // pred_check_branch
          %3503 = sbr.rel (%p3501) target = $region60
        $region59: #{tpu_custom_call.1} parent=39 // pred_region
          %s3505 = ssub.s32 32, 32
          %3506 = vsyncadd %s3482, %s3505
          %s3507 = smul.addr %s38, 32
          %s3508 = scalar_lea.hbm %s5, %s3507
          %s3510 = sshll.u32 %s3485, 4
          %s3511 = int_to_ptr.vmem [resolvable:$true] %s3510
          %3513 = dma.vmem_to_hbm [thread:$0]  %s3511, 32, %s3508, %s3482
        $region60: #{tpu_custom_call.1} parent=39 // pred_fallthru
          _
        // Predicated region
        $region61: #{tpu_custom_call.1} parent=39 // pred_check
          %p3514 = pneg %p207
        $region62: #{tpu_custom_call.1} parent=39 // pred_check_branch
          %3516 = sbr.rel (%p3514) target = $region64
        $region63: #{tpu_custom_call.1} parent=39 // pred_region
          %s3518 = ssub.s32 32, 32
          %3519 = vsyncadd %s3487, %s3518
          %s3520 = smul.addr %s38, 32
          %s3521 = scalar_lea.hbm %s6, %s3520
          %s3523 = sshll.u32 %s3490, 4
          %s3524 = int_to_ptr.vmem [resolvable:$true] %s3523
          %3526 = dma.vmem_to_hbm [thread:$0]  %s3524, 32, %s3521, %s3487
        $region64: #{tpu_custom_call.1} parent=39 // pred_fallthru
          _
        // Predicated region
        $region65: #{tpu_custom_call.1} parent=39 // pred_check
          %p3527 = pneg %p233
        $region66: #{tpu_custom_call.1} parent=39 // pred_check_branch
          %3529 = sbr.rel (%p3527) target = $region68
        $region67: #{tpu_custom_call.1} parent=39 // pred_region
          %s3531 = ssub.s32 32, 32
          %3532 = vsyncadd %s3492, %s3531
          %s3533 = smul.addr %s38, 32
          %s3534 = scalar_lea.hbm %s7, %s3533
          %s3536 = sshll.u32 %s3495, 4
          %s3537 = int_to_ptr.vmem [resolvable:$true] %s3536
          %3539 = dma.vmem_to_hbm [thread:$0]  %s3537, 32, %s3534, %s3492
        $region68: #{tpu_custom_call.1} parent=39 // pred_fallthru
          _
        // Predicated region
        $region69: #{tpu_custom_call.1} parent=39 // pred_check
          %p3540 = pneg %p259
        $region70: #{tpu_custom_call.1} parent=39 // pred_check_branch
          %3542 = sbr.rel (%p3540) target = $region72
        $region71: #{tpu_custom_call.1} parent=39 // pred_region
          %s3544 = ssub.s32 32, 32
          %3545 = vsyncadd %s3497, %s3544
          %s3546 = smul.addr %s38, 32
          %s3547 = scalar_lea.hbm %s8, %s3546
          %s3549 = sshll.u32 %s3500, 4
          %s3550 = int_to_ptr.vmem [resolvable:$true] %s3549
          %3552 = dma.vmem_to_hbm [thread:$0]  %s3550, 32, %s3547, %s3497
        $region72: #{tpu_custom_call.1} parent=39 // pred_fallthru
          _
      $region40: #{tpu_custom_call.1} parent=5 // pred_fallthru
        _
      %p3553 = scmp.le.s32.totalorder 2, %s33
      // Predicated region
      $region73: #{tpu_custom_call.1} parent=5 // pred_check
        %p3554 = pneg %p3553
      $region74: #{tpu_custom_call.1} parent=5 // pred_check_branch
        %3556 = sbr.rel (%p3554) target = $region76
      $region75: #{tpu_custom_call.1} parent=5 // pred_region
        %s3557 = ssub.s32 %s33, 2
        // Predicated region
        $region77: #{tpu_custom_call.1} parent=75 // pred_check
          %p3558 = pneg %p187
        $region78: #{tpu_custom_call.1} parent=75 // pred_check_branch
          %3560 = sbr.rel (%p3558) target = $region80
        $region79: #{tpu_custom_call.1} parent=75 // pred_region
          %s3561 = sand.u32 %s172, 1
          %s3562 = scalar_lea.sflag [#allocation4], %s3561
          %s3563 = sand.u32 %s172, 1
          %s3564 = smul.addr %s3563, 2
          %s3565 = scalar_lea.vmem [#allocation10], %s3564
          %3566 = dma.done %s3562, 32
        $region80: #{tpu_custom_call.1} parent=75 // pred_fallthru
          _
        // Predicated region
        $region81: #{tpu_custom_call.1} parent=75 // pred_check
          %p3567 = pneg %p213
        $region82: #{tpu_custom_call.1} parent=75 // pred_check_branch
          %3569 = sbr.rel (%p3567) target = $region84
        $region83: #{tpu_custom_call.1} parent=75 // pred_region
          %s3570 = sand.u32 %s39, 1
          %s3571 = scalar_lea.sflag [#allocation12], %s3570
          %s3572 = sand.u32 %s198, 1
          %s3573 = smul.addr %s3572, 2
          %s3574 = scalar_lea.vmem [#allocation11], %s3573
          %3575 = dma.done %s3571, 32
        $region84: #{tpu_custom_call.1} parent=75 // pred_fallthru
          _
        // Predicated region
        $region85: #{tpu_custom_call.1} parent=75 // pred_check
          %p3576 = pneg %p239
        $region86: #{tpu_custom_call.1} parent=75 // pred_check_branch
          %3578 = sbr.rel (%p3576) target = $region88
        $region87: #{tpu_custom_call.1} parent=75 // pred_region
          %s3579 = sand.u32 %s39, 1
          %s3580 = scalar_lea.sflag [#allocation12], %s3579
          %s3581 = sand.u32 %s224, 1
          %s3582 = smul.addr %s3581, 2
          %s3583 = scalar_lea.vmem [#allocation13], %s3582
          %3584 = dma.done %s3580, 32
        $region88: #{tpu_custom_call.1} parent=75 // pred_fallthru
          _
        // Predicated region
        $region89: #{tpu_custom_call.1} parent=75 // pred_check
          %p3585 = pneg %p265
        $region90: #{tpu_custom_call.1} parent=75 // pred_check_branch
          %3587 = sbr.rel (%p3585) target = $region92
        $region91: #{tpu_custom_call.1} parent=75 // pred_region
          %s3588 = sand.u32 %s250, 1
          %s3589 = scalar_lea.sflag [#allocation15], %s3588
          %s3590 = sand.u32 %s250, 1
          %s3591 = smul.addr %s3590, 2
          %s3592 = scalar_lea.vmem [#allocation14], %s3591
          %3593 = dma.done %s3589, 32
        $region92: #{tpu_custom_call.1} parent=75 // pred_fallthru
          _
      $region76: #{tpu_custom_call.1} parent=5 // pred_fallthru
        _
    $region6: #{tpu_custom_call.1} parent=1 // loop_footer
      %s37 = sadd.s32 1, %s33
    $region7: #{tpu_custom_call.1} parent=1 // loop_footer_branch
      %32 = sbr.rel target = $region3
    $region8: #{tpu_custom_call.1} parent=1 // loop_exit
      _
    %3594 = vsyncpa [#allocation3], 1
    %s3595 = scalar_lea.sflag [#allocation3], 1
    %3596 = vsyncpa %s3595, 1
    %3597 = vsyncpa [#allocation6], 1
    %s3598 = scalar_lea.sflag [#allocation6], 1
    %3599 = vsyncpa %s3598, 1
    %3600 = vsyncpa [#allocation9], 1
    %s3601 = scalar_lea.sflag [#allocation9], 1
    %3602 = vsyncpa %s3601, 1
    %3603 = vsyncpa [#allocation4], 1
    %s3604 = scalar_lea.sflag [#allocation4], 1
    %3605 = vsyncpa %s3604, 1
    %3606 = vsyncpa [#allocation12], 1
    %s3607 = scalar_lea.sflag [#allocation12], 1
    %3608 = vsyncpa %s3607, 1
    %3609 = vsyncpa [#allocation15], 1
    %s3610 = scalar_lea.sflag [#allocation15], 1
    %3611 = vsyncpa %s3610, 1

</llo_original>
